<compile_context>
chip_gen: v7x
topology: tpu7x:2x2x1
jax: 0.10.0
libtpu: 0.0.40
codegen_flags: <defaults>
</compile_context>

<pallas_src>
import functools

import jax
import jax.numpy as jnp
import numpy as np
from jax.experimental import pallas as pl
from jax.experimental.pallas import tpu as pltpu

_LANE = 128


def _round_up(x, m):
    return ((x + m - 1) // m) * m


def _pick_tile_oh(H_out, W_out, target_m=256):
    """Output rows per tile: aim for tile_oh*W_out ~= target_m (MXU friendly),
    preferring a divisor of H_out so the last tile is not partial."""
    want = max(1, min(H_out, -(-target_m // W_out)))
    for cand in range(want, max(1, want // 2) - 1, -1):
        if H_out % cand == 0:
            return cand
    return want


def _conv2d_tile_body(x_ref, w_ref, b_ref, o_ref, acc_ref, *, kH, kW, sh, sw,
                      tile_oh, W_out, has_bias):
    # x_ref  : (1, H_pad, W_pad, C_in_p)   full padded image of one batch item
    # w_ref  : (kH*kW, C_in_p, C_out_p)
    # b_ref  : (1, C_out_p) or None
    # o_ref  : (1, tile_oh, W_out, C_out_p)
    # acc_ref: (tile_oh*W_out, C_out_p) f32 VMEM scratch accumulator
    C_in_p = x_ref.shape[-1]
    C_out_p = o_ref.shape[-1]
    M = tile_oh * W_out

    t = pl.program_id(1)
    row_base = t * (tile_oh * sh)
    if (tile_oh * sh) % 8 == 0:
        row_base = pl.multiple_of(row_base, 8)

    acc_ref[...] = jnp.zeros_like(acc_ref)
    for kh in range(kH):
        if sh == 1:
            rows = pl.ds(row_base + kh, tile_oh)
        else:
            rows = pl.ds(row_base + kh, tile_oh, stride=sh)
        for kw in range(kW):
            if sw == 1:
                cols = pl.ds(kw, W_out)
            else:
                cols = pl.ds(kw, W_out, stride=sw)
            patch = x_ref[0, rows, cols, :]            # (tile_oh, W_out, C_in_p)
            acc_ref[...] += jnp.dot(
                patch.reshape(M, C_in_p),
                w_ref[kh * kW + kw],
                preferred_element_type=jnp.float32,
            )

    out = acc_ref[...]
    if has_bias:
        out = out + b_ref[...]                         # (1, C_out_p) broadcast
    o_ref[0, :, :, :] = out.reshape(tile_oh, W_out, C_out_p).astype(o_ref.dtype)


def _make_kernel(has_bias, **static):
    if has_bias:
        def kernel(x_ref, w_ref, b_ref, o_ref, acc_ref):
            _conv2d_tile_body(x_ref, w_ref, b_ref, o_ref, acc_ref,
                              has_bias=True, **static)
    else:
        def kernel(x_ref, w_ref, o_ref, acc_ref):
            _conv2d_tile_body(x_ref, w_ref, None, o_ref, acc_ref,
                              has_bias=False, **static)
    return kernel


def conv2d_pallas(x_nchw, weight_oihw, bias, stride, padding):
    """F.conv2d(x, weight, bias, stride, padding) with dilation=1, groups=1."""
    N, C_in, H, W = x_nchw.shape
    C_out, _, kH, kW = weight_oihw.shape
    sh, sw = stride
    ph, pw = padding

    H_pad0, W_pad = H + 2 * ph, W + 2 * pw
    H_out = (H_pad0 - kH) // sh + 1
    W_out = (W_pad - kW) // sw + 1

    C_in_p = _round_up(C_in, _LANE)
    C_out_p = _round_up(C_out, _LANE)

    tile_oh = _pick_tile_oh(H_out, W_out)
    n_h_tiles = int(pl.cdiv(H_out, tile_oh))
    # Extra bottom rows so every tile's row window stays in bounds even when
    # the last tile is partial (extra output rows are discarded on writeback).
    H_need = (n_h_tiles * tile_oh - 1) * sh + kH
    extra_h = max(0, H_need - H_pad0)
    H_pad = H_pad0 + extra_h

    # NCHW -> NHWC, zero-pad spatially + pad channels to a lane multiple.
    x = jnp.transpose(x_nchw, (0, 2, 3, 1))
    x = jnp.pad(x, ((0, 0), (ph, ph + extra_h), (pw, pw), (0, C_in_p - C_in)))

    # OIHW -> (kH*kW, C_in_p, C_out_p): each inner matmul is (C_in_p, C_out_p).
    w = jnp.transpose(weight_oihw, (2, 3, 1, 0))
    w = jnp.pad(w, ((0, 0), (0, 0), (0, C_in_p - C_in), (0, C_out_p - C_out)))
    w = w.reshape(kH * kW, C_in_p, C_out_p)

    has_bias = bias is not None
    operands = [x, w]
    in_specs = [
        pl.BlockSpec((1, H_pad, W_pad, C_in_p), lambda n, t: (n, 0, 0, 0)),
        pl.BlockSpec((kH * kW, C_in_p, C_out_p), lambda n, t: (0, 0, 0)),
    ]
    if has_bias:
        b = jnp.pad(bias.astype(jnp.float32).reshape(1, C_out),
                    ((0, 0), (0, C_out_p - C_out)))
        operands.append(b)
        in_specs.append(pl.BlockSpec((1, C_out_p), lambda n, t: (0, 0)))

    kernel = _make_kernel(has_bias, kH=kH, kW=kW, sh=sh, sw=sw,
                          tile_oh=tile_oh, W_out=W_out)

    # VMEM budget: double-buffered input/weight/output blocks + f32 accumulator.
    block_bytes = (
        2 * H_pad * W_pad * C_in_p * 4
        + 2 * kH * kW * C_in_p * C_out_p * 4
        + 2 * tile_oh * W_out * C_out_p * 4
        + tile_oh * W_out * C_out_p * 4
        + C_out_p * 4
    )
    vmem_limit = int(min(max(block_bytes * 3 // 2, 32 * 1024 * 1024),
                         64 * 1024 * 1024))
    # TODO(synk): for very large images the whole padded image will not fit
    # VMEM; the input spec should then window the H axis per output-row tile.

    itemsize = x_nchw.dtype.itemsize
    cost = pl.CostEstimate(
        flops=2 * N * H_out * W_out * C_out * kH * kW * C_in,
        transcendentals=0,
        bytes_accessed=int(x_nchw.size * itemsize
                           + weight_oihw.size * weight_oihw.dtype.itemsize
                           + N * H_out * W_out * C_out * itemsize),
    )

    out_nhwc = pl.pallas_call(
        kernel,
        out_shape=jax.ShapeDtypeStruct((N, H_out, W_out, C_out_p), x.dtype),
        grid=(N, n_h_tiles),
        in_specs=in_specs,
        out_specs=pl.BlockSpec((1, tile_oh, W_out, C_out_p),
                               lambda n, t: (n, t, 0, 0)),
        scratch_shapes=[pltpu.VMEM((tile_oh * W_out, C_out_p), jnp.float32)],
        compiler_params=pltpu.CompilerParams(
            dimension_semantics=("parallel", "parallel"),
            vmem_limit_bytes=vmem_limit,
        ),
        cost_estimate=cost,
    )(*operands)

    # Drop the channel padding, NHWC -> NCHW to match PyTorch convention.
    return jnp.transpose(out_nhwc[..., :C_out], (0, 3, 1, 2))


class Conv2DPallas:
    """Mirror of the PyTorch Conv2D module (dilation=1, groups=1)."""

    def __init__(self, C_in, C_out, kernel_size, stride, mode="same",
                 use_bias=True, key=None):
        self.C_in, self.C_out = C_in, C_out
        self.kernel_size, self.stride = kernel_size, stride
        if mode == "valid":
            p_h, p_w = 0, 0
        elif mode == "same":
            p_h = int(np.floor(kernel_size[0] / 2))
            p_w = int(np.floor(kernel_size[1] / 2))
        elif mode == "full":
            p_h, p_w = kernel_size[0] - 1, kernel_size[1] - 1
        else:
            raise NotImplementedError("convolution type error!")
        self.padding = (p_h, p_w)
        self.use_bias = use_bias

        # Deterministic init matching the module: normal(0, std) weights, zero bias.
        std = np.sqrt(
            2.0 / (C_in * kernel_size[0] * kernel_size[1]
                   + C_out * kernel_size[0] * kernel_size[1])
        )
        key = jax.random.PRNGKey(42) if key is None else key
        self.weight = std * jax.random.normal(
            key, (C_out, C_in, kernel_size[0], kernel_size[1]), dtype=jnp.float32
        )
        self.bias = jnp.zeros((C_out,), jnp.float32) if use_bias else None
        # TODO(synk): dilation != 1 and groups != 1 are unused by the reference
        # module ("do not touch yet") and are not implemented here.

    def __call__(self, x):
        return conv2d_pallas(x, self.weight, self.bias, self.stride, self.padding)


if __name__ == "__main__":
    key = jax.random.PRNGKey(0)
    kx, kw = jax.random.split(key)

    N, C_in, H, W = 2, 4, 16, 16
    C_out = 8
    x = jax.random.normal(kx, (N, C_in, H, W), dtype=jnp.float32)

    conv = Conv2DPallas(C_in, C_out, kernel_size=(3, 3), stride=(1, 1),
                        mode="same", use_bias=True, key=kw)

    out = conv(x)
    out = jax.block_until_ready(out)

    # Reference: XLA conv (same semantics as F.conv2d with these args).
    ref = jax.lax.conv_general_dilated(
        x, conv.weight, window_strides=conv.stride,
        padding=((conv.padding[0], conv.padding[0]),
                 (conv.padding[1], conv.padding[1])),
        dimension_numbers=("NCHW", "OIHW", "NCHW"),
    )
    if conv.bias is not None:
        ref = ref + conv.bias[None, :, None, None]

    assert out.shape == (N, C_out, H, W), out.shape
    np.testing.assert_allclose(np.asarray(out), np.asarray(ref), atol=1e-4, rtol=1e-4)
    print("KERNEL_OK")
</pallas_src>

<mosaic_0001>
module attributes {stable_mosaic.version = 11 : i64} {
  func.func @kernel(%arg0: i32, %arg1: i32, %arg2: memref<1x18x18x128xf32, #tpu.memory_space<vmem>>, %arg3: memref<9x128x128xf32, #tpu.memory_space<vmem>>, %arg4: memref<1x128xf32, #tpu.memory_space<vmem>>, %arg5: memref<1x16x16x128xf32, #tpu.memory_space<vmem>>, %arg6: memref<256x128xf32, #tpu.memory_space<vmem>>) attributes {dimension_semantics = [#tpu.dimension_semantics<parallel>, #tpu.dimension_semantics<parallel>], iteration_bounds = array<i64: 2, 1>, scalar_prefetch = 0 : i64, scratch_operands = 1 : i64, tpu.core_type = #tpu.core_type<tc>, window_params = [{transform_indices = @transform_0, window_bounds = array<i64: 1, 18, 18, 128>}, {pipeline_mode = #tpu.pipeline_mode<synchronous>, transform_indices = @transform_1, window_bounds = array<i64: 9, 128, 128>}, {pipeline_mode = #tpu.pipeline_mode<synchronous>, transform_indices = @transform_2, window_bounds = array<i64: 1, 128>}, {transform_indices = @transform_3, window_bounds = array<i64: 1, 16, 16, 128>}]} {
    %c16_i32 = arith.constant 16 : i32
    %0 = arith.muli %arg1, %c16_i32 : i32
    %1 = tpu.assume_multiple %0, 8 : i32
    %cst = arith.constant 0.000000e+00 : f32
    %2 = vector.broadcast %cst : f32 to vector<256x128xf32>
    %c0 = arith.constant 0 : index
    %c0_0 = arith.constant 0 : index
    %3 = vector.load %arg6[%c0, %c0_0] : memref<256x128xf32, #tpu.memory_space<vmem>>, vector<256x128xf32>
    tpu.vector_store %arg6[%c0, %c0_0], %2 {strides = array<i32>} : memref<256x128xf32, #tpu.memory_space<vmem>>, vector<256x128xf32>,
    %c0_i32 = arith.constant 0 : i32
    %4 = arith.addi %1, %c0_i32 : i32
    %c0_1 = arith.constant 0 : index
    %5 = arith.index_cast %4 : i32 to index
    %c0_2 = arith.constant 0 : index
    %c0_3 = arith.constant 0 : index
    %6 = vector.load %arg2[%c0_1, %5, %c0_2, %c0_3] : memref<1x18x18x128xf32, #tpu.memory_space<vmem>>, vector<1x16x16x128xf32>
    %7 = vector.shape_cast %6 : vector<1x16x16x128xf32> to vector<16x16x128xf32>
    %c0_4 = arith.constant 0 : index
    %c0_5 = arith.constant 0 : index
    %8 = vector.load %arg6[%c0_4, %c0_5] : memref<256x128xf32, #tpu.memory_space<vmem>>, vector<256x128xf32>
    %9 = vector.shape_cast %7 : vector<16x16x128xf32> to vector<256x128xf32>
    %c0_6 = arith.constant 0 : index
    %c0_7 = arith.constant 0 : index
    %c0_8 = arith.constant 0 : index
    %10 = vector.load %arg3[%c0_6, %c0_7, %c0_8] : memref<9x128x128xf32, #tpu.memory_space<vmem>>, vector<1x128x128xf32>
    %11 = vector.shape_cast %10 : vector<1x128x128xf32> to vector<128x128xf32>
    %cst_9 = arith.constant dense<0.000000e+00> : vector<256x128xf32>
    %12 = tpu.matmul %9, %11, %cst_9 {dimension_numbers = #tpu.dot_dimension_numbers<[1], [0], [0], [1], [0, 0, 1, 1], [], []>} : vector<256x128xf32>, vector<128x128xf32>, vector<256x128xf32> -> vector<256x128xf32>
    %13 = arith.addf %8, %12 : vector<256x128xf32>
    %c0_10 = arith.constant 0 : index
    %c0_11 = arith.constant 0 : index
    %14 = vector.load %arg6[%c0_10, %c0_11] : memref<256x128xf32, #tpu.memory_space<vmem>>, vector<256x128xf32>
    tpu.vector_store %arg6[%c0_10, %c0_11], %13 {strides = array<i32>} : memref<256x128xf32, #tpu.memory_space<vmem>>, vector<256x128xf32>,
    %c0_12 = arith.constant 0 : index
    %15 = arith.index_cast %4 : i32 to index
    %c1 = arith.constant 1 : index
    %c0_13 = arith.constant 0 : index
    %16 = vector.load %arg2[%c0_12, %15, %c1, %c0_13] : memref<1x18x18x128xf32, #tpu.memory_space<vmem>>, vector<1x16x16x128xf32>
    %17 = vector.shape_cast %16 : vector<1x16x16x128xf32> to vector<16x16x128xf32>
    %c0_14 = arith.constant 0 : index
    %c0_15 = arith.constant 0 : index
    %18 = vector.load %arg6[%c0_14, %c0_15] : memref<256x128xf32, #tpu.memory_space<vmem>>, vector<256x128xf32>
    %19 = vector.shape_cast %17 : vector<16x16x128xf32> to vector<256x128xf32>
    %c1_16 = arith.constant 1 : index
    %c0_17 = arith.constant 0 : index
    %c0_18 = arith.constant 0 : index
    %20 = vector.load %arg3[%c1_16, %c0_17, %c0_18] : memref<9x128x128xf32, #tpu.memory_space<vmem>>, vector<1x128x128xf32>
    %21 = vector.shape_cast %20 : vector<1x128x128xf32> to vector<128x128xf32>
    %cst_19 = arith.constant dense<0.000000e+00> : vector<256x128xf32>
    %22 = tpu.matmul %19, %21, %cst_19 {dimension_numbers = #tpu.dot_dimension_numbers<[1], [0], [0], [1], [0, 0, 1, 1], [], []>} : vector<256x128xf32>, vector<128x128xf32>, vector<256x128xf32> -> vector<256x128xf32>
    %23 = arith.addf %18, %22 : vector<256x128xf32>
    %c0_20 = arith.constant 0 : index
    %c0_21 = arith.constant 0 : index
    %24 = vector.load %arg6[%c0_20, %c0_21] : memref<256x128xf32, #tpu.memory_space<vmem>>, vector<256x128xf32>
    tpu.vector_store %arg6[%c0_20, %c0_21], %23 {strides = array<i32>} : memref<256x128xf32, #tpu.memory_space<vmem>>, vector<256x128xf32>,
    %c0_22 = arith.constant 0 : index
    %25 = arith.index_cast %4 : i32 to index
    %c2 = arith.constant 2 : index
    %c0_23 = arith.constant 0 : index
    %26 = vector.load %arg2[%c0_22, %25, %c2, %c0_23] : memref<1x18x18x128xf32, #tpu.memory_space<vmem>>, vector<1x16x16x128xf32>
    %27 = vector.shape_cast %26 : vector<1x16x16x128xf32> to vector<16x16x128xf32>
    %c0_24 = arith.constant 0 : index
    %c0_25 = arith.constant 0 : index
    %28 = vector.load %arg6[%c0_24, %c0_25] : memref<256x128xf32, #tpu.memory_space<vmem>>, vector<256x128xf32>
    %29 = vector.shape_cast %27 : vector<16x16x128xf32> to vector<256x128xf32>
    %c2_26 = arith.constant 2 : index
    %c0_27 = arith.constant 0 : index
    %c0_28 = arith.constant 0 : index
    %30 = vector.load %arg3[%c2_26, %c0_27, %c0_28] : memref<9x128x128xf32, #tpu.memory_space<vmem>>, vector<1x128x128xf32>
    %31 = vector.shape_cast %30 : vector<1x128x128xf32> to vector<128x128xf32>
    %cst_29 = arith.constant dense<0.000000e+00> : vector<256x128xf32>
    %32 = tpu.matmul %29, %31, %cst_29 {dimension_numbers = #tpu.dot_dimension_numbers<[1], [0], [0], [1], [0, 0, 1, 1], [], []>} : vector<256x128xf32>, vector<128x128xf32>, vector<256x128xf32> -> vector<256x128xf32>
    %33 = arith.addf %28, %32 : vector<256x128xf32>
    %c0_30 = arith.constant 0 : index
    %c0_31 = arith.constant 0 : index
    %34 = vector.load %arg6[%c0_30, %c0_31] : memref<256x128xf32, #tpu.memory_space<vmem>>, vector<256x128xf32>
    tpu.vector_store %arg6[%c0_30, %c0_31], %33 {strides = array<i32>} : memref<256x128xf32, #tpu.memory_space<vmem>>, vector<256x128xf32>,
    %c1_i32 = arith.constant 1 : i32
    %35 = arith.addi %1, %c1_i32 : i32
    %c0_32 = arith.constant 0 : index
    %36 = arith.index_cast %35 : i32 to index
    %c0_33 = arith.constant 0 : index
    %c0_34 = arith.constant 0 : index
    %37 = vector.load %arg2[%c0_32, %36, %c0_33, %c0_34] : memref<1x18x18x128xf32, #tpu.memory_space<vmem>>, vector<1x16x16x128xf32>
    %38 = vector.shape_cast %37 : vector<1x16x16x128xf32> to vector<16x16x128xf32>
    %c0_35 = arith.constant 0 : index
    %c0_36 = arith.constant 0 : index
    %39 = vector.load %arg6[%c0_35, %c0_36] : memref<256x128xf32, #tpu.memory_space<vmem>>, vector<256x128xf32>
    %40 = vector.shape_cast %38 : vector<16x16x128xf32> to vector<256x128xf32>
    %c3 = arith.constant 3 : index
    %c0_37 = arith.constant 0 : index
    %c0_38 = arith.constant 0 : index
    %41 = vector.load %arg3[%c3, %c0_37, %c0_38] : memref<9x128x128xf32, #tpu.memory_space<vmem>>, vector<1x128x128xf32>
    %42 = vector.shape_cast %41 : vector<1x128x128xf32> to vector<128x128xf32>
    %cst_39 = arith.constant dense<0.000000e+00> : vector<256x128xf32>
    %43 = tpu.matmul %40, %42, %cst_39 {dimension_numbers = #tpu.dot_dimension_numbers<[1], [0], [0], [1], [0, 0, 1, 1], [], []>} : vector<256x128xf32>, vector<128x128xf32>, vector<256x128xf32> -> vector<256x128xf32>
    %44 = arith.addf %39, %43 : vector<256x128xf32>
    %c0_40 = arith.constant 0 : index
    %c0_41 = arith.constant 0 : index
    %45 = vector.load %arg6[%c0_40, %c0_41] : memref<256x128xf32, #tpu.memory_space<vmem>>, vector<256x128xf32>
    tpu.vector_store %arg6[%c0_40, %c0_41], %44 {strides = array<i32>} : memref<256x128xf32, #tpu.memory_space<vmem>>, vector<256x128xf32>,
    %c0_42 = arith.constant 0 : index
    %46 = arith.index_cast %35 : i32 to index
    %c1_43 = arith.constant 1 : index
    %c0_44 = arith.constant 0 : index
    %47 = vector.load %arg2[%c0_42, %46, %c1_43, %c0_44] : memref<1x18x18x128xf32, #tpu.memory_space<vmem>>, vector<1x16x16x128xf32>
    %48 = vector.shape_cast %47 : vector<1x16x16x128xf32> to vector<16x16x128xf32>
    %c0_45 = arith.constant 0 : index
    %c0_46 = arith.constant 0 : index
    %49 = vector.load %arg6[%c0_45, %c0_46] : memref<256x128xf32, #tpu.memory_space<vmem>>, vector<256x128xf32>
    %50 = vector.shape_cast %48 : vector<16x16x128xf32> to vector<256x128xf32>
    %c4 = arith.constant 4 : index
    %c0_47 = arith.constant 0 : index
    %c0_48 = arith.constant 0 : index
    %51 = vector.load %arg3[%c4, %c0_47, %c0_48] : memref<9x128x128xf32, #tpu.memory_space<vmem>>, vector<1x128x128xf32>
    %52 = vector.shape_cast %51 : vector<1x128x128xf32> to vector<128x128xf32>
    %cst_49 = arith.constant dense<0.000000e+00> : vector<256x128xf32>
    %53 = tpu.matmul %50, %52, %cst_49 {dimension_numbers = #tpu.dot_dimension_numbers<[1], [0], [0], [1], [0, 0, 1, 1], [], []>} : vector<256x128xf32>, vector<128x128xf32>, vector<256x128xf32> -> vector<256x128xf32>
    %54 = arith.addf %49, %53 : vector<256x128xf32>
    %c0_50 = arith.constant 0 : index
    %c0_51 = arith.constant 0 : index
    %55 = vector.load %arg6[%c0_50, %c0_51] : memref<256x128xf32, #tpu.memory_space<vmem>>, vector<256x128xf32>
    tpu.vector_store %arg6[%c0_50, %c0_51], %54 {strides = array<i32>} : memref<256x128xf32, #tpu.memory_space<vmem>>, vector<256x128xf32>,
    %c0_52 = arith.constant 0 : index
    %56 = arith.index_cast %35 : i32 to index
    %c2_53 = arith.constant 2 : index
    %c0_54 = arith.constant 0 : index
    %57 = vector.load %arg2[%c0_52, %56, %c2_53, %c0_54] : memref<1x18x18x128xf32, #tpu.memory_space<vmem>>, vector<1x16x16x128xf32>
    %58 = vector.shape_cast %57 : vector<1x16x16x128xf32> to vector<16x16x128xf32>
    %c0_55 = arith.constant 0 : index
    %c0_56 = arith.constant 0 : index
    %59 = vector.load %arg6[%c0_55, %c0_56] : memref<256x128xf32, #tpu.memory_space<vmem>>, vector<256x128xf32>
    %60 = vector.shape_cast %58 : vector<16x16x128xf32> to vector<256x128xf32>
    %c5 = arith.constant 5 : index
    %c0_57 = arith.constant 0 : index
    %c0_58 = arith.constant 0 : index
    %61 = vector.load %arg3[%c5, %c0_57, %c0_58] : memref<9x128x128xf32, #tpu.memory_space<vmem>>, vector<1x128x128xf32>
    %62 = vector.shape_cast %61 : vector<1x128x128xf32> to vector<128x128xf32>
    %cst_59 = arith.constant dense<0.000000e+00> : vector<256x128xf32>
    %63 = tpu.matmul %60, %62, %cst_59 {dimension_numbers = #tpu.dot_dimension_numbers<[1], [0], [0], [1], [0, 0, 1, 1], [], []>} : vector<256x128xf32>, vector<128x128xf32>, vector<256x128xf32> -> vector<256x128xf32>
    %64 = arith.addf %59, %63 : vector<256x128xf32>
    %c0_60 = arith.constant 0 : index
    %c0_61 = arith.constant 0 : index
    %65 = vector.load %arg6[%c0_60, %c0_61] : memref<256x128xf32, #tpu.memory_space<vmem>>, vector<256x128xf32>
    tpu.vector_store %arg6[%c0_60, %c0_61], %64 {strides = array<i32>} : memref<256x128xf32, #tpu.memory_space<vmem>>, vector<256x128xf32>,
    %c2_i32 = arith.constant 2 : i32
    %66 = arith.addi %1, %c2_i32 : i32
    %c0_62 = arith.constant 0 : index
    %67 = arith.index_cast %66 : i32 to index
    %c0_63 = arith.constant 0 : index
    %c0_64 = arith.constant 0 : index
    %68 = vector.load %arg2[%c0_62, %67, %c0_63, %c0_64] : memref<1x18x18x128xf32, #tpu.memory_space<vmem>>, vector<1x16x16x128xf32>
    %69 = vector.shape_cast %68 : vector<1x16x16x128xf32> to vector<16x16x128xf32>
    %c0_65 = arith.constant 0 : index
    %c0_66 = arith.constant 0 : index
    %70 = vector.load %arg6[%c0_65, %c0_66] : memref<256x128xf32, #tpu.memory_space<vmem>>, vector<256x128xf32>
    %71 = vector.shape_cast %69 : vector<16x16x128xf32> to vector<256x128xf32>
    %c6 = arith.constant 6 : index
    %c0_67 = arith.constant 0 : index
    %c0_68 = arith.constant 0 : index
    %72 = vector.load %arg3[%c6, %c0_67, %c0_68] : memref<9x128x128xf32, #tpu.memory_space<vmem>>, vector<1x128x128xf32>
    %73 = vector.shape_cast %72 : vector<1x128x128xf32> to vector<128x128xf32>
    %cst_69 = arith.constant dense<0.000000e+00> : vector<256x128xf32>
    %74 = tpu.matmul %71, %73, %cst_69 {dimension_numbers = #tpu.dot_dimension_numbers<[1], [0], [0], [1], [0, 0, 1, 1], [], []>} : vector<256x128xf32>, vector<128x128xf32>, vector<256x128xf32> -> vector<256x128xf32>
    %75 = arith.addf %70, %74 : vector<256x128xf32>
    %c0_70 = arith.constant 0 : index
    %c0_71 = arith.constant 0 : index
    %76 = vector.load %arg6[%c0_70, %c0_71] : memref<256x128xf32, #tpu.memory_space<vmem>>, vector<256x128xf32>
    tpu.vector_store %arg6[%c0_70, %c0_71], %75 {strides = array<i32>} : memref<256x128xf32, #tpu.memory_space<vmem>>, vector<256x128xf32>,
    %c0_72 = arith.constant 0 : index
    %77 = arith.index_cast %66 : i32 to index
    %c1_73 = arith.constant 1 : index
    %c0_74 = arith.constant 0 : index
    %78 = vector.load %arg2[%c0_72, %77, %c1_73, %c0_74] : memref<1x18x18x128xf32, #tpu.memory_space<vmem>>, vector<1x16x16x128xf32>
    %79 = vector.shape_cast %78 : vector<1x16x16x128xf32> to vector<16x16x128xf32>
    %c0_75 = arith.constant 0 : index
    %c0_76 = arith.constant 0 : index
    %80 = vector.load %arg6[%c0_75, %c0_76] : memref<256x128xf32, #tpu.memory_space<vmem>>, vector<256x128xf32>
    %81 = vector.shape_cast %79 : vector<16x16x128xf32> to vector<256x128xf32>
    %c7 = arith.constant 7 : index
    %c0_77 = arith.constant 0 : index
    %c0_78 = arith.constant 0 : index
    %82 = vector.load %arg3[%c7, %c0_77, %c0_78] : memref<9x128x128xf32, #tpu.memory_space<vmem>>, vector<1x128x128xf32>
    %83 = vector.shape_cast %82 : vector<1x128x128xf32> to vector<128x128xf32>
    %cst_79 = arith.constant dense<0.000000e+00> : vector<256x128xf32>
    %84 = tpu.matmul %81, %83, %cst_79 {dimension_numbers = #tpu.dot_dimension_numbers<[1], [0], [0], [1], [0, 0, 1, 1], [], []>} : vector<256x128xf32>, vector<128x128xf32>, vector<256x128xf32> -> vector<256x128xf32>
    %85 = arith.addf %80, %84 : vector<256x128xf32>
    %c0_80 = arith.constant 0 : index
    %c0_81 = arith.constant 0 : index
    %86 = vector.load %arg6[%c0_80, %c0_81] : memref<256x128xf32, #tpu.memory_space<vmem>>, vector<256x128xf32>
    tpu.vector_store %arg6[%c0_80, %c0_81], %85 {strides = array<i32>} : memref<256x128xf32, #tpu.memory_space<vmem>>, vector<256x128xf32>,
    %c0_82 = arith.constant 0 : index
    %87 = arith.index_cast %66 : i32 to index
    %c2_83 = arith.constant 2 : index
    %c0_84 = arith.constant 0 : index
    %88 = vector.load %arg2[%c0_82, %87, %c2_83, %c0_84] : memref<1x18x18x128xf32, #tpu.memory_space<vmem>>, vector<1x16x16x128xf32>
    %89 = vector.shape_cast %88 : vector<1x16x16x128xf32> to vector<16x16x128xf32>
    %c0_85 = arith.constant 0 : index
    %c0_86 = arith.constant 0 : index
    %90 = vector.load %arg6[%c0_85, %c0_86] : memref<256x128xf32, #tpu.memory_space<vmem>>, vector<256x128xf32>
    %91 = vector.shape_cast %89 : vector<16x16x128xf32> to vector<256x128xf32>
    %c8 = arith.constant 8 : index
    %c0_87 = arith.constant 0 : index
    %c0_88 = arith.constant 0 : index
    %92 = vector.load %arg3[%c8, %c0_87, %c0_88] : memref<9x128x128xf32, #tpu.memory_space<vmem>>, vector<1x128x128xf32>
    %93 = vector.shape_cast %92 : vector<1x128x128xf32> to vector<128x128xf32>
    %cst_89 = arith.constant dense<0.000000e+00> : vector<256x128xf32>
    %94 = tpu.matmul %91, %93, %cst_89 {dimension_numbers = #tpu.dot_dimension_numbers<[1], [0], [0], [1], [0, 0, 1, 1], [], []>} : vector<256x128xf32>, vector<128x128xf32>, vector<256x128xf32> -> vector<256x128xf32>
    %95 = arith.addf %90, %94 : vector<256x128xf32>
    %c0_90 = arith.constant 0 : index
    %c0_91 = arith.constant 0 : index
    %96 = vector.load %arg6[%c0_90, %c0_91] : memref<256x128xf32, #tpu.memory_space<vmem>>, vector<256x128xf32>
    tpu.vector_store %arg6[%c0_90, %c0_91], %95 {strides = array<i32>} : memref<256x128xf32, #tpu.memory_space<vmem>>, vector<256x128xf32>,
    %c0_92 = arith.constant 0 : index
    %c0_93 = arith.constant 0 : index
    %97 = vector.load %arg6[%c0_92, %c0_93] : memref<256x128xf32, #tpu.memory_space<vmem>>, vector<256x128xf32>
    %c0_94 = arith.constant 0 : index
    %c0_95 = arith.constant 0 : index
    %98 = vector.load %arg4[%c0_94, %c0_95] : memref<1x128xf32, #tpu.memory_space<vmem>>, vector<1x128xf32>
    %99 = vector.broadcast %98 : vector<1x128xf32> to vector<256x128xf32>
    %100 = arith.addf %97, %99 : vector<256x128xf32>
    %101 = vector.shape_cast %100 : vector<256x128xf32> to vector<16x16x128xf32>
    %c0_96 = arith.constant 0 : index
    %c0_97 = arith.constant 0 : index
    %c0_98 = arith.constant 0 : index
    %c0_99 = arith.constant 0 : index
    %102 = vector.load %arg5[%c0_96, %c0_97, %c0_98, %c0_99] : memref<1x16x16x128xf32, #tpu.memory_space<vmem>>, vector<1x16x16x128xf32>
    %103 = vector.shape_cast %102 : vector<1x16x16x128xf32> to vector<16x16x128xf32>
    %104 = vector.shape_cast %101 : vector<16x16x128xf32> to vector<1x16x16x128xf32>
    tpu.vector_store %arg5[%c0_96, %c0_97, %c0_98, %c0_99], %104 {strides = array<i32>} : memref<1x16x16x128xf32, #tpu.memory_space<vmem>>, vector<1x16x16x128xf32>,
    return
  }
  func.func @transform_0(%arg0: i32, %arg1: i32) -> (i32, i32, i32, i32) {
    %c0_i32 = arith.constant 0 : i32
    %c0_i32_0 = arith.constant 0 : i32
    %c0_i32_1 = arith.constant 0 : i32
    %c0_i32_2 = arith.constant 0 : i32
    return %arg0, %c0_i32, %c0_i32_0, %c0_i32_1 : i32, i32, i32, i32
  }
  func.func @transform_1(%arg0: i32, %arg1: i32) -> (i32, i32, i32) {
    %c0_i32 = arith.constant 0 : i32
    %c0_i32_0 = arith.constant 0 : i32
    %c0_i32_1 = arith.constant 0 : i32
    %c0_i32_2 = arith.constant 0 : i32
    return %c0_i32, %c0_i32_0, %c0_i32_1 : i32, i32, i32
  }
  func.func @transform_2(%arg0: i32, %arg1: i32) -> (i32, i32) {
    %c0_i32 = arith.constant 0 : i32
    %c0_i32_0 = arith.constant 0 : i32
    %c0_i32_1 = arith.constant 0 : i32
    return %c0_i32, %c0_i32_0 : i32, i32
  }
  func.func @transform_3(%arg0: i32, %arg1: i32) -> (i32, i32, i32, i32) {
    %c0_i32 = arith.constant 0 : i32
    %c0_i32_0 = arith.constant 0 : i32
    %c0_i32_1 = arith.constant 0 : i32
    return %arg0, %arg1, %c0_i32, %c0_i32_0 : i32, i32, i32, i32
  }
}

</mosaic_0001>

<llo_original>
// kernel: tpu_custom_call.1
$region0: #{tpu_custom_call.1}
  #allocation0 [shape = 'u32[]', space=smem, size = 0x4, offset = 0x4, fixed_abs, tag = 'smem constant byte address 0x4 - core index']
  #allocation1 [shape = 'u32[144,128]{1,0:T(1,128)}', space=vmem, size = 0x12000, scoped, tag = 'internal scratch']
  #allocation2 [shape = 'f32[256,128]{1,0:T(8,128)}', space=vmem, size = 0x20000, scoped, tag = 'scratch operand']
  %s0 = inlined_call_operand.vmem [shape: f32[2,18,18,128], index: 0, kind: input, shape index: {}]
  %s1 = inlined_call_operand.vmem [shape: f32[9,128,128], index: 1, kind: input, shape index: {}]
  %s2 = inlined_call_operand.vmem [shape: f32[1,128], index: 2, kind: input, shape index: {}]
  %s3 = inlined_call_operand.hbm [shape: f32[2,16,16,128], index: 3, kind: output, shape index: {}]
  %s4 = sld [smem:[#allocation0]]
  $region45: #{tpu_custom_call.1} parent=0
    _
  %s6 = ssub.s32 1, %s4
  %s7 = scalar_select 0, %s6, %s4
  $region1: #{tpu_custom_call.1} parent=0
    #allocation3 [shape = 'u8[262144]{0}', space=vmem, size = 0x40000, scoped, tag = 'output window, operand 0']
    #allocation4 [shape = 's32[2]{0}', space=sflag, size = 0x8, scoped, tag = 'scoped memory for tpu_custom_call.1']
    %8 = vsyncpa [#allocation4], 0
    %s9 = scalar_lea.sflag [#allocation4], 1
    %10 = vsyncpa %s9, 0
    loop: start=0, step=1, limit=4
    $region2: #{tpu_custom_call.1} parent=1 // loop_pre_header
      _
    $region3: #{tpu_custom_call.1} parent=1 // loop_header
      %s12 = sphi 0, %s16
      %p13 = scmp.ge.s32.totalorder %s12, 4
      %s19 = sphi 0, %s31
      %s20 = sphi 0, %s27
      %s21 = sphi 0, %s19
      %s22 = sphi 0, %s20
      %s23 = sphi 0, %s21
      %s24 = sphi 0, %s22
      %s34 = sphi 0, %s36
      %s37 = sphi 0, %s34
      %s38 = sphi 0, %s37
      %s54 = sphi 0, %s38
      %s58 = sphi 0, %s58
      %s60 = sphi 0, %s58
      %s61 = sphi 0, %s60
      %s75 = sphi 0, %s61
      %s79 = sphi 0, %s79
      %s81 = sphi 0, %s79
      %s82 = sphi 0, %s81
      %s96 = sphi 0, %s82
      %s104 = sphi 0, %s106
      %s107 = sphi 0, %s104
      %s108 = sphi 0, %s107
      %s124 = sphi 0, %s108
    $region4: #{tpu_custom_call.1} parent=1 // loop_header_branch
      %15 = sbr.rel (%p13) target = $region8
    $region5: #{tpu_custom_call.1} parent=1 // loop_body
      %s17 = ssub.s32 %s12, 1
      %s18 = ssub.s32 %s12, 2
      %s25 = sadd.s32 1, %s20
      %p26 = scmp.ge.s32.totalorder %s25, 1
      %s27 = scalar_select %p26, 0, %s25
      %s28 = sadd.s32 1, %s19
      %s29 = scalar_select %p26, %s28, %s19
      %p30 = scmp.ge.s32.totalorder %s29, 2
      %s31 = scalar_select %p30, 0, %s29
      %s32 = ssub.s32 %s19, %s31
      %p33 = scmp.eq.s32.totalorder %s32, 0
      %s35 = sadd.s32 %s34, 1
      %s36 = scalar_select %p33, %s34, %s35
      %p39 = pneg %p33
      %p40 = scmp.eq.s32.totalorder %s12, 1
      %p41 = por %p39, %p40
      %p42 = scmp.ne.s32.totalorder %s34, %s37
      %p43 = scmp.eq.s32.totalorder %s12, 0
      %p44 = por %p42, %p43
      %p45 = scmp.ne.s32.totalorder %s34, %s37
      %p46 = scmp.eq.s32.totalorder %s17, 1
      %p47 = por %p45, %p46
      %p48 = scmp.ne.s32.totalorder %s37, %s38
      %p49 = scmp.eq.s32.totalorder %s17, 0
      %p50 = por %p48, %p49
      %p51 = scmp.ne.s32.totalorder %s37, %s38
      %p52 = scmp.eq.s32.totalorder %s18, 1
      %p53 = por %p51, %p52
      %p55 = scmp.ne.s32.totalorder %s38, %s54
      %p56 = scmp.eq.s32.totalorder %s18, 0
      %p57 = por %p55, %p56
      %s59 = sadd.s32 %s58, 1
      %p62 = scmp.eq.s32.totalorder %s12, 1
      %p63 = scmp.ne.s32.totalorder %s58, %s60
      %p64 = scmp.eq.s32.totalorder %s12, 0
      %p65 = por %p63, %p64
      %p66 = scmp.ne.s32.totalorder %s58, %s60
      %p67 = scmp.eq.s32.totalorder %s17, 1
      %p68 = por %p66, %p67
      %p69 = scmp.ne.s32.totalorder %s60, %s61
      %p70 = scmp.eq.s32.totalorder %s17, 0
      %p71 = por %p69, %p70
      %p72 = scmp.ne.s32.totalorder %s60, %s61
      %p73 = scmp.eq.s32.totalorder %s18, 1
      %p74 = por %p72, %p73
      %p76 = scmp.ne.s32.totalorder %s61, %s75
      %p77 = scmp.eq.s32.totalorder %s18, 0
      %p78 = por %p76, %p77
      %s80 = sadd.s32 %s79, 1
      %p83 = scmp.eq.s32.totalorder %s12, 1
      %p84 = scmp.ne.s32.totalorder %s79, %s81
      %p85 = scmp.eq.s32.totalorder %s12, 0
      %p86 = por %p84, %p85
      %p87 = scmp.ne.s32.totalorder %s79, %s81
      %p88 = scmp.eq.s32.totalorder %s17, 1
      %p89 = por %p87, %p88
      %p90 = scmp.ne.s32.totalorder %s81, %s82
      %p91 = scmp.eq.s32.totalorder %s17, 0
      %p92 = por %p90, %p91
      %p93 = scmp.ne.s32.totalorder %s81, %s82
      %p94 = scmp.eq.s32.totalorder %s18, 1
      %p95 = por %p93, %p94
      %p97 = scmp.ne.s32.totalorder %s82, %s96
      %p98 = scmp.eq.s32.totalorder %s18, 0
      %p99 = por %p97, %p98
      %s100 = ssub.s32 %s19, %s31
      %s101 = ssub.s32 %s20, %s27
      %s102 = sor.u32 %s100, %s101
      %p103 = scmp.eq.s32.totalorder %s102, 0
      %s105 = sadd.s32 %s104, 1
      %s106 = scalar_select %p103, %s104, %s105
      %p109 = pneg %p103
      %p110 = scmp.eq.s32.totalorder %s12, 1
      %p111 = por %p109, %p110
      %p112 = scmp.ne.s32.totalorder %s104, %s107
      %p113 = scmp.eq.s32.totalorder %s12, 0
      %p114 = por %p112, %p113
      %p115 = scmp.ne.s32.totalorder %s104, %s107
      %p116 = scmp.eq.s32.totalorder %s17, 1
      %p117 = por %p115, %p116
      %p118 = scmp.ne.s32.totalorder %s107, %s108
      %p119 = scmp.eq.s32.totalorder %s17, 0
      %p120 = por %p118, %p119
      %p121 = scmp.ne.s32.totalorder %s107, %s108
      %p122 = scmp.eq.s32.totalorder %s18, 1
      %p123 = por %p121, %p122
      %p125 = scmp.ne.s32.totalorder %s108, %s124
      %p126 = scmp.eq.s32.totalorder %s18, 0
      %p127 = por %p125, %p126
      %p128 = scmp.le.s32.totalorder 1, %s12
      %p129 = scmp.lt.s32.totalorder %s12, 3
      %p130 = pnand %p128, %p129
      %p131 = pneg %p130
      // Predicated region
      $region9: #{tpu_custom_call.1} parent=5 // pred_check
        _
      $region10: #{tpu_custom_call.1} parent=5 // pred_check_branch
        %133 = sbr.rel (%p130) target = $region12
      $region11: #{tpu_custom_call.1} parent=5 // pred_region
        %s134 = ssub.s32 %s12, 1
        // Predicated region
        $region13: #{tpu_custom_call.1} parent=11 // pred_check
          %p135 = pneg %p71
        $region14: #{tpu_custom_call.1} parent=11 // pred_check_branch
          %137 = sbr.rel (%p135) target = $region16
        $region15: #{tpu_custom_call.1} parent=11 // pred_region
          _
        $region16: #{tpu_custom_call.1} parent=11 // pred_fallthru
          _
        // Predicated region
        $region17: #{tpu_custom_call.1} parent=11 // pred_check
          %p138 = pneg %p92
        $region18: #{tpu_custom_call.1} parent=11 // pred_check_branch
          %140 = sbr.rel (%p138) target = $region20
        $region19: #{tpu_custom_call.1} parent=11 // pred_region
          _
        $region20: #{tpu_custom_call.1} parent=11 // pred_fallthru
          _
      $region12: #{tpu_custom_call.1} parent=5 // pred_fallthru
        _
      %p141 = scmp.lt.s32.totalorder %s12, 2
      // Predicated region
      $region21: #{tpu_custom_call.1} parent=5 // pred_check
        %p142 = pneg %p141
      $region22: #{tpu_custom_call.1} parent=5 // pred_check_branch
        %144 = sbr.rel (%p142) target = $region24
      $region23: #{tpu_custom_call.1} parent=5 // pred_region
        // Predicated region
        $region25: #{tpu_custom_call.1} parent=23 // pred_check
          %p145 = pneg %p44
        $region26: #{tpu_custom_call.1} parent=23 // pred_check_branch
          %147 = sbr.rel (%p145) target = $region28
        $region27: #{tpu_custom_call.1} parent=23 // pred_region
          %p148 = scmp.lt.s32.totalorder %s19, 1
          %s149 = scalar_select %p148, %s19, 1
          %s150 = smul.addr %s149, 54
          %s151 = smul.addr %s150, 8
          %s152 = scalar_lea.vmem %s0, %s151
        $region28: #{tpu_custom_call.1} parent=23 // pred_fallthru
          _
      $region24: #{tpu_custom_call.1} parent=5 // pred_fallthru
        _
      %p153 = scmp.le.s32.totalorder 1, %s12
      %p154 = scmp.lt.s32.totalorder %s12, 3
      %p155 = pnand %p153, %p154
      %p156 = pneg %p155
      // Predicated region
      $region29: #{tpu_custom_call.1} parent=5 // pred_check
        _
      $region30: #{tpu_custom_call.1} parent=5 // pred_check_branch
        %158 = sbr.rel (%p155) target = $region32
      $region31: #{tpu_custom_call.1} parent=5 // pred_region
        %s159 = ssub.s32 %s12, 1
        %p160 = scmp.lt.s32.totalorder %s21, 1
        %s161 = scalar_select %p160, %s21, 1
        %s162 = smul.addr %s161, 54
        %s163 = smul.addr %s162, 8
        %s164 = scalar_lea.vmem %s0, %s163
        %p165 = pneg %p50
        %p166 = pneg %p47
        %p167 = pneg %p71
        %p168 = pneg %p68
        %p169 = pneg %p92
        %p170 = pneg %p89
        %p171 = pneg %p120
        %p172 = pneg %p117
        %s173 = sand.u32 %s107, 1
        %s174 = scalar_lea.sflag [#allocation4], %s173
        %s175 = sand.u32 %s107, 1
        %s176 = smul.addr %s175, 256
        %s177 = scalar_lea.vmem [#allocation3], %s176
        %p178 = scmp.lt.s32.totalorder %s21, 1
        %s179 = scalar_select %p178, %s21, 1
        %s180 = smul.addr %s179, 54
        %s181 = smul.addr %s180, 8
        %s182 = scalar_lea.vmem %s0, %s181
        %s183 = smul.u32 16, %s22
        %s184 = smul.u32 %s22, 16
        %185 = vst [vmem:[#allocation2] sm:$0xff] 0.0
        %186 = vst [vmem:[#allocation2 + $0x8] sm:$0xff] 0.0
        %187 = vst [vmem:[#allocation2 + $0x10] sm:$0xff] 0.0
        %188 = vst [vmem:[#allocation2 + $0x18] sm:$0xff] 0.0
        %189 = vst [vmem:[#allocation2 + $0x20] sm:$0xff] 0.0
        %190 = vst [vmem:[#allocation2 + $0x28] sm:$0xff] 0.0
        %191 = vst [vmem:[#allocation2 + $0x30] sm:$0xff] 0.0
        %192 = vst [vmem:[#allocation2 + $0x38] sm:$0xff] 0.0
        %193 = vst [vmem:[#allocation2 + $0x40] sm:$0xff] 0.0
        %194 = vst [vmem:[#allocation2 + $0x48] sm:$0xff] 0.0
        %195 = vst [vmem:[#allocation2 + $0x50] sm:$0xff] 0.0
        %196 = vst [vmem:[#allocation2 + $0x58] sm:$0xff] 0.0
        %197 = vst [vmem:[#allocation2 + $0x60] sm:$0xff] 0.0
        %198 = vst [vmem:[#allocation2 + $0x68] sm:$0xff] 0.0
        %199 = vst [vmem:[#allocation2 + $0x70] sm:$0xff] 0.0
        %200 = vst [vmem:[#allocation2 + $0x78] sm:$0xff] 0.0
        %201 = vst [vmem:[#allocation2 + $0x80] sm:$0xff] 0.0
        %202 = vst [vmem:[#allocation2 + $0x88] sm:$0xff] 0.0
        %203 = vst [vmem:[#allocation2 + $0x90] sm:$0xff] 0.0
        %204 = vst [vmem:[#allocation2 + $0x98] sm:$0xff] 0.0
        %205 = vst [vmem:[#allocation2 + $0xa0] sm:$0xff] 0.0
        %206 = vst [vmem:[#allocation2 + $0xa8] sm:$0xff] 0.0
        %207 = vst [vmem:[#allocation2 + $0xb0] sm:$0xff] 0.0
        %208 = vst [vmem:[#allocation2 + $0xb8] sm:$0xff] 0.0
        %209 = vst [vmem:[#allocation2 + $0xc0] sm:$0xff] 0.0
        %210 = vst [vmem:[#allocation2 + $0xc8] sm:$0xff] 0.0
        %211 = vst [vmem:[#allocation2 + $0xd0] sm:$0xff] 0.0
        %212 = vst [vmem:[#allocation2 + $0xd8] sm:$0xff] 0.0
        %213 = vst [vmem:[#allocation2 + $0xe0] sm:$0xff] 0.0
        %214 = vst [vmem:[#allocation2 + $0xe8] sm:$0xff] 0.0
        %215 = vst [vmem:[#allocation2 + $0xf0] sm:$0xff] 0.0
        %216 = vst [vmem:[#allocation2 + $0xf8] sm:$0xff] 0.0
        %s217 = smul.u32 %s184, 24
        %s218 = scalar_lea.vmem %s182, %s217
        %v219 = vld [vmem:[%s218] sm:$0xff]
        %v220 = vld [vmem:[%s218 + $0x8] sm:$0xff]
        %v221 = vld [vmem:[%s218 + $0x18] sm:$0xff]
        %v222 = vld [vmem:[%s218 + $0x20] sm:$0xff]
        %v223 = vld [vmem:[%s218 + $0x30] sm:$0xff]
        %v224 = vld [vmem:[%s218 + $0x38] sm:$0xff]
        %v225 = vld [vmem:[%s218 + $0x48] sm:$0xff]
        %v226 = vld [vmem:[%s218 + $0x50] sm:$0xff]
        %v227 = vld [vmem:[%s218 + $0x60] sm:$0xff]
        %v228 = vld [vmem:[%s218 + $0x68] sm:$0xff]
        %v229 = vld [vmem:[%s218 + $0x78] sm:$0xff]
        %v230 = vld [vmem:[%s218 + $0x80] sm:$0xff]
        %v231 = vld [vmem:[%s218 + $0x90] sm:$0xff]
        %v232 = vld [vmem:[%s218 + $0x98] sm:$0xff]
        %v233 = vld [vmem:[%s218 + $0xa8] sm:$0xff]
        %v234 = vld [vmem:[%s218 + $0xb0] sm:$0xff]
        %v235 = vld [vmem:[%s218 + $0xc0] sm:$0xff]
        %v236 = vld [vmem:[%s218 + $0xc8] sm:$0xff]
        %v237 = vld [vmem:[%s218 + $0xd8] sm:$0xff]
        %v238 = vld [vmem:[%s218 + $0xe0] sm:$0xff]
        %v239 = vld [vmem:[%s218 + $0xf0] sm:$0xff]
        %v240 = vld [vmem:[%s218 + $0xf8] sm:$0xff]
        %v241 = vld [vmem:[%s218 + $0x108] sm:$0xff]
        %v242 = vld [vmem:[%s218 + $0x110] sm:$0xff]
        %v243 = vld [vmem:[%s218 + $0x120] sm:$0xff]
        %v244 = vld [vmem:[%s218 + $0x128] sm:$0xff]
        %v245 = vld [vmem:[%s218 + $0x138] sm:$0xff]
        %v246 = vld [vmem:[%s218 + $0x140] sm:$0xff]
        %v247 = vld [vmem:[%s218 + $0x150] sm:$0xff]
        %v248 = vld [vmem:[%s218 + $0x158] sm:$0xff]
        %v249 = vld [vmem:[%s218 + $0x168] sm:$0xff]
        %v250 = vld [vmem:[%s218 + $0x170] sm:$0xff]
        %v251 = vld [vmem:[#allocation2] sm:$0xff]
        %v252 = vld [vmem:[#allocation2 + $0x8] sm:$0xff]
        %v253 = vld [vmem:[#allocation2 + $0x10] sm:$0xff]
        %v254 = vld [vmem:[#allocation2 + $0x18] sm:$0xff]
        %v255 = vld [vmem:[#allocation2 + $0x20] sm:$0xff]
        %v256 = vld [vmem:[#allocation2 + $0x28] sm:$0xff]
        %v257 = vld [vmem:[#allocation2 + $0x30] sm:$0xff]
        %v258 = vld [vmem:[#allocation2 + $0x38] sm:$0xff]
        %v259 = vld [vmem:[#allocation2 + $0x40] sm:$0xff]
        %v260 = vld [vmem:[#allocation2 + $0x48] sm:$0xff]
        %v261 = vld [vmem:[#allocation2 + $0x50] sm:$0xff]
        %v262 = vld [vmem:[#allocation2 + $0x58] sm:$0xff]
        %v263 = vld [vmem:[#allocation2 + $0x60] sm:$0xff]
        %v264 = vld [vmem:[#allocation2 + $0x68] sm:$0xff]
        %v265 = vld [vmem:[#allocation2 + $0x70] sm:$0xff]
        %v266 = vld [vmem:[#allocation2 + $0x78] sm:$0xff]
        %v267 = vld [vmem:[#allocation2 + $0x80] sm:$0xff]
        %v268 = vld [vmem:[#allocation2 + $0x88] sm:$0xff]
        %v269 = vld [vmem:[#allocation2 + $0x90] sm:$0xff]
        %v270 = vld [vmem:[#allocation2 + $0x98] sm:$0xff]
        %v271 = vld [vmem:[#allocation2 + $0xa0] sm:$0xff]
        %v272 = vld [vmem:[#allocation2 + $0xa8] sm:$0xff]
        %v273 = vld [vmem:[#allocation2 + $0xb0] sm:$0xff]
        %v274 = vld [vmem:[#allocation2 + $0xb8] sm:$0xff]
        %v275 = vld [vmem:[#allocation2 + $0xc0] sm:$0xff]
        %v276 = vld [vmem:[#allocation2 + $0xc8] sm:$0xff]
        %v277 = vld [vmem:[#allocation2 + $0xd0] sm:$0xff]
        %v278 = vld [vmem:[#allocation2 + $0xd8] sm:$0xff]
        %v279 = vld [vmem:[#allocation2 + $0xe0] sm:$0xff]
        %v280 = vld [vmem:[#allocation2 + $0xe8] sm:$0xff]
        %v281 = vld [vmem:[#allocation2 + $0xf0] sm:$0xff]
        %v282 = vld [vmem:[#allocation2 + $0xf8] sm:$0xff]
        %v283 = vld [vmem:[%s1] sm:$0xff]
        %v284 = vld [vmem:[%s1 + $0x8] sm:$0xff]
        %v285 = vld [vmem:[%s1 + $0x10] sm:$0xff]
        %v286 = vld [vmem:[%s1 + $0x18] sm:$0xff]
        %v287 = vld [vmem:[%s1 + $0x20] sm:$0xff]
        %v288 = vld [vmem:[%s1 + $0x28] sm:$0xff]
        %v289 = vld [vmem:[%s1 + $0x30] sm:$0xff]
        %v290 = vld [vmem:[%s1 + $0x38] sm:$0xff]
        %v291 = vld [vmem:[%s1 + $0x40] sm:$0xff]
        %v292 = vld [vmem:[%s1 + $0x48] sm:$0xff]
        %v293 = vld [vmem:[%s1 + $0x50] sm:$0xff]
        %v294 = vld [vmem:[%s1 + $0x58] sm:$0xff]
        %v295 = vld [vmem:[%s1 + $0x60] sm:$0xff]
        %v296 = vld [vmem:[%s1 + $0x68] sm:$0xff]
        %v297 = vld [vmem:[%s1 + $0x70] sm:$0xff]
        %v298 = vld [vmem:[%s1 + $0x78] sm:$0xff]
        %299 = vmatprep.subr.mxu0 0.0
        %300 = vmatpush1.msra.mxu0 %v283
        %301 = vmatprep.subr.mxu0 0.0
        %302 = vmatpush1.msra.mxu0 %v284
        %303 = vmatprep.subr.mxu0 0.0
        %304 = vmatpush1.msra.mxu0 %v285
        %305 = vmatprep.subr.mxu0 0.0
        %306 = vmatpush1.msra.mxu0 %v286
        %307 = vmatprep.subr.mxu0 0.0
        %308 = vmatpush1.msra.mxu0 %v287
        %309 = vmatprep.subr.mxu0 0.0
        %310 = vmatpush1.msra.mxu0 %v288
        %311 = vmatprep.subr.mxu0 0.0
        %312 = vmatpush1.msra.mxu0 %v289
        %313 = vmatprep.subr.mxu0 0.0
        %314 = vmatpush1.msra.mxu0 %v290
        %315 = vmatprep.subr.mxu0 0.0
        %316 = vmatpush1.msra.mxu0 %v291
        %317 = vmatprep.subr.mxu0 0.0
        %318 = vmatpush1.msra.mxu0 %v292
        %319 = vmatprep.subr.mxu0 0.0
        %320 = vmatpush1.msra.mxu0 %v293
        %321 = vmatprep.subr.mxu0 0.0
        %322 = vmatpush1.msra.mxu0 %v294
        %323 = vmatprep.subr.mxu0 0.0
        %324 = vmatpush1.msra.mxu0 %v295
        %325 = vmatprep.subr.mxu0 0.0
        %326 = vmatpush1.msra.mxu0 %v296
        %327 = vmatprep.subr.mxu0 0.0
        %328 = vmatpush1.msra.mxu0 %v297
        %329 = vmatprep.subr.mxu0 0.0
        %330 = vmatpush1.msra.mxu0 %v298
        %331 = vmatprep.subr.mxu0 0.0
        %332 = vmatpush1.msra.mxu0 0.0
        %333 = vmatprep.subr.mxu0 0.0
        %334 = vmatpush1.msra.mxu0 0.0
        %335 = vmatprep.subr.mxu0 0.0
        %336 = vmatpush1.msra.mxu0 0.0
        %337 = vmatprep.subr.mxu0 0.0
        %338 = vmatpush1.msra.mxu0 0.0
        %339 = vmatprep.subr.mxu0 0.0
        %340 = vmatpush1.msra.mxu0 0.0
        %341 = vmatprep.subr.mxu0 0.0
        %342 = vmatpush1.msra.mxu0 0.0
        %343 = vmatprep.subr.mxu0 0.0
        %344 = vmatpush1.msra.mxu0 0.0
        %345 = vmatprep.subr.mxu0 0.0
        %346 = vmatpush1.msra.mxu0 0.0
        %347 = vmatprep.subr.mxu0 0.0
        %348 = vmatpush1.msra.mxu0 0.0
        %349 = vmatprep.subr.mxu0 0.0
        %350 = vmatpush1.msra.mxu0 0.0
        %351 = vmatprep.subr.mxu0 0.0
        %352 = vmatpush1.msra.mxu0 0.0
        %353 = vmatprep.subr.mxu0 0.0
        %354 = vmatpush1.msra.mxu0 0.0
        %355 = vmatprep.subr.mxu0 0.0
        %356 = vmatpush1.msra.mxu0 0.0
        %357 = vmatprep.subr.mxu0 0.0
        %358 = vmatpush1.msra.mxu0 0.0
        %359 = vmatprep.subr.mxu0 0.0
        %360 = vmatpush1.msra.mxu0 0.0
        %361 = vmatprep.subr.mxu0 0.0
        %362 = vmatpush1.msra.mxu0 0.0
        %363 = vmatprep.mubr.f32.mxu0 0.0
        %364 = vmatmul.mubr.f32.gmra.mrb[0].mxu0 %v219
        %v365 = vpop.f32.mrb[0].mxu0
        %v366 = vadd.f32 0.0, %v365
        %v367 = vpop.f32.mrb[0].mxu0
        %368 = vmatprep.mubr.f32.mxu0 0.0
        %369 = vmatmul.mubr.f32.gmra.mrb[0].mxu0 %v220
        %v370 = vpop.f32.mrb[0].mxu0
        %v371 = vadd.f32 0.0, %v370
        %v372 = vpop.f32.mrb[0].mxu0
        %373 = vmatprep.mubr.f32.mxu0 0.0
        %374 = vmatmul.mubr.f32.gmra.mrb[0].mxu0 %v221
        %v375 = vpop.f32.mrb[0].mxu0
        %v376 = vadd.f32 0.0, %v375
        %v377 = vpop.f32.mrb[0].mxu0
        %378 = vmatprep.mubr.f32.mxu0 0.0
        %379 = vmatmul.mubr.f32.gmra.mrb[0].mxu0 %v222
        %v380 = vpop.f32.mrb[0].mxu0
        %v381 = vadd.f32 0.0, %v380
        %v382 = vpop.f32.mrb[0].mxu0
        %383 = vmatprep.mubr.f32.mxu0 0.0
        %384 = vmatmul.mubr.f32.gmra.mrb[0].mxu0 %v223
        %v385 = vpop.f32.mrb[0].mxu0
        %v386 = vadd.f32 0.0, %v385
        %v387 = vpop.f32.mrb[0].mxu0
        %388 = vmatprep.mubr.f32.mxu0 0.0
        %389 = vmatmul.mubr.f32.gmra.mrb[0].mxu0 %v224
        %v390 = vpop.f32.mrb[0].mxu0
        %v391 = vadd.f32 0.0, %v390
        %v392 = vpop.f32.mrb[0].mxu0
        %393 = vmatprep.mubr.f32.mxu0 0.0
        %394 = vmatmul.mubr.f32.gmra.mrb[0].mxu0 %v225
        %v395 = vpop.f32.mrb[0].mxu0
        %v396 = vadd.f32 0.0, %v395
        %v397 = vpop.f32.mrb[0].mxu0
        %398 = vmatprep.mubr.f32.mxu0 0.0
        %399 = vmatmul.mubr.f32.gmra.mrb[0].mxu0 %v226
        %v400 = vpop.f32.mrb[0].mxu0
        %v401 = vadd.f32 0.0, %v400
        %v402 = vpop.f32.mrb[0].mxu0
        %403 = vmatprep.mubr.f32.mxu0 0.0
        %404 = vmatmul.mubr.f32.gmra.mrb[0].mxu0 %v227
        %v405 = vpop.f32.mrb[0].mxu0
        %v406 = vadd.f32 0.0, %v405
        %v407 = vpop.f32.mrb[0].mxu0
        %408 = vmatprep.mubr.f32.mxu0 0.0
        %409 = vmatmul.mubr.f32.gmra.mrb[0].mxu0 %v228
        %v410 = vpop.f32.mrb[0].mxu0
        %v411 = vadd.f32 0.0, %v410
        %v412 = vpop.f32.mrb[0].mxu0
        %413 = vmatprep.mubr.f32.mxu0 0.0
        %414 = vmatmul.mubr.f32.gmra.mrb[0].mxu0 %v229
        %v415 = vpop.f32.mrb[0].mxu0
        %v416 = vadd.f32 0.0, %v415
        %v417 = vpop.f32.mrb[0].mxu0
        %418 = vmatprep.mubr.f32.mxu0 0.0
        %419 = vmatmul.mubr.f32.gmra.mrb[0].mxu0 %v230
        %v420 = vpop.f32.mrb[0].mxu0
        %v421 = vadd.f32 0.0, %v420
        %v422 = vpop.f32.mrb[0].mxu0
        %423 = vmatprep.mubr.f32.mxu0 0.0
        %424 = vmatmul.mubr.f32.gmra.mrb[0].mxu0 %v231
        %v425 = vpop.f32.mrb[0].mxu0
        %v426 = vadd.f32 0.0, %v425
        %v427 = vpop.f32.mrb[0].mxu0
        %428 = vmatprep.mubr.f32.mxu0 0.0
        %429 = vmatmul.mubr.f32.gmra.mrb[0].mxu0 %v232
        %v430 = vpop.f32.mrb[0].mxu0
        %v431 = vadd.f32 0.0, %v430
        %v432 = vpop.f32.mrb[0].mxu0
        %433 = vmatprep.mubr.f32.mxu0 0.0
        %434 = vmatmul.mubr.f32.gmra.mrb[0].mxu0 %v233
        %v435 = vpop.f32.mrb[0].mxu0
        %v436 = vadd.f32 0.0, %v435
        %v437 = vpop.f32.mrb[0].mxu0
        %438 = vmatprep.mubr.f32.mxu0 0.0
        %439 = vmatmul.mubr.f32.gmra.mrb[0].mxu0 %v234
        %v440 = vpop.f32.mrb[0].mxu0
        %v441 = vadd.f32 0.0, %v440
        %v442 = vpop.f32.mrb[0].mxu0
        %443 = vmatprep.mubr.f32.mxu0 0.0
        %444 = vmatmul.mubr.f32.gmra.mrb[0].mxu0 %v235
        %v445 = vpop.f32.mrb[0].mxu0
        %v446 = vadd.f32 0.0, %v445
        %v447 = vpop.f32.mrb[0].mxu0
        %448 = vmatprep.mubr.f32.mxu0 0.0
        %449 = vmatmul.mubr.f32.gmra.mrb[0].mxu0 %v236
        %v450 = vpop.f32.mrb[0].mxu0
        %v451 = vadd.f32 0.0, %v450
        %v452 = vpop.f32.mrb[0].mxu0
        %453 = vmatprep.mubr.f32.mxu0 0.0
        %454 = vmatmul.mubr.f32.gmra.mrb[0].mxu0 %v237
        %v455 = vpop.f32.mrb[0].mxu0
        %v456 = vadd.f32 0.0, %v455
        %v457 = vpop.f32.mrb[0].mxu0
        %458 = vmatprep.mubr.f32.mxu0 0.0
        %459 = vmatmul.mubr.f32.gmra.mrb[0].mxu0 %v238
        %v460 = vpop.f32.mrb[0].mxu0
        %v461 = vadd.f32 0.0, %v460
        %v462 = vpop.f32.mrb[0].mxu0
        %463 = vmatprep.mubr.f32.mxu0 0.0
        %464 = vmatmul.mubr.f32.gmra.mrb[0].mxu0 %v239
        %v465 = vpop.f32.mrb[0].mxu0
        %v466 = vadd.f32 0.0, %v465
        %v467 = vpop.f32.mrb[0].mxu0
        %468 = vmatprep.mubr.f32.mxu0 0.0
        %469 = vmatmul.mubr.f32.gmra.mrb[0].mxu0 %v240
        %v470 = vpop.f32.mrb[0].mxu0
        %v471 = vadd.f32 0.0, %v470
        %v472 = vpop.f32.mrb[0].mxu0
        %473 = vmatprep.mubr.f32.mxu0 0.0
        %474 = vmatmul.mubr.f32.gmra.mrb[0].mxu0 %v241
        %v475 = vpop.f32.mrb[0].mxu0
        %v476 = vadd.f32 0.0, %v475
        %v477 = vpop.f32.mrb[0].mxu0
        %478 = vmatprep.mubr.f32.mxu0 0.0
        %479 = vmatmul.mubr.f32.gmra.mrb[0].mxu0 %v242
        %v480 = vpop.f32.mrb[0].mxu0
        %v481 = vadd.f32 0.0, %v480
        %v482 = vpop.f32.mrb[0].mxu0
        %483 = vmatprep.mubr.f32.mxu0 0.0
        %484 = vmatmul.mubr.f32.gmra.mrb[0].mxu0 %v243
        %v485 = vpop.f32.mrb[0].mxu0
        %v486 = vadd.f32 0.0, %v485
        %v487 = vpop.f32.mrb[0].mxu0
        %488 = vmatprep.mubr.f32.mxu0 0.0
        %489 = vmatmul.mubr.f32.gmra.mrb[0].mxu0 %v244
        %v490 = vpop.f32.mrb[0].mxu0
        %v491 = vadd.f32 0.0, %v490
        %v492 = vpop.f32.mrb[0].mxu0
        %493 = vmatprep.mubr.f32.mxu0 0.0
        %494 = vmatmul.mubr.f32.gmra.mrb[0].mxu0 %v245
        %v495 = vpop.f32.mrb[0].mxu0
        %v496 = vadd.f32 0.0, %v495
        %v497 = vpop.f32.mrb[0].mxu0
        %498 = vmatprep.mubr.f32.mxu0 0.0
        %499 = vmatmul.mubr.f32.gmra.mrb[0].mxu0 %v246
        %v500 = vpop.f32.mrb[0].mxu0
        %v501 = vadd.f32 0.0, %v500
        %v502 = vpop.f32.mrb[0].mxu0
        %503 = vmatprep.mubr.f32.mxu0 0.0
        %504 = vmatmul.mubr.f32.gmra.mrb[0].mxu0 %v247
        %v505 = vpop.f32.mrb[0].mxu0
        %v506 = vadd.f32 0.0, %v505
        %v507 = vpop.f32.mrb[0].mxu0
        %508 = vmatprep.mubr.f32.mxu0 0.0
        %509 = vmatmul.mubr.f32.gmra.mrb[0].mxu0 %v248
        %v510 = vpop.f32.mrb[0].mxu0
        %v511 = vadd.f32 0.0, %v510
        %v512 = vpop.f32.mrb[0].mxu0
        %513 = vmatprep.mubr.f32.mxu0 0.0
        %514 = vmatmul.mubr.f32.gmra.mrb[0].mxu0 %v249
        %v515 = vpop.f32.mrb[0].mxu0
        %v516 = vadd.f32 0.0, %v515
        %v517 = vpop.f32.mrb[0].mxu0
        %518 = vmatprep.mubr.f32.mxu0 0.0
        %519 = vmatmul.mubr.f32.gmra.mrb[0].mxu0 %v250
        %v520 = vpop.f32.mrb[0].mxu0
        %v521 = vadd.f32 0.0, %v520
        %v522 = vpop.f32.mrb[0].mxu0
        %523 = vdwg.mxu0
        %v524 = vadd.f32 %v251, %v366
        %v525 = vadd.f32 %v252, %v371
        %v526 = vadd.f32 %v253, %v376
        %v527 = vadd.f32 %v254, %v381
        %v528 = vadd.f32 %v255, %v386
        %v529 = vadd.f32 %v256, %v391
        %v530 = vadd.f32 %v257, %v396
        %v531 = vadd.f32 %v258, %v401
        %v532 = vadd.f32 %v259, %v406
        %v533 = vadd.f32 %v260, %v411
        %v534 = vadd.f32 %v261, %v416
        %v535 = vadd.f32 %v262, %v421
        %v536 = vadd.f32 %v263, %v426
        %v537 = vadd.f32 %v264, %v431
        %v538 = vadd.f32 %v265, %v436
        %v539 = vadd.f32 %v266, %v441
        %v540 = vadd.f32 %v267, %v446
        %v541 = vadd.f32 %v268, %v451
        %v542 = vadd.f32 %v269, %v456
        %v543 = vadd.f32 %v270, %v461
        %v544 = vadd.f32 %v271, %v466
        %v545 = vadd.f32 %v272, %v471
        %v546 = vadd.f32 %v273, %v476
        %v547 = vadd.f32 %v274, %v481
        %v548 = vadd.f32 %v275, %v486
        %v549 = vadd.f32 %v276, %v491
        %v550 = vadd.f32 %v277, %v496
        %v551 = vadd.f32 %v278, %v501
        %v552 = vadd.f32 %v279, %v506
        %v553 = vadd.f32 %v280, %v511
        %v554 = vadd.f32 %v281, %v516
        %v555 = vadd.f32 %v282, %v521
        %556 = vst [vmem:[#allocation2] sm:$0xff] %v524
        %557 = vst [vmem:[#allocation2 + $0x8] sm:$0xff] %v525
        %558 = vst [vmem:[#allocation2 + $0x10] sm:$0xff] %v526
        %559 = vst [vmem:[#allocation2 + $0x18] sm:$0xff] %v527
        %560 = vst [vmem:[#allocation2 + $0x20] sm:$0xff] %v528
        %561 = vst [vmem:[#allocation2 + $0x28] sm:$0xff] %v529
        %562 = vst [vmem:[#allocation2 + $0x30] sm:$0xff] %v530
        %563 = vst [vmem:[#allocation2 + $0x38] sm:$0xff] %v531
        %564 = vst [vmem:[#allocation2 + $0x40] sm:$0xff] %v532
        %565 = vst [vmem:[#allocation2 + $0x48] sm:$0xff] %v533
        %566 = vst [vmem:[#allocation2 + $0x50] sm:$0xff] %v534
        %567 = vst [vmem:[#allocation2 + $0x58] sm:$0xff] %v535
        %568 = vst [vmem:[#allocation2 + $0x60] sm:$0xff] %v536
        %569 = vst [vmem:[#allocation2 + $0x68] sm:$0xff] %v537
        %570 = vst [vmem:[#allocation2 + $0x70] sm:$0xff] %v538
        %571 = vst [vmem:[#allocation2 + $0x78] sm:$0xff] %v539
        %572 = vst [vmem:[#allocation2 + $0x80] sm:$0xff] %v540
        %573 = vst [vmem:[#allocation2 + $0x88] sm:$0xff] %v541
        %574 = vst [vmem:[#allocation2 + $0x90] sm:$0xff] %v542
        %575 = vst [vmem:[#allocation2 + $0x98] sm:$0xff] %v543
        %576 = vst [vmem:[#allocation2 + $0xa0] sm:$0xff] %v544
        %577 = vst [vmem:[#allocation2 + $0xa8] sm:$0xff] %v545
        %578 = vst [vmem:[#allocation2 + $0xb0] sm:$0xff] %v546
        %579 = vst [vmem:[#allocation2 + $0xb8] sm:$0xff] %v547
        %580 = vst [vmem:[#allocation2 + $0xc0] sm:$0xff] %v548
        %581 = vst [vmem:[#allocation2 + $0xc8] sm:$0xff] %v549
        %582 = vst [vmem:[#allocation2 + $0xd0] sm:$0xff] %v550
        %583 = vst [vmem:[#allocation2 + $0xd8] sm:$0xff] %v551
        %584 = vst [vmem:[#allocation2 + $0xe0] sm:$0xff] %v552
        %585 = vst [vmem:[#allocation2 + $0xe8] sm:$0xff] %v553
        %586 = vst [vmem:[#allocation2 + $0xf0] sm:$0xff] %v554
        %587 = vst [vmem:[#allocation2 + $0xf8] sm:$0xff] %v555
        %v588 = vld [vmem:[%s218 + $0x1] sm:$0xff]
        %v589 = vld [vmem:[%s218 + $0x9] sm:$0xff]
        %v590 = vld [vmem:[%s218 + $0x19] sm:$0xff]
        %v591 = vld [vmem:[%s218 + $0x21] sm:$0xff]
        %v592 = vld [vmem:[%s218 + $0x31] sm:$0xff]
        %v593 = vld [vmem:[%s218 + $0x39] sm:$0xff]
        %v594 = vld [vmem:[%s218 + $0x49] sm:$0xff]
        %v595 = vld [vmem:[%s218 + $0x51] sm:$0xff]
        %v596 = vld [vmem:[%s218 + $0x61] sm:$0xff]
        %v597 = vld [vmem:[%s218 + $0x69] sm:$0xff]
        %v598 = vld [vmem:[%s218 + $0x79] sm:$0xff]
        %v599 = vld [vmem:[%s218 + $0x81] sm:$0xff]
        %v600 = vld [vmem:[%s218 + $0x91] sm:$0xff]
        %v601 = vld [vmem:[%s218 + $0x99] sm:$0xff]
        %v602 = vld [vmem:[%s218 + $0xa9] sm:$0xff]
        %v603 = vld [vmem:[%s218 + $0xb1] sm:$0xff]
        %v604 = vld [vmem:[%s218 + $0xc1] sm:$0xff]
        %v605 = vld [vmem:[%s218 + $0xc9] sm:$0xff]
        %v606 = vld [vmem:[%s218 + $0xd9] sm:$0xff]
        %v607 = vld [vmem:[%s218 + $0xe1] sm:$0xff]
        %v608 = vld [vmem:[%s218 + $0xf1] sm:$0xff]
        %v609 = vld [vmem:[%s218 + $0xf9] sm:$0xff]
        %v610 = vld [vmem:[%s218 + $0x109] sm:$0xff]
        %v611 = vld [vmem:[%s218 + $0x111] sm:$0xff]
        %v612 = vld [vmem:[%s218 + $0x121] sm:$0xff]
        %v613 = vld [vmem:[%s218 + $0x129] sm:$0xff]
        %v614 = vld [vmem:[%s218 + $0x139] sm:$0xff]
        %v615 = vld [vmem:[%s218 + $0x141] sm:$0xff]
        %v616 = vld [vmem:[%s218 + $0x151] sm:$0xff]
        %v617 = vld [vmem:[%s218 + $0x159] sm:$0xff]
        %v618 = vld [vmem:[%s218 + $0x169] sm:$0xff]
        %v619 = vld [vmem:[%s218 + $0x171] sm:$0xff]
        %v620 = vld [vmem:[#allocation2] sm:$0xff]
        %v621 = vld [vmem:[#allocation2 + $0x8] sm:$0xff]
        %v622 = vld [vmem:[#allocation2 + $0x10] sm:$0xff]
        %v623 = vld [vmem:[#allocation2 + $0x18] sm:$0xff]
        %v624 = vld [vmem:[#allocation2 + $0x20] sm:$0xff]
        %v625 = vld [vmem:[#allocation2 + $0x28] sm:$0xff]
        %v626 = vld [vmem:[#allocation2 + $0x30] sm:$0xff]
        %v627 = vld [vmem:[#allocation2 + $0x38] sm:$0xff]
        %v628 = vld [vmem:[#allocation2 + $0x40] sm:$0xff]
        %v629 = vld [vmem:[#allocation2 + $0x48] sm:$0xff]
        %v630 = vld [vmem:[#allocation2 + $0x50] sm:$0xff]
        %v631 = vld [vmem:[#allocation2 + $0x58] sm:$0xff]
        %v632 = vld [vmem:[#allocation2 + $0x60] sm:$0xff]
        %v633 = vld [vmem:[#allocation2 + $0x68] sm:$0xff]
        %v634 = vld [vmem:[#allocation2 + $0x70] sm:$0xff]
        %v635 = vld [vmem:[#allocation2 + $0x78] sm:$0xff]
        %v636 = vld [vmem:[#allocation2 + $0x80] sm:$0xff]
        %v637 = vld [vmem:[#allocation2 + $0x88] sm:$0xff]
        %v638 = vld [vmem:[#allocation2 + $0x90] sm:$0xff]
        %v639 = vld [vmem:[#allocation2 + $0x98] sm:$0xff]
        %v640 = vld [vmem:[#allocation2 + $0xa0] sm:$0xff]
        %v641 = vld [vmem:[#allocation2 + $0xa8] sm:$0xff]
        %v642 = vld [vmem:[#allocation2 + $0xb0] sm:$0xff]
        %v643 = vld [vmem:[#allocation2 + $0xb8] sm:$0xff]
        %v644 = vld [vmem:[#allocation2 + $0xc0] sm:$0xff]
        %v645 = vld [vmem:[#allocation2 + $0xc8] sm:$0xff]
        %v646 = vld [vmem:[#allocation2 + $0xd0] sm:$0xff]
        %v647 = vld [vmem:[#allocation2 + $0xd8] sm:$0xff]
        %v648 = vld [vmem:[#allocation2 + $0xe0] sm:$0xff]
        %v649 = vld [vmem:[#allocation2 + $0xe8] sm:$0xff]
        %v650 = vld [vmem:[#allocation2 + $0xf0] sm:$0xff]
        %v651 = vld [vmem:[#allocation2 + $0xf8] sm:$0xff]
        %s652 = scalar_lea.vmem %s1, 128
        %v653 = vld [vmem:[%s652] sm:$0xff]
        %v654 = vld [vmem:[%s652 + $0x8] sm:$0xff]
        %v655 = vld [vmem:[%s652 + $0x10] sm:$0xff]
        %v656 = vld [vmem:[%s652 + $0x18] sm:$0xff]
        %v657 = vld [vmem:[%s652 + $0x20] sm:$0xff]
        %v658 = vld [vmem:[%s652 + $0x28] sm:$0xff]
        %v659 = vld [vmem:[%s652 + $0x30] sm:$0xff]
        %v660 = vld [vmem:[%s652 + $0x38] sm:$0xff]
        %v661 = vld [vmem:[%s652 + $0x40] sm:$0xff]
        %v662 = vld [vmem:[%s652 + $0x48] sm:$0xff]
        %v663 = vld [vmem:[%s652 + $0x50] sm:$0xff]
        %v664 = vld [vmem:[%s652 + $0x58] sm:$0xff]
        %v665 = vld [vmem:[%s652 + $0x60] sm:$0xff]
        %v666 = vld [vmem:[%s652 + $0x68] sm:$0xff]
        %v667 = vld [vmem:[%s652 + $0x70] sm:$0xff]
        %v668 = vld [vmem:[%s652 + $0x78] sm:$0xff]
        %669 = vmatprep.subr.mxu0 0.0
        %670 = vmatpush1.msra.mxu0 %v653
        %671 = vmatprep.subr.mxu0 0.0
        %672 = vmatpush1.msra.mxu0 %v654
        %673 = vmatprep.subr.mxu0 0.0
        %674 = vmatpush1.msra.mxu0 %v655
        %675 = vmatprep.subr.mxu0 0.0
        %676 = vmatpush1.msra.mxu0 %v656
        %677 = vmatprep.subr.mxu0 0.0
        %678 = vmatpush1.msra.mxu0 %v657
        %679 = vmatprep.subr.mxu0 0.0
        %680 = vmatpush1.msra.mxu0 %v658
        %681 = vmatprep.subr.mxu0 0.0
        %682 = vmatpush1.msra.mxu0 %v659
        %683 = vmatprep.subr.mxu0 0.0
        %684 = vmatpush1.msra.mxu0 %v660
        %685 = vmatprep.subr.mxu0 0.0
        %686 = vmatpush1.msra.mxu0 %v661
        %687 = vmatprep.subr.mxu0 0.0
        %688 = vmatpush1.msra.mxu0 %v662
        %689 = vmatprep.subr.mxu0 0.0
        %690 = vmatpush1.msra.mxu0 %v663
        %691 = vmatprep.subr.mxu0 0.0
        %692 = vmatpush1.msra.mxu0 %v664
        %693 = vmatprep.subr.mxu0 0.0
        %694 = vmatpush1.msra.mxu0 %v665
        %695 = vmatprep.subr.mxu0 0.0
        %696 = vmatpush1.msra.mxu0 %v666
        %697 = vmatprep.subr.mxu0 0.0
        %698 = vmatpush1.msra.mxu0 %v667
        %699 = vmatprep.subr.mxu0 0.0
        %700 = vmatpush1.msra.mxu0 %v668
        %701 = vmatprep.subr.mxu0 0.0
        %702 = vmatpush1.msra.mxu0 0.0
        %703 = vmatprep.subr.mxu0 0.0
        %704 = vmatpush1.msra.mxu0 0.0
        %705 = vmatprep.subr.mxu0 0.0
        %706 = vmatpush1.msra.mxu0 0.0
        %707 = vmatprep.subr.mxu0 0.0
        %708 = vmatpush1.msra.mxu0 0.0
        %709 = vmatprep.subr.mxu0 0.0
        %710 = vmatpush1.msra.mxu0 0.0
        %711 = vmatprep.subr.mxu0 0.0
        %712 = vmatpush1.msra.mxu0 0.0
        %713 = vmatprep.subr.mxu0 0.0
        %714 = vmatpush1.msra.mxu0 0.0
        %715 = vmatprep.subr.mxu0 0.0
        %716 = vmatpush1.msra.mxu0 0.0
        %717 = vmatprep.subr.mxu0 0.0
        %718 = vmatpush1.msra.mxu0 0.0
        %719 = vmatprep.subr.mxu0 0.0
        %720 = vmatpush1.msra.mxu0 0.0
        %721 = vmatprep.subr.mxu0 0.0
        %722 = vmatpush1.msra.mxu0 0.0
        %723 = vmatprep.subr.mxu0 0.0
        %724 = vmatpush1.msra.mxu0 0.0
        %725 = vmatprep.subr.mxu0 0.0
        %726 = vmatpush1.msra.mxu0 0.0
        %727 = vmatprep.subr.mxu0 0.0
        %728 = vmatpush1.msra.mxu0 0.0
        %729 = vmatprep.subr.mxu0 0.0
        %730 = vmatpush1.msra.mxu0 0.0
        %731 = vmatprep.subr.mxu0 0.0
        %732 = vmatpush1.msra.mxu0 0.0
        %733 = vmatprep.mubr.f32.mxu0 0.0
        %734 = vmatmul.mubr.f32.gmra.mrb[0].mxu0 %v588
        %v735 = vpop.f32.mrb[0].mxu0
        %v736 = vadd.f32 0.0, %v735
        %v737 = vpop.f32.mrb[0].mxu0
        %738 = vmatprep.mubr.f32.mxu0 0.0
        %739 = vmatmul.mubr.f32.gmra.mrb[0].mxu0 %v589
        %v740 = vpop.f32.mrb[0].mxu0
        %v741 = vadd.f32 0.0, %v740
        %v742 = vpop.f32.mrb[0].mxu0
        %743 = vmatprep.mubr.f32.mxu0 0.0
        %744 = vmatmul.mubr.f32.gmra.mrb[0].mxu0 %v590
        %v745 = vpop.f32.mrb[0].mxu0
        %v746 = vadd.f32 0.0, %v745
        %v747 = vpop.f32.mrb[0].mxu0
        %748 = vmatprep.mubr.f32.mxu0 0.0
        %749 = vmatmul.mubr.f32.gmra.mrb[0].mxu0 %v591
        %v750 = vpop.f32.mrb[0].mxu0
        %v751 = vadd.f32 0.0, %v750
        %v752 = vpop.f32.mrb[0].mxu0
        %753 = vmatprep.mubr.f32.mxu0 0.0
        %754 = vmatmul.mubr.f32.gmra.mrb[0].mxu0 %v592
        %v755 = vpop.f32.mrb[0].mxu0
        %v756 = vadd.f32 0.0, %v755
        %v757 = vpop.f32.mrb[0].mxu0
        %758 = vmatprep.mubr.f32.mxu0 0.0
        %759 = vmatmul.mubr.f32.gmra.mrb[0].mxu0 %v593
        %v760 = vpop.f32.mrb[0].mxu0
        %v761 = vadd.f32 0.0, %v760
        %v762 = vpop.f32.mrb[0].mxu0
        %763 = vmatprep.mubr.f32.mxu0 0.0
        %764 = vmatmul.mubr.f32.gmra.mrb[0].mxu0 %v594
        %v765 = vpop.f32.mrb[0].mxu0
        %v766 = vadd.f32 0.0, %v765
        %v767 = vpop.f32.mrb[0].mxu0
        %768 = vmatprep.mubr.f32.mxu0 0.0
        %769 = vmatmul.mubr.f32.gmra.mrb[0].mxu0 %v595
        %v770 = vpop.f32.mrb[0].mxu0
        %v771 = vadd.f32 0.0, %v770
        %v772 = vpop.f32.mrb[0].mxu0
        %773 = vmatprep.mubr.f32.mxu0 0.0
        %774 = vmatmul.mubr.f32.gmra.mrb[0].mxu0 %v596
        %v775 = vpop.f32.mrb[0].mxu0
        %v776 = vadd.f32 0.0, %v775
        %v777 = vpop.f32.mrb[0].mxu0
        %778 = vmatprep.mubr.f32.mxu0 0.0
        %779 = vmatmul.mubr.f32.gmra.mrb[0].mxu0 %v597
        %v780 = vpop.f32.mrb[0].mxu0
        %v781 = vadd.f32 0.0, %v780
        %v782 = vpop.f32.mrb[0].mxu0
        %783 = vmatprep.mubr.f32.mxu0 0.0
        %784 = vmatmul.mubr.f32.gmra.mrb[0].mxu0 %v598
        %v785 = vpop.f32.mrb[0].mxu0
        %v786 = vadd.f32 0.0, %v785
        %v787 = vpop.f32.mrb[0].mxu0
        %788 = vmatprep.mubr.f32.mxu0 0.0
        %789 = vmatmul.mubr.f32.gmra.mrb[0].mxu0 %v599
        %v790 = vpop.f32.mrb[0].mxu0
        %v791 = vadd.f32 0.0, %v790
        %v792 = vpop.f32.mrb[0].mxu0
        %793 = vmatprep.mubr.f32.mxu0 0.0
        %794 = vmatmul.mubr.f32.gmra.mrb[0].mxu0 %v600
        %v795 = vpop.f32.mrb[0].mxu0
        %v796 = vadd.f32 0.0, %v795
        %v797 = vpop.f32.mrb[0].mxu0
        %798 = vmatprep.mubr.f32.mxu0 0.0
        %799 = vmatmul.mubr.f32.gmra.mrb[0].mxu0 %v601
        %v800 = vpop.f32.mrb[0].mxu0
        %v801 = vadd.f32 0.0, %v800
        %v802 = vpop.f32.mrb[0].mxu0
        %803 = vmatprep.mubr.f32.mxu0 0.0
        %804 = vmatmul.mubr.f32.gmra.mrb[0].mxu0 %v602
        %v805 = vpop.f32.mrb[0].mxu0
        %v806 = vadd.f32 0.0, %v805
        %v807 = vpop.f32.mrb[0].mxu0
        %808 = vmatprep.mubr.f32.mxu0 0.0
        %809 = vmatmul.mubr.f32.gmra.mrb[0].mxu0 %v603
        %v810 = vpop.f32.mrb[0].mxu0
        %v811 = vadd.f32 0.0, %v810
        %v812 = vpop.f32.mrb[0].mxu0
        %813 = vmatprep.mubr.f32.mxu0 0.0
        %814 = vmatmul.mubr.f32.gmra.mrb[0].mxu0 %v604
        %v815 = vpop.f32.mrb[0].mxu0
        %v816 = vadd.f32 0.0, %v815
        %v817 = vpop.f32.mrb[0].mxu0
        %818 = vmatprep.mubr.f32.mxu0 0.0
        %819 = vmatmul.mubr.f32.gmra.mrb[0].mxu0 %v605
        %v820 = vpop.f32.mrb[0].mxu0
        %v821 = vadd.f32 0.0, %v820
        %v822 = vpop.f32.mrb[0].mxu0
        %823 = vmatprep.mubr.f32.mxu0 0.0
        %824 = vmatmul.mubr.f32.gmra.mrb[0].mxu0 %v606
        %v825 = vpop.f32.mrb[0].mxu0
        %v826 = vadd.f32 0.0, %v825
        %v827 = vpop.f32.mrb[0].mxu0
        %828 = vmatprep.mubr.f32.mxu0 0.0
        %829 = vmatmul.mubr.f32.gmra.mrb[0].mxu0 %v607
        %v830 = vpop.f32.mrb[0].mxu0
        %v831 = vadd.f32 0.0, %v830
        %v832 = vpop.f32.mrb[0].mxu0
        %833 = vmatprep.mubr.f32.mxu0 0.0
        %834 = vmatmul.mubr.f32.gmra.mrb[0].mxu0 %v608
        %v835 = vpop.f32.mrb[0].mxu0
        %v836 = vadd.f32 0.0, %v835
        %v837 = vpop.f32.mrb[0].mxu0
        %838 = vmatprep.mubr.f32.mxu0 0.0
        %839 = vmatmul.mubr.f32.gmra.mrb[0].mxu0 %v609
        %v840 = vpop.f32.mrb[0].mxu0
        %v841 = vadd.f32 0.0, %v840
        %v842 = vpop.f32.mrb[0].mxu0
        %843 = vmatprep.mubr.f32.mxu0 0.0
        %844 = vmatmul.mubr.f32.gmra.mrb[0].mxu0 %v610
        %v845 = vpop.f32.mrb[0].mxu0
        %v846 = vadd.f32 0.0, %v845
        %v847 = vpop.f32.mrb[0].mxu0
        %848 = vmatprep.mubr.f32.mxu0 0.0
        %849 = vmatmul.mubr.f32.gmra.mrb[0].mxu0 %v611
        %v850 = vpop.f32.mrb[0].mxu0
        %v851 = vadd.f32 0.0, %v850
        %v852 = vpop.f32.mrb[0].mxu0
        %853 = vmatprep.mubr.f32.mxu0 0.0
        %854 = vmatmul.mubr.f32.gmra.mrb[0].mxu0 %v612
        %v855 = vpop.f32.mrb[0].mxu0
        %v856 = vadd.f32 0.0, %v855
        %v857 = vpop.f32.mrb[0].mxu0
        %858 = vmatprep.mubr.f32.mxu0 0.0
        %859 = vmatmul.mubr.f32.gmra.mrb[0].mxu0 %v613
        %v860 = vpop.f32.mrb[0].mxu0
        %v861 = vadd.f32 0.0, %v860
        %v862 = vpop.f32.mrb[0].mxu0
        %863 = vmatprep.mubr.f32.mxu0 0.0
        %864 = vmatmul.mubr.f32.gmra.mrb[0].mxu0 %v614
        %v865 = vpop.f32.mrb[0].mxu0
        %v866 = vadd.f32 0.0, %v865
        %v867 = vpop.f32.mrb[0].mxu0
        %868 = vmatprep.mubr.f32.mxu0 0.0
        %869 = vmatmul.mubr.f32.gmra.mrb[0].mxu0 %v615
        %v870 = vpop.f32.mrb[0].mxu0
        %v871 = vadd.f32 0.0, %v870
        %v872 = vpop.f32.mrb[0].mxu0
        %873 = vmatprep.mubr.f32.mxu0 0.0
        %874 = vmatmul.mubr.f32.gmra.mrb[0].mxu0 %v616
        %v875 = vpop.f32.mrb[0].mxu0
        %v876 = vadd.f32 0.0, %v875
        %v877 = vpop.f32.mrb[0].mxu0
        %878 = vmatprep.mubr.f32.mxu0 0.0
        %879 = vmatmul.mubr.f32.gmra.mrb[0].mxu0 %v617
        %v880 = vpop.f32.mrb[0].mxu0
        %v881 = vadd.f32 0.0, %v880
        %v882 = vpop.f32.mrb[0].mxu0
        %883 = vmatprep.mubr.f32.mxu0 0.0
        %884 = vmatmul.mubr.f32.gmra.mrb[0].mxu0 %v618
        %v885 = vpop.f32.mrb[0].mxu0
        %v886 = vadd.f32 0.0, %v885
        %v887 = vpop.f32.mrb[0].mxu0
        %888 = vmatprep.mubr.f32.mxu0 0.0
        %889 = vmatmul.mubr.f32.gmra.mrb[0].mxu0 %v619
        %v890 = vpop.f32.mrb[0].mxu0
        %v891 = vadd.f32 0.0, %v890
        %v892 = vpop.f32.mrb[0].mxu0
        %893 = vdwg.mxu0
        %v894 = vadd.f32 %v620, %v736
        %v895 = vadd.f32 %v621, %v741
        %v896 = vadd.f32 %v622, %v746
        %v897 = vadd.f32 %v623, %v751
        %v898 = vadd.f32 %v624, %v756
        %v899 = vadd.f32 %v625, %v761
        %v900 = vadd.f32 %v626, %v766
        %v901 = vadd.f32 %v627, %v771
        %v902 = vadd.f32 %v628, %v776
        %v903 = vadd.f32 %v629, %v781
        %v904 = vadd.f32 %v630, %v786
        %v905 = vadd.f32 %v631, %v791
        %v906 = vadd.f32 %v632, %v796
        %v907 = vadd.f32 %v633, %v801
        %v908 = vadd.f32 %v634, %v806
        %v909 = vadd.f32 %v635, %v811
        %v910 = vadd.f32 %v636, %v816
        %v911 = vadd.f32 %v637, %v821
        %v912 = vadd.f32 %v638, %v826
        %v913 = vadd.f32 %v639, %v831
        %v914 = vadd.f32 %v640, %v836
        %v915 = vadd.f32 %v641, %v841
        %v916 = vadd.f32 %v642, %v846
        %v917 = vadd.f32 %v643, %v851
        %v918 = vadd.f32 %v644, %v856
        %v919 = vadd.f32 %v645, %v861
        %v920 = vadd.f32 %v646, %v866
        %v921 = vadd.f32 %v647, %v871
        %v922 = vadd.f32 %v648, %v876
        %v923 = vadd.f32 %v649, %v881
        %v924 = vadd.f32 %v650, %v886
        %v925 = vadd.f32 %v651, %v891
        %926 = vst [vmem:[#allocation2] sm:$0xff] %v894
        %927 = vst [vmem:[#allocation2 + $0x8] sm:$0xff] %v895
        %928 = vst [vmem:[#allocation2 + $0x10] sm:$0xff] %v896
        %929 = vst [vmem:[#allocation2 + $0x18] sm:$0xff] %v897
        %930 = vst [vmem:[#allocation2 + $0x20] sm:$0xff] %v898
        %931 = vst [vmem:[#allocation2 + $0x28] sm:$0xff] %v899
        %932 = vst [vmem:[#allocation2 + $0x30] sm:$0xff] %v900
        %933 = vst [vmem:[#allocation2 + $0x38] sm:$0xff] %v901
        %934 = vst [vmem:[#allocation2 + $0x40] sm:$0xff] %v902
        %935 = vst [vmem:[#allocation2 + $0x48] sm:$0xff] %v903
        %936 = vst [vmem:[#allocation2 + $0x50] sm:$0xff] %v904
        %937 = vst [vmem:[#allocation2 + $0x58] sm:$0xff] %v905
        %938 = vst [vmem:[#allocation2 + $0x60] sm:$0xff] %v906
        %939 = vst [vmem:[#allocation2 + $0x68] sm:$0xff] %v907
        %940 = vst [vmem:[#allocation2 + $0x70] sm:$0xff] %v908
        %941 = vst [vmem:[#allocation2 + $0x78] sm:$0xff] %v909
        %942 = vst [vmem:[#allocation2 + $0x80] sm:$0xff] %v910
        %943 = vst [vmem:[#allocation2 + $0x88] sm:$0xff] %v911
        %944 = vst [vmem:[#allocation2 + $0x90] sm:$0xff] %v912
        %945 = vst [vmem:[#allocation2 + $0x98] sm:$0xff] %v913
        %946 = vst [vmem:[#allocation2 + $0xa0] sm:$0xff] %v914
        %947 = vst [vmem:[#allocation2 + $0xa8] sm:$0xff] %v915
        %948 = vst [vmem:[#allocation2 + $0xb0] sm:$0xff] %v916
        %949 = vst [vmem:[#allocation2 + $0xb8] sm:$0xff] %v917
        %950 = vst [vmem:[#allocation2 + $0xc0] sm:$0xff] %v918
        %951 = vst [vmem:[#allocation2 + $0xc8] sm:$0xff] %v919
        %952 = vst [vmem:[#allocation2 + $0xd0] sm:$0xff] %v920
        %953 = vst [vmem:[#allocation2 + $0xd8] sm:$0xff] %v921
        %954 = vst [vmem:[#allocation2 + $0xe0] sm:$0xff] %v922
        %955 = vst [vmem:[#allocation2 + $0xe8] sm:$0xff] %v923
        %956 = vst [vmem:[#allocation2 + $0xf0] sm:$0xff] %v924
        %957 = vst [vmem:[#allocation2 + $0xf8] sm:$0xff] %v925
        %v958 = vld [vmem:[%s218 + $0x2] sm:$0xff]
        %v959 = vld [vmem:[%s218 + $0xa] sm:$0xff]
        %v960 = vld [vmem:[%s218 + $0x1a] sm:$0xff]
        %v961 = vld [vmem:[%s218 + $0x22] sm:$0xff]
        %v962 = vld [vmem:[%s218 + $0x32] sm:$0xff]
        %v963 = vld [vmem:[%s218 + $0x3a] sm:$0xff]
        %v964 = vld [vmem:[%s218 + $0x4a] sm:$0xff]
        %v965 = vld [vmem:[%s218 + $0x52] sm:$0xff]
        %v966 = vld [vmem:[%s218 + $0x62] sm:$0xff]
        %v967 = vld [vmem:[%s218 + $0x6a] sm:$0xff]
        %v968 = vld [vmem:[%s218 + $0x7a] sm:$0xff]
        %v969 = vld [vmem:[%s218 + $0x82] sm:$0xff]
        %v970 = vld [vmem:[%s218 + $0x92] sm:$0xff]
        %v971 = vld [vmem:[%s218 + $0x9a] sm:$0xff]
        %v972 = vld [vmem:[%s218 + $0xaa] sm:$0xff]
        %v973 = vld [vmem:[%s218 + $0xb2] sm:$0xff]
        %v974 = vld [vmem:[%s218 + $0xc2] sm:$0xff]
        %v975 = vld [vmem:[%s218 + $0xca] sm:$0xff]
        %v976 = vld [vmem:[%s218 + $0xda] sm:$0xff]
        %v977 = vld [vmem:[%s218 + $0xe2] sm:$0xff]
        %v978 = vld [vmem:[%s218 + $0xf2] sm:$0xff]
        %v979 = vld [vmem:[%s218 + $0xfa] sm:$0xff]
        %v980 = vld [vmem:[%s218 + $0x10a] sm:$0xff]
        %v981 = vld [vmem:[%s218 + $0x112] sm:$0xff]
        %v982 = vld [vmem:[%s218 + $0x122] sm:$0xff]
        %v983 = vld [vmem:[%s218 + $0x12a] sm:$0xff]
        %v984 = vld [vmem:[%s218 + $0x13a] sm:$0xff]
        %v985 = vld [vmem:[%s218 + $0x142] sm:$0xff]
        %v986 = vld [vmem:[%s218 + $0x152] sm:$0xff]
        %v987 = vld [vmem:[%s218 + $0x15a] sm:$0xff]
        %v988 = vld [vmem:[%s218 + $0x16a] sm:$0xff]
        %v989 = vld [vmem:[%s218 + $0x172] sm:$0xff]
        %v990 = vld [vmem:[#allocation2] sm:$0xff]
        %v991 = vld [vmem:[#allocation2 + $0x8] sm:$0xff]
        %v992 = vld [vmem:[#allocation2 + $0x10] sm:$0xff]
        %v993 = vld [vmem:[#allocation2 + $0x18] sm:$0xff]
        %v994 = vld [vmem:[#allocation2 + $0x20] sm:$0xff]
        %v995 = vld [vmem:[#allocation2 + $0x28] sm:$0xff]
        %v996 = vld [vmem:[#allocation2 + $0x30] sm:$0xff]
        %v997 = vld [vmem:[#allocation2 + $0x38] sm:$0xff]
        %v998 = vld [vmem:[#allocation2 + $0x40] sm:$0xff]
        %v999 = vld [vmem:[#allocation2 + $0x48] sm:$0xff]
        %v1000 = vld [vmem:[#allocation2 + $0x50] sm:$0xff]
        %v1001 = vld [vmem:[#allocation2 + $0x58] sm:$0xff]
        %v1002 = vld [vmem:[#allocation2 + $0x60] sm:$0xff]
        %v1003 = vld [vmem:[#allocation2 + $0x68] sm:$0xff]
        %v1004 = vld [vmem:[#allocation2 + $0x70] sm:$0xff]
        %v1005 = vld [vmem:[#allocation2 + $0x78] sm:$0xff]
        %v1006 = vld [vmem:[#allocation2 + $0x80] sm:$0xff]
        %v1007 = vld [vmem:[#allocation2 + $0x88] sm:$0xff]
        %v1008 = vld [vmem:[#allocation2 + $0x90] sm:$0xff]
        %v1009 = vld [vmem:[#allocation2 + $0x98] sm:$0xff]
        %v1010 = vld [vmem:[#allocation2 + $0xa0] sm:$0xff]
        %v1011 = vld [vmem:[#allocation2 + $0xa8] sm:$0xff]
        %v1012 = vld [vmem:[#allocation2 + $0xb0] sm:$0xff]
        %v1013 = vld [vmem:[#allocation2 + $0xb8] sm:$0xff]
        %v1014 = vld [vmem:[#allocation2 + $0xc0] sm:$0xff]
        %v1015 = vld [vmem:[#allocation2 + $0xc8] sm:$0xff]
        %v1016 = vld [vmem:[#allocation2 + $0xd0] sm:$0xff]
        %v1017 = vld [vmem:[#allocation2 + $0xd8] sm:$0xff]
        %v1018 = vld [vmem:[#allocation2 + $0xe0] sm:$0xff]
        %v1019 = vld [vmem:[#allocation2 + $0xe8] sm:$0xff]
        %v1020 = vld [vmem:[#allocation2 + $0xf0] sm:$0xff]
        %v1021 = vld [vmem:[#allocation2 + $0xf8] sm:$0xff]
        %s1022 = scalar_lea.vmem %s1, 256
        %v1023 = vld [vmem:[%s1022] sm:$0xff]
        %v1024 = vld [vmem:[%s1022 + $0x8] sm:$0xff]
        %v1025 = vld [vmem:[%s1022 + $0x10] sm:$0xff]
        %v1026 = vld [vmem:[%s1022 + $0x18] sm:$0xff]
        %v1027 = vld [vmem:[%s1022 + $0x20] sm:$0xff]
        %v1028 = vld [vmem:[%s1022 + $0x28] sm:$0xff]
        %v1029 = vld [vmem:[%s1022 + $0x30] sm:$0xff]
        %v1030 = vld [vmem:[%s1022 + $0x38] sm:$0xff]
        %v1031 = vld [vmem:[%s1022 + $0x40] sm:$0xff]
        %v1032 = vld [vmem:[%s1022 + $0x48] sm:$0xff]
        %v1033 = vld [vmem:[%s1022 + $0x50] sm:$0xff]
        %v1034 = vld [vmem:[%s1022 + $0x58] sm:$0xff]
        %v1035 = vld [vmem:[%s1022 + $0x60] sm:$0xff]
        %v1036 = vld [vmem:[%s1022 + $0x68] sm:$0xff]
        %v1037 = vld [vmem:[%s1022 + $0x70] sm:$0xff]
        %v1038 = vld [vmem:[%s1022 + $0x78] sm:$0xff]
        %1039 = vmatprep.subr.mxu0 0.0
        %1040 = vmatpush1.msra.mxu0 %v1023
        %1041 = vmatprep.subr.mxu0 0.0
        %1042 = vmatpush1.msra.mxu0 %v1024
        %1043 = vmatprep.subr.mxu0 0.0
        %1044 = vmatpush1.msra.mxu0 %v1025
        %1045 = vmatprep.subr.mxu0 0.0
        %1046 = vmatpush1.msra.mxu0 %v1026
        %1047 = vmatprep.subr.mxu0 0.0
        %1048 = vmatpush1.msra.mxu0 %v1027
        %1049 = vmatprep.subr.mxu0 0.0
        %1050 = vmatpush1.msra.mxu0 %v1028
        %1051 = vmatprep.subr.mxu0 0.0
        %1052 = vmatpush1.msra.mxu0 %v1029
        %1053 = vmatprep.subr.mxu0 0.0
        %1054 = vmatpush1.msra.mxu0 %v1030
        %1055 = vmatprep.subr.mxu0 0.0
        %1056 = vmatpush1.msra.mxu0 %v1031
        %1057 = vmatprep.subr.mxu0 0.0
        %1058 = vmatpush1.msra.mxu0 %v1032
        %1059 = vmatprep.subr.mxu0 0.0
        %1060 = vmatpush1.msra.mxu0 %v1033
        %1061 = vmatprep.subr.mxu0 0.0
        %1062 = vmatpush1.msra.mxu0 %v1034
        %1063 = vmatprep.subr.mxu0 0.0
        %1064 = vmatpush1.msra.mxu0 %v1035
        %1065 = vmatprep.subr.mxu0 0.0
        %1066 = vmatpush1.msra.mxu0 %v1036
        %1067 = vmatprep.subr.mxu0 0.0
        %1068 = vmatpush1.msra.mxu0 %v1037
        %1069 = vmatprep.subr.mxu0 0.0
        %1070 = vmatpush1.msra.mxu0 %v1038
        %1071 = vmatprep.subr.mxu0 0.0
        %1072 = vmatpush1.msra.mxu0 0.0
        %1073 = vmatprep.subr.mxu0 0.0
        %1074 = vmatpush1.msra.mxu0 0.0
        %1075 = vmatprep.subr.mxu0 0.0
        %1076 = vmatpush1.msra.mxu0 0.0
        %1077 = vmatprep.subr.mxu0 0.0
        %1078 = vmatpush1.msra.mxu0 0.0
        %1079 = vmatprep.subr.mxu0 0.0
        %1080 = vmatpush1.msra.mxu0 0.0
        %1081 = vmatprep.subr.mxu0 0.0
        %1082 = vmatpush1.msra.mxu0 0.0
        %1083 = vmatprep.subr.mxu0 0.0
        %1084 = vmatpush1.msra.mxu0 0.0
        %1085 = vmatprep.subr.mxu0 0.0
        %1086 = vmatpush1.msra.mxu0 0.0
        %1087 = vmatprep.subr.mxu0 0.0
        %1088 = vmatpush1.msra.mxu0 0.0
        %1089 = vmatprep.subr.mxu0 0.0
        %1090 = vmatpush1.msra.mxu0 0.0
        %1091 = vmatprep.subr.mxu0 0.0
        %1092 = vmatpush1.msra.mxu0 0.0
        %1093 = vmatprep.subr.mxu0 0.0
        %1094 = vmatpush1.msra.mxu0 0.0
        %1095 = vmatprep.subr.mxu0 0.0
        %1096 = vmatpush1.msra.mxu0 0.0
        %1097 = vmatprep.subr.mxu0 0.0
        %1098 = vmatpush1.msra.mxu0 0.0
        %1099 = vmatprep.subr.mxu0 0.0
        %1100 = vmatpush1.msra.mxu0 0.0
        %1101 = vmatprep.subr.mxu0 0.0
        %1102 = vmatpush1.msra.mxu0 0.0
        %1103 = vmatprep.mubr.f32.mxu0 0.0
        %1104 = vmatmul.mubr.f32.gmra.mrb[0].mxu0 %v958
        %v1105 = vpop.f32.mrb[0].mxu0
        %v1106 = vadd.f32 0.0, %v1105
        %v1107 = vpop.f32.mrb[0].mxu0
        %1108 = vmatprep.mubr.f32.mxu0 0.0
        %1109 = vmatmul.mubr.f32.gmra.mrb[0].mxu0 %v959
        %v1110 = vpop.f32.mrb[0].mxu0
        %v1111 = vadd.f32 0.0, %v1110
        %v1112 = vpop.f32.mrb[0].mxu0
        %1113 = vmatprep.mubr.f32.mxu0 0.0
        %1114 = vmatmul.mubr.f32.gmra.mrb[0].mxu0 %v960
        %v1115 = vpop.f32.mrb[0].mxu0
        %v1116 = vadd.f32 0.0, %v1115
        %v1117 = vpop.f32.mrb[0].mxu0
        %1118 = vmatprep.mubr.f32.mxu0 0.0
        %1119 = vmatmul.mubr.f32.gmra.mrb[0].mxu0 %v961
        %v1120 = vpop.f32.mrb[0].mxu0
        %v1121 = vadd.f32 0.0, %v1120
        %v1122 = vpop.f32.mrb[0].mxu0
        %1123 = vmatprep.mubr.f32.mxu0 0.0
        %1124 = vmatmul.mubr.f32.gmra.mrb[0].mxu0 %v962
        %v1125 = vpop.f32.mrb[0].mxu0
        %v1126 = vadd.f32 0.0, %v1125
        %v1127 = vpop.f32.mrb[0].mxu0
        %1128 = vmatprep.mubr.f32.mxu0 0.0
        %1129 = vmatmul.mubr.f32.gmra.mrb[0].mxu0 %v963
        %v1130 = vpop.f32.mrb[0].mxu0
        %v1131 = vadd.f32 0.0, %v1130
        %v1132 = vpop.f32.mrb[0].mxu0
        %1133 = vmatprep.mubr.f32.mxu0 0.0
        %1134 = vmatmul.mubr.f32.gmra.mrb[0].mxu0 %v964
        %v1135 = vpop.f32.mrb[0].mxu0
        %v1136 = vadd.f32 0.0, %v1135
        %v1137 = vpop.f32.mrb[0].mxu0
        %1138 = vmatprep.mubr.f32.mxu0 0.0
        %1139 = vmatmul.mubr.f32.gmra.mrb[0].mxu0 %v965
        %v1140 = vpop.f32.mrb[0].mxu0
        %v1141 = vadd.f32 0.0, %v1140
        %v1142 = vpop.f32.mrb[0].mxu0
        %1143 = vmatprep.mubr.f32.mxu0 0.0
        %1144 = vmatmul.mubr.f32.gmra.mrb[0].mxu0 %v966
        %v1145 = vpop.f32.mrb[0].mxu0
        %v1146 = vadd.f32 0.0, %v1145
        %v1147 = vpop.f32.mrb[0].mxu0
        %1148 = vmatprep.mubr.f32.mxu0 0.0
        %1149 = vmatmul.mubr.f32.gmra.mrb[0].mxu0 %v967
        %v1150 = vpop.f32.mrb[0].mxu0
        %v1151 = vadd.f32 0.0, %v1150
        %v1152 = vpop.f32.mrb[0].mxu0
        %1153 = vmatprep.mubr.f32.mxu0 0.0
        %1154 = vmatmul.mubr.f32.gmra.mrb[0].mxu0 %v968
        %v1155 = vpop.f32.mrb[0].mxu0
        %v1156 = vadd.f32 0.0, %v1155
        %v1157 = vpop.f32.mrb[0].mxu0
        %1158 = vmatprep.mubr.f32.mxu0 0.0
        %1159 = vmatmul.mubr.f32.gmra.mrb[0].mxu0 %v969
        %v1160 = vpop.f32.mrb[0].mxu0
        %v1161 = vadd.f32 0.0, %v1160
        %v1162 = vpop.f32.mrb[0].mxu0
        %1163 = vmatprep.mubr.f32.mxu0 0.0
        %1164 = vmatmul.mubr.f32.gmra.mrb[0].mxu0 %v970
        %v1165 = vpop.f32.mrb[0].mxu0
        %v1166 = vadd.f32 0.0, %v1165
        %v1167 = vpop.f32.mrb[0].mxu0
        %1168 = vmatprep.mubr.f32.mxu0 0.0
        %1169 = vmatmul.mubr.f32.gmra.mrb[0].mxu0 %v971
        %v1170 = vpop.f32.mrb[0].mxu0
        %v1171 = vadd.f32 0.0, %v1170
        %v1172 = vpop.f32.mrb[0].mxu0
        %1173 = vmatprep.mubr.f32.mxu0 0.0
        %1174 = vmatmul.mubr.f32.gmra.mrb[0].mxu0 %v972
        %v1175 = vpop.f32.mrb[0].mxu0
        %v1176 = vadd.f32 0.0, %v1175
        %v1177 = vpop.f32.mrb[0].mxu0
        %1178 = vmatprep.mubr.f32.mxu0 0.0
        %1179 = vmatmul.mubr.f32.gmra.mrb[0].mxu0 %v973
        %v1180 = vpop.f32.mrb[0].mxu0
        %v1181 = vadd.f32 0.0, %v1180
        %v1182 = vpop.f32.mrb[0].mxu0
        %1183 = vmatprep.mubr.f32.mxu0 0.0
        %1184 = vmatmul.mubr.f32.gmra.mrb[0].mxu0 %v974
        %v1185 = vpop.f32.mrb[0].mxu0
        %v1186 = vadd.f32 0.0, %v1185
        %v1187 = vpop.f32.mrb[0].mxu0
        %1188 = vmatprep.mubr.f32.mxu0 0.0
        %1189 = vmatmul.mubr.f32.gmra.mrb[0].mxu0 %v975
        %v1190 = vpop.f32.mrb[0].mxu0
        %v1191 = vadd.f32 0.0, %v1190
        %v1192 = vpop.f32.mrb[0].mxu0
        %1193 = vmatprep.mubr.f32.mxu0 0.0
        %1194 = vmatmul.mubr.f32.gmra.mrb[0].mxu0 %v976
        %v1195 = vpop.f32.mrb[0].mxu0
        %v1196 = vadd.f32 0.0, %v1195
        %v1197 = vpop.f32.mrb[0].mxu0
        %1198 = vmatprep.mubr.f32.mxu0 0.0
        %1199 = vmatmul.mubr.f32.gmra.mrb[0].mxu0 %v977
        %v1200 = vpop.f32.mrb[0].mxu0
        %v1201 = vadd.f32 0.0, %v1200
        %v1202 = vpop.f32.mrb[0].mxu0
        %1203 = vmatprep.mubr.f32.mxu0 0.0
        %1204 = vmatmul.mubr.f32.gmra.mrb[0].mxu0 %v978
        %v1205 = vpop.f32.mrb[0].mxu0
        %v1206 = vadd.f32 0.0, %v1205
        %v1207 = vpop.f32.mrb[0].mxu0
        %1208 = vmatprep.mubr.f32.mxu0 0.0
        %1209 = vmatmul.mubr.f32.gmra.mrb[0].mxu0 %v979
        %v1210 = vpop.f32.mrb[0].mxu0
        %v1211 = vadd.f32 0.0, %v1210
        %v1212 = vpop.f32.mrb[0].mxu0
        %1213 = vmatprep.mubr.f32.mxu0 0.0
        %1214 = vmatmul.mubr.f32.gmra.mrb[0].mxu0 %v980
        %v1215 = vpop.f32.mrb[0].mxu0
        %v1216 = vadd.f32 0.0, %v1215
        %v1217 = vpop.f32.mrb[0].mxu0
        %1218 = vmatprep.mubr.f32.mxu0 0.0
        %1219 = vmatmul.mubr.f32.gmra.mrb[0].mxu0 %v981
        %v1220 = vpop.f32.mrb[0].mxu0
        %v1221 = vadd.f32 0.0, %v1220
        %v1222 = vpop.f32.mrb[0].mxu0
        %1223 = vmatprep.mubr.f32.mxu0 0.0
        %1224 = vmatmul.mubr.f32.gmra.mrb[0].mxu0 %v982
        %v1225 = vpop.f32.mrb[0].mxu0
        %v1226 = vadd.f32 0.0, %v1225
        %v1227 = vpop.f32.mrb[0].mxu0
        %1228 = vmatprep.mubr.f32.mxu0 0.0
        %1229 = vmatmul.mubr.f32.gmra.mrb[0].mxu0 %v983
        %v1230 = vpop.f32.mrb[0].mxu0
        %v1231 = vadd.f32 0.0, %v1230
        %v1232 = vpop.f32.mrb[0].mxu0
        %1233 = vmatprep.mubr.f32.mxu0 0.0
        %1234 = vmatmul.mubr.f32.gmra.mrb[0].mxu0 %v984
        %v1235 = vpop.f32.mrb[0].mxu0
        %v1236 = vadd.f32 0.0, %v1235
        %v1237 = vpop.f32.mrb[0].mxu0
        %1238 = vmatprep.mubr.f32.mxu0 0.0
        %1239 = vmatmul.mubr.f32.gmra.mrb[0].mxu0 %v985
        %v1240 = vpop.f32.mrb[0].mxu0
        %v1241 = vadd.f32 0.0, %v1240
        %v1242 = vpop.f32.mrb[0].mxu0
        %1243 = vmatprep.mubr.f32.mxu0 0.0
        %1244 = vmatmul.mubr.f32.gmra.mrb[0].mxu0 %v986
        %v1245 = vpop.f32.mrb[0].mxu0
        %v1246 = vadd.f32 0.0, %v1245
        %v1247 = vpop.f32.mrb[0].mxu0
        %1248 = vmatprep.mubr.f32.mxu0 0.0
        %1249 = vmatmul.mubr.f32.gmra.mrb[0].mxu0 %v987
        %v1250 = vpop.f32.mrb[0].mxu0
        %v1251 = vadd.f32 0.0, %v1250
        %v1252 = vpop.f32.mrb[0].mxu0
        %1253 = vmatprep.mubr.f32.mxu0 0.0
        %1254 = vmatmul.mubr.f32.gmra.mrb[0].mxu0 %v988
        %v1255 = vpop.f32.mrb[0].mxu0
        %v1256 = vadd.f32 0.0, %v1255
        %v1257 = vpop.f32.mrb[0].mxu0
        %1258 = vmatprep.mubr.f32.mxu0 0.0
        %1259 = vmatmul.mubr.f32.gmra.mrb[0].mxu0 %v989
        %v1260 = vpop.f32.mrb[0].mxu0
        %v1261 = vadd.f32 0.0, %v1260
        %v1262 = vpop.f32.mrb[0].mxu0
        %1263 = vdwg.mxu0
        %v1264 = vadd.f32 %v990, %v1106
        %v1265 = vadd.f32 %v991, %v1111
        %v1266 = vadd.f32 %v992, %v1116
        %v1267 = vadd.f32 %v993, %v1121
        %v1268 = vadd.f32 %v994, %v1126
        %v1269 = vadd.f32 %v995, %v1131
        %v1270 = vadd.f32 %v996, %v1136
        %v1271 = vadd.f32 %v997, %v1141
        %v1272 = vadd.f32 %v998, %v1146
        %v1273 = vadd.f32 %v999, %v1151
        %v1274 = vadd.f32 %v1000, %v1156
        %v1275 = vadd.f32 %v1001, %v1161
        %v1276 = vadd.f32 %v1002, %v1166
        %v1277 = vadd.f32 %v1003, %v1171
        %v1278 = vadd.f32 %v1004, %v1176
        %v1279 = vadd.f32 %v1005, %v1181
        %v1280 = vadd.f32 %v1006, %v1186
        %v1281 = vadd.f32 %v1007, %v1191
        %v1282 = vadd.f32 %v1008, %v1196
        %v1283 = vadd.f32 %v1009, %v1201
        %v1284 = vadd.f32 %v1010, %v1206
        %v1285 = vadd.f32 %v1011, %v1211
        %v1286 = vadd.f32 %v1012, %v1216
        %v1287 = vadd.f32 %v1013, %v1221
        %v1288 = vadd.f32 %v1014, %v1226
        %v1289 = vadd.f32 %v1015, %v1231
        %v1290 = vadd.f32 %v1016, %v1236
        %v1291 = vadd.f32 %v1017, %v1241
        %v1292 = vadd.f32 %v1018, %v1246
        %v1293 = vadd.f32 %v1019, %v1251
        %v1294 = vadd.f32 %v1020, %v1256
        %v1295 = vadd.f32 %v1021, %v1261
        %1296 = vst [vmem:[#allocation2] sm:$0xff] %v1264
        %1297 = vst [vmem:[#allocation2 + $0x8] sm:$0xff] %v1265
        %1298 = vst [vmem:[#allocation2 + $0x10] sm:$0xff] %v1266
        %1299 = vst [vmem:[#allocation2 + $0x18] sm:$0xff] %v1267
        %1300 = vst [vmem:[#allocation2 + $0x20] sm:$0xff] %v1268
        %1301 = vst [vmem:[#allocation2 + $0x28] sm:$0xff] %v1269
        %1302 = vst [vmem:[#allocation2 + $0x30] sm:$0xff] %v1270
        %1303 = vst [vmem:[#allocation2 + $0x38] sm:$0xff] %v1271
        %1304 = vst [vmem:[#allocation2 + $0x40] sm:$0xff] %v1272
        %1305 = vst [vmem:[#allocation2 + $0x48] sm:$0xff] %v1273
        %1306 = vst [vmem:[#allocation2 + $0x50] sm:$0xff] %v1274
        %1307 = vst [vmem:[#allocation2 + $0x58] sm:$0xff] %v1275
        %1308 = vst [vmem:[#allocation2 + $0x60] sm:$0xff] %v1276
        %1309 = vst [vmem:[#allocation2 + $0x68] sm:$0xff] %v1277
        %1310 = vst [vmem:[#allocation2 + $0x70] sm:$0xff] %v1278
        %1311 = vst [vmem:[#allocation2 + $0x78] sm:$0xff] %v1279
        %1312 = vst [vmem:[#allocation2 + $0x80] sm:$0xff] %v1280
        %1313 = vst [vmem:[#allocation2 + $0x88] sm:$0xff] %v1281
        %1314 = vst [vmem:[#allocation2 + $0x90] sm:$0xff] %v1282
        %1315 = vst [vmem:[#allocation2 + $0x98] sm:$0xff] %v1283
        %1316 = vst [vmem:[#allocation2 + $0xa0] sm:$0xff] %v1284
        %1317 = vst [vmem:[#allocation2 + $0xa8] sm:$0xff] %v1285
        %1318 = vst [vmem:[#allocation2 + $0xb0] sm:$0xff] %v1286
        %1319 = vst [vmem:[#allocation2 + $0xb8] sm:$0xff] %v1287
        %1320 = vst [vmem:[#allocation2 + $0xc0] sm:$0xff] %v1288
        %1321 = vst [vmem:[#allocation2 + $0xc8] sm:$0xff] %v1289
        %1322 = vst [vmem:[#allocation2 + $0xd0] sm:$0xff] %v1290
        %1323 = vst [vmem:[#allocation2 + $0xd8] sm:$0xff] %v1291
        %1324 = vst [vmem:[#allocation2 + $0xe0] sm:$0xff] %v1292
        %1325 = vst [vmem:[#allocation2 + $0xe8] sm:$0xff] %v1293
        %1326 = vst [vmem:[#allocation2 + $0xf0] sm:$0xff] %v1294
        %1327 = vst [vmem:[#allocation2 + $0xf8] sm:$0xff] %v1295
        %s1328 = sadd.s32 %s184, 1
        %s1329 = smul.u32 %s1328, 24
        %s1330 = scalar_lea.vmem %s182, %s1329
        %v1331 = vld [vmem:[%s1330] sm:$0xff]
        %v1332 = vld [vmem:[%s1330 + $0x8] sm:$0xff]
        %v1333 = vld [vmem:[%s1330 + $0x18] sm:$0xff]
        %v1334 = vld [vmem:[%s1330 + $0x20] sm:$0xff]
        %v1335 = vld [vmem:[%s1330 + $0x30] sm:$0xff]
        %v1336 = vld [vmem:[%s1330 + $0x38] sm:$0xff]
        %v1337 = vld [vmem:[%s1330 + $0x48] sm:$0xff]
        %v1338 = vld [vmem:[%s1330 + $0x50] sm:$0xff]
        %v1339 = vld [vmem:[%s1330 + $0x60] sm:$0xff]
        %v1340 = vld [vmem:[%s1330 + $0x68] sm:$0xff]
        %v1341 = vld [vmem:[%s1330 + $0x78] sm:$0xff]
        %v1342 = vld [vmem:[%s1330 + $0x80] sm:$0xff]
        %v1343 = vld [vmem:[%s1330 + $0x90] sm:$0xff]
        %v1344 = vld [vmem:[%s1330 + $0x98] sm:$0xff]
        %v1345 = vld [vmem:[%s1330 + $0xa8] sm:$0xff]
        %v1346 = vld [vmem:[%s1330 + $0xb0] sm:$0xff]
        %v1347 = vld [vmem:[%s1330 + $0xc0] sm:$0xff]
        %v1348 = vld [vmem:[%s1330 + $0xc8] sm:$0xff]
        %v1349 = vld [vmem:[%s1330 + $0xd8] sm:$0xff]
        %v1350 = vld [vmem:[%s1330 + $0xe0] sm:$0xff]
        %v1351 = vld [vmem:[%s1330 + $0xf0] sm:$0xff]
        %v1352 = vld [vmem:[%s1330 + $0xf8] sm:$0xff]
        %v1353 = vld [vmem:[%s1330 + $0x108] sm:$0xff]
        %v1354 = vld [vmem:[%s1330 + $0x110] sm:$0xff]
        %v1355 = vld [vmem:[%s1330 + $0x120] sm:$0xff]
        %v1356 = vld [vmem:[%s1330 + $0x128] sm:$0xff]
        %v1357 = vld [vmem:[%s1330 + $0x138] sm:$0xff]
        %v1358 = vld [vmem:[%s1330 + $0x140] sm:$0xff]
        %v1359 = vld [vmem:[%s1330 + $0x150] sm:$0xff]
        %v1360 = vld [vmem:[%s1330 + $0x158] sm:$0xff]
        %v1361 = vld [vmem:[%s1330 + $0x168] sm:$0xff]
        %v1362 = vld [vmem:[%s1330 + $0x170] sm:$0xff]
        %v1363 = vld [vmem:[#allocation2] sm:$0xff]
        %v1364 = vld [vmem:[#allocation2 + $0x8] sm:$0xff]
        %v1365 = vld [vmem:[#allocation2 + $0x10] sm:$0xff]
        %v1366 = vld [vmem:[#allocation2 + $0x18] sm:$0xff]
        %v1367 = vld [vmem:[#allocation2 + $0x20] sm:$0xff]
        %v1368 = vld [vmem:[#allocation2 + $0x28] sm:$0xff]
        %v1369 = vld [vmem:[#allocation2 + $0x30] sm:$0xff]
        %v1370 = vld [vmem:[#allocation2 + $0x38] sm:$0xff]
        %v1371 = vld [vmem:[#allocation2 + $0x40] sm:$0xff]
        %v1372 = vld [vmem:[#allocation2 + $0x48] sm:$0xff]
        %v1373 = vld [vmem:[#allocation2 + $0x50] sm:$0xff]
        %v1374 = vld [vmem:[#allocation2 + $0x58] sm:$0xff]
        %v1375 = vld [vmem:[#allocation2 + $0x60] sm:$0xff]
        %v1376 = vld [vmem:[#allocation2 + $0x68] sm:$0xff]
        %v1377 = vld [vmem:[#allocation2 + $0x70] sm:$0xff]
        %v1378 = vld [vmem:[#allocation2 + $0x78] sm:$0xff]
        %v1379 = vld [vmem:[#allocation2 + $0x80] sm:$0xff]
        %v1380 = vld [vmem:[#allocation2 + $0x88] sm:$0xff]
        %v1381 = vld [vmem:[#allocation2 + $0x90] sm:$0xff]
        %v1382 = vld [vmem:[#allocation2 + $0x98] sm:$0xff]
        %v1383 = vld [vmem:[#allocation2 + $0xa0] sm:$0xff]
        %v1384 = vld [vmem:[#allocation2 + $0xa8] sm:$0xff]
        %v1385 = vld [vmem:[#allocation2 + $0xb0] sm:$0xff]
        %v1386 = vld [vmem:[#allocation2 + $0xb8] sm:$0xff]
        %v1387 = vld [vmem:[#allocation2 + $0xc0] sm:$0xff]
        %v1388 = vld [vmem:[#allocation2 + $0xc8] sm:$0xff]
        %v1389 = vld [vmem:[#allocation2 + $0xd0] sm:$0xff]
        %v1390 = vld [vmem:[#allocation2 + $0xd8] sm:$0xff]
        %v1391 = vld [vmem:[#allocation2 + $0xe0] sm:$0xff]
        %v1392 = vld [vmem:[#allocation2 + $0xe8] sm:$0xff]
        %v1393 = vld [vmem:[#allocation2 + $0xf0] sm:$0xff]
        %v1394 = vld [vmem:[#allocation2 + $0xf8] sm:$0xff]
        %s1395 = scalar_lea.vmem %s1, 384
        %v1396 = vld [vmem:[%s1395] sm:$0xff]
        %v1397 = vld [vmem:[%s1395 + $0x8] sm:$0xff]
        %v1398 = vld [vmem:[%s1395 + $0x10] sm:$0xff]
        %v1399 = vld [vmem:[%s1395 + $0x18] sm:$0xff]
        %v1400 = vld [vmem:[%s1395 + $0x20] sm:$0xff]
        %v1401 = vld [vmem:[%s1395 + $0x28] sm:$0xff]
        %v1402 = vld [vmem:[%s1395 + $0x30] sm:$0xff]
        %v1403 = vld [vmem:[%s1395 + $0x38] sm:$0xff]
        %v1404 = vld [vmem:[%s1395 + $0x40] sm:$0xff]
        %v1405 = vld [vmem:[%s1395 + $0x48] sm:$0xff]
        %v1406 = vld [vmem:[%s1395 + $0x50] sm:$0xff]
        %v1407 = vld [vmem:[%s1395 + $0x58] sm:$0xff]
        %v1408 = vld [vmem:[%s1395 + $0x60] sm:$0xff]
        %v1409 = vld [vmem:[%s1395 + $0x68] sm:$0xff]
        %v1410 = vld [vmem:[%s1395 + $0x70] sm:$0xff]
        %v1411 = vld [vmem:[%s1395 + $0x78] sm:$0xff]
        %1412 = vmatprep.subr.mxu0 0.0
        %1413 = vmatpush1.msra.mxu0 %v1396
        %1414 = vmatprep.subr.mxu0 0.0
        %1415 = vmatpush1.msra.mxu0 %v1397
        %1416 = vmatprep.subr.mxu0 0.0
        %1417 = vmatpush1.msra.mxu0 %v1398
        %1418 = vmatprep.subr.mxu0 0.0
        %1419 = vmatpush1.msra.mxu0 %v1399
        %1420 = vmatprep.subr.mxu0 0.0
        %1421 = vmatpush1.msra.mxu0 %v1400
        %1422 = vmatprep.subr.mxu0 0.0
        %1423 = vmatpush1.msra.mxu0 %v1401
        %1424 = vmatprep.subr.mxu0 0.0
        %1425 = vmatpush1.msra.mxu0 %v1402
        %1426 = vmatprep.subr.mxu0 0.0
        %1427 = vmatpush1.msra.mxu0 %v1403
        %1428 = vmatprep.subr.mxu0 0.0
        %1429 = vmatpush1.msra.mxu0 %v1404
        %1430 = vmatprep.subr.mxu0 0.0
        %1431 = vmatpush1.msra.mxu0 %v1405
        %1432 = vmatprep.subr.mxu0 0.0
        %1433 = vmatpush1.msra.mxu0 %v1406
        %1434 = vmatprep.subr.mxu0 0.0
        %1435 = vmatpush1.msra.mxu0 %v1407
        %1436 = vmatprep.subr.mxu0 0.0
        %1437 = vmatpush1.msra.mxu0 %v1408
        %1438 = vmatprep.subr.mxu0 0.0
        %1439 = vmatpush1.msra.mxu0 %v1409
        %1440 = vmatprep.subr.mxu0 0.0
        %1441 = vmatpush1.msra.mxu0 %v1410
        %1442 = vmatprep.subr.mxu0 0.0
        %1443 = vmatpush1.msra.mxu0 %v1411
        %1444 = vmatprep.subr.mxu0 0.0
        %1445 = vmatpush1.msra.mxu0 0.0
        %1446 = vmatprep.subr.mxu0 0.0
        %1447 = vmatpush1.msra.mxu0 0.0
        %1448 = vmatprep.subr.mxu0 0.0
        %1449 = vmatpush1.msra.mxu0 0.0
        %1450 = vmatprep.subr.mxu0 0.0
        %1451 = vmatpush1.msra.mxu0 0.0
        %1452 = vmatprep.subr.mxu0 0.0
        %1453 = vmatpush1.msra.mxu0 0.0
        %1454 = vmatprep.subr.mxu0 0.0
        %1455 = vmatpush1.msra.mxu0 0.0
        %1456 = vmatprep.subr.mxu0 0.0
        %1457 = vmatpush1.msra.mxu0 0.0
        %1458 = vmatprep.subr.mxu0 0.0
        %1459 = vmatpush1.msra.mxu0 0.0
        %1460 = vmatprep.subr.mxu0 0.0
        %1461 = vmatpush1.msra.mxu0 0.0
        %1462 = vmatprep.subr.mxu0 0.0
        %1463 = vmatpush1.msra.mxu0 0.0
        %1464 = vmatprep.subr.mxu0 0.0
        %1465 = vmatpush1.msra.mxu0 0.0
        %1466 = vmatprep.subr.mxu0 0.0
        %1467 = vmatpush1.msra.mxu0 0.0
        %1468 = vmatprep.subr.mxu0 0.0
        %1469 = vmatpush1.msra.mxu0 0.0
        %1470 = vmatprep.subr.mxu0 0.0
        %1471 = vmatpush1.msra.mxu0 0.0
        %1472 = vmatprep.subr.mxu0 0.0
        %1473 = vmatpush1.msra.mxu0 0.0
        %1474 = vmatprep.subr.mxu0 0.0
        %1475 = vmatpush1.msra.mxu0 0.0
        %1476 = vmatprep.mubr.f32.mxu0 0.0
        %1477 = vmatmul.mubr.f32.gmra.mrb[0].mxu0 %v1331
        %v1478 = vpop.f32.mrb[0].mxu0
        %v1479 = vadd.f32 0.0, %v1478
        %v1480 = vpop.f32.mrb[0].mxu0
        %1481 = vmatprep.mubr.f32.mxu0 0.0
        %1482 = vmatmul.mubr.f32.gmra.mrb[0].mxu0 %v1332
        %v1483 = vpop.f32.mrb[0].mxu0
        %v1484 = vadd.f32 0.0, %v1483
        %v1485 = vpop.f32.mrb[0].mxu0
        %1486 = vmatprep.mubr.f32.mxu0 0.0
        %1487 = vmatmul.mubr.f32.gmra.mrb[0].mxu0 %v1333
        %v1488 = vpop.f32.mrb[0].mxu0
        %v1489 = vadd.f32 0.0, %v1488
        %v1490 = vpop.f32.mrb[0].mxu0
        %1491 = vmatprep.mubr.f32.mxu0 0.0
        %1492 = vmatmul.mubr.f32.gmra.mrb[0].mxu0 %v1334
        %v1493 = vpop.f32.mrb[0].mxu0
        %v1494 = vadd.f32 0.0, %v1493
        %v1495 = vpop.f32.mrb[0].mxu0
        %1496 = vmatprep.mubr.f32.mxu0 0.0
        %1497 = vmatmul.mubr.f32.gmra.mrb[0].mxu0 %v1335
        %v1498 = vpop.f32.mrb[0].mxu0
        %v1499 = vadd.f32 0.0, %v1498
        %v1500 = vpop.f32.mrb[0].mxu0
        %1501 = vmatprep.mubr.f32.mxu0 0.0
        %1502 = vmatmul.mubr.f32.gmra.mrb[0].mxu0 %v1336
        %v1503 = vpop.f32.mrb[0].mxu0
        %v1504 = vadd.f32 0.0, %v1503
        %v1505 = vpop.f32.mrb[0].mxu0
        %1506 = vmatprep.mubr.f32.mxu0 0.0
        %1507 = vmatmul.mubr.f32.gmra.mrb[0].mxu0 %v1337
        %v1508 = vpop.f32.mrb[0].mxu0
        %v1509 = vadd.f32 0.0, %v1508
        %v1510 = vpop.f32.mrb[0].mxu0
        %1511 = vmatprep.mubr.f32.mxu0 0.0
        %1512 = vmatmul.mubr.f32.gmra.mrb[0].mxu0 %v1338
        %v1513 = vpop.f32.mrb[0].mxu0
        %v1514 = vadd.f32 0.0, %v1513
        %v1515 = vpop.f32.mrb[0].mxu0
        %1516 = vmatprep.mubr.f32.mxu0 0.0
        %1517 = vmatmul.mubr.f32.gmra.mrb[0].mxu0 %v1339
        %v1518 = vpop.f32.mrb[0].mxu0
        %v1519 = vadd.f32 0.0, %v1518
        %v1520 = vpop.f32.mrb[0].mxu0
        %1521 = vmatprep.mubr.f32.mxu0 0.0
        %1522 = vmatmul.mubr.f32.gmra.mrb[0].mxu0 %v1340
        %v1523 = vpop.f32.mrb[0].mxu0
        %v1524 = vadd.f32 0.0, %v1523
        %v1525 = vpop.f32.mrb[0].mxu0
        %1526 = vmatprep.mubr.f32.mxu0 0.0
        %1527 = vmatmul.mubr.f32.gmra.mrb[0].mxu0 %v1341
        %v1528 = vpop.f32.mrb[0].mxu0
        %v1529 = vadd.f32 0.0, %v1528
        %v1530 = vpop.f32.mrb[0].mxu0
        %1531 = vmatprep.mubr.f32.mxu0 0.0
        %1532 = vmatmul.mubr.f32.gmra.mrb[0].mxu0 %v1342
        %v1533 = vpop.f32.mrb[0].mxu0
        %v1534 = vadd.f32 0.0, %v1533
        %v1535 = vpop.f32.mrb[0].mxu0
        %1536 = vmatprep.mubr.f32.mxu0 0.0
        %1537 = vmatmul.mubr.f32.gmra.mrb[0].mxu0 %v1343
        %v1538 = vpop.f32.mrb[0].mxu0
        %v1539 = vadd.f32 0.0, %v1538
        %v1540 = vpop.f32.mrb[0].mxu0
        %1541 = vmatprep.mubr.f32.mxu0 0.0
        %1542 = vmatmul.mubr.f32.gmra.mrb[0].mxu0 %v1344
        %v1543 = vpop.f32.mrb[0].mxu0
        %v1544 = vadd.f32 0.0, %v1543
        %v1545 = vpop.f32.mrb[0].mxu0
        %1546 = vmatprep.mubr.f32.mxu0 0.0
        %1547 = vmatmul.mubr.f32.gmra.mrb[0].mxu0 %v1345
        %v1548 = vpop.f32.mrb[0].mxu0
        %v1549 = vadd.f32 0.0, %v1548
        %v1550 = vpop.f32.mrb[0].mxu0
        %1551 = vmatprep.mubr.f32.mxu0 0.0
        %1552 = vmatmul.mubr.f32.gmra.mrb[0].mxu0 %v1346
        %v1553 = vpop.f32.mrb[0].mxu0
        %v1554 = vadd.f32 0.0, %v1553
        %v1555 = vpop.f32.mrb[0].mxu0
        %1556 = vmatprep.mubr.f32.mxu0 0.0
        %1557 = vmatmul.mubr.f32.gmra.mrb[0].mxu0 %v1347
        %v1558 = vpop.f32.mrb[0].mxu0
        %v1559 = vadd.f32 0.0, %v1558
        %v1560 = vpop.f32.mrb[0].mxu0
        %1561 = vmatprep.mubr.f32.mxu0 0.0
        %1562 = vmatmul.mubr.f32.gmra.mrb[0].mxu0 %v1348
        %v1563 = vpop.f32.mrb[0].mxu0
        %v1564 = vadd.f32 0.0, %v1563
        %v1565 = vpop.f32.mrb[0].mxu0
        %1566 = vmatprep.mubr.f32.mxu0 0.0
        %1567 = vmatmul.mubr.f32.gmra.mrb[0].mxu0 %v1349
        %v1568 = vpop.f32.mrb[0].mxu0
        %v1569 = vadd.f32 0.0, %v1568
        %v1570 = vpop.f32.mrb[0].mxu0
        %1571 = vmatprep.mubr.f32.mxu0 0.0
        %1572 = vmatmul.mubr.f32.gmra.mrb[0].mxu0 %v1350
        %v1573 = vpop.f32.mrb[0].mxu0
        %v1574 = vadd.f32 0.0, %v1573
        %v1575 = vpop.f32.mrb[0].mxu0
        %1576 = vmatprep.mubr.f32.mxu0 0.0
        %1577 = vmatmul.mubr.f32.gmra.mrb[0].mxu0 %v1351
        %v1578 = vpop.f32.mrb[0].mxu0
        %v1579 = vadd.f32 0.0, %v1578
        %v1580 = vpop.f32.mrb[0].mxu0
        %1581 = vmatprep.mubr.f32.mxu0 0.0
        %1582 = vmatmul.mubr.f32.gmra.mrb[0].mxu0 %v1352
        %v1583 = vpop.f32.mrb[0].mxu0
        %v1584 = vadd.f32 0.0, %v1583
        %v1585 = vpop.f32.mrb[0].mxu0
        %1586 = vmatprep.mubr.f32.mxu0 0.0
        %1587 = vmatmul.mubr.f32.gmra.mrb[0].mxu0 %v1353
        %v1588 = vpop.f32.mrb[0].mxu0
        %v1589 = vadd.f32 0.0, %v1588
        %v1590 = vpop.f32.mrb[0].mxu0
        %1591 = vmatprep.mubr.f32.mxu0 0.0
        %1592 = vmatmul.mubr.f32.gmra.mrb[0].mxu0 %v1354
        %v1593 = vpop.f32.mrb[0].mxu0
        %v1594 = vadd.f32 0.0, %v1593
        %v1595 = vpop.f32.mrb[0].mxu0
        %1596 = vmatprep.mubr.f32.mxu0 0.0
        %1597 = vmatmul.mubr.f32.gmra.mrb[0].mxu0 %v1355
        %v1598 = vpop.f32.mrb[0].mxu0
        %v1599 = vadd.f32 0.0, %v1598
        %v1600 = vpop.f32.mrb[0].mxu0
        %1601 = vmatprep.mubr.f32.mxu0 0.0
        %1602 = vmatmul.mubr.f32.gmra.mrb[0].mxu0 %v1356
        %v1603 = vpop.f32.mrb[0].mxu0
        %v1604 = vadd.f32 0.0, %v1603
        %v1605 = vpop.f32.mrb[0].mxu0
        %1606 = vmatprep.mubr.f32.mxu0 0.0
        %1607 = vmatmul.mubr.f32.gmra.mrb[0].mxu0 %v1357
        %v1608 = vpop.f32.mrb[0].mxu0
        %v1609 = vadd.f32 0.0, %v1608
        %v1610 = vpop.f32.mrb[0].mxu0
        %1611 = vmatprep.mubr.f32.mxu0 0.0
        %1612 = vmatmul.mubr.f32.gmra.mrb[0].mxu0 %v1358
        %v1613 = vpop.f32.mrb[0].mxu0
        %v1614 = vadd.f32 0.0, %v1613
        %v1615 = vpop.f32.mrb[0].mxu0
        %1616 = vmatprep.mubr.f32.mxu0 0.0
        %1617 = vmatmul.mubr.f32.gmra.mrb[0].mxu0 %v1359
        %v1618 = vpop.f32.mrb[0].mxu0
        %v1619 = vadd.f32 0.0, %v1618
        %v1620 = vpop.f32.mrb[0].mxu0
        %1621 = vmatprep.mubr.f32.mxu0 0.0
        %1622 = vmatmul.mubr.f32.gmra.mrb[0].mxu0 %v1360
        %v1623 = vpop.f32.mrb[0].mxu0
        %v1624 = vadd.f32 0.0, %v1623
        %v1625 = vpop.f32.mrb[0].mxu0
        %1626 = vmatprep.mubr.f32.mxu0 0.0
        %1627 = vmatmul.mubr.f32.gmra.mrb[0].mxu0 %v1361
        %v1628 = vpop.f32.mrb[0].mxu0
        %v1629 = vadd.f32 0.0, %v1628
        %v1630 = vpop.f32.mrb[0].mxu0
        %1631 = vmatprep.mubr.f32.mxu0 0.0
        %1632 = vmatmul.mubr.f32.gmra.mrb[0].mxu0 %v1362
        %v1633 = vpop.f32.mrb[0].mxu0
        %v1634 = vadd.f32 0.0, %v1633
        %v1635 = vpop.f32.mrb[0].mxu0
        %1636 = vdwg.mxu0
        %v1637 = vadd.f32 %v1363, %v1479
        %v1638 = vadd.f32 %v1364, %v1484
        %v1639 = vadd.f32 %v1365, %v1489
        %v1640 = vadd.f32 %v1366, %v1494
        %v1641 = vadd.f32 %v1367, %v1499
        %v1642 = vadd.f32 %v1368, %v1504
        %v1643 = vadd.f32 %v1369, %v1509
        %v1644 = vadd.f32 %v1370, %v1514
        %v1645 = vadd.f32 %v1371, %v1519
        %v1646 = vadd.f32 %v1372, %v1524
        %v1647 = vadd.f32 %v1373, %v1529
        %v1648 = vadd.f32 %v1374, %v1534
        %v1649 = vadd.f32 %v1375, %v1539
        %v1650 = vadd.f32 %v1376, %v1544
        %v1651 = vadd.f32 %v1377, %v1549
        %v1652 = vadd.f32 %v1378, %v1554
        %v1653 = vadd.f32 %v1379, %v1559
        %v1654 = vadd.f32 %v1380, %v1564
        %v1655 = vadd.f32 %v1381, %v1569
        %v1656 = vadd.f32 %v1382, %v1574
        %v1657 = vadd.f32 %v1383, %v1579
        %v1658 = vadd.f32 %v1384, %v1584
        %v1659 = vadd.f32 %v1385, %v1589
        %v1660 = vadd.f32 %v1386, %v1594
        %v1661 = vadd.f32 %v1387, %v1599
        %v1662 = vadd.f32 %v1388, %v1604
        %v1663 = vadd.f32 %v1389, %v1609
        %v1664 = vadd.f32 %v1390, %v1614
        %v1665 = vadd.f32 %v1391, %v1619
        %v1666 = vadd.f32 %v1392, %v1624
        %v1667 = vadd.f32 %v1393, %v1629
        %v1668 = vadd.f32 %v1394, %v1634
        %1669 = vst [vmem:[#allocation2] sm:$0xff] %v1637
        %1670 = vst [vmem:[#allocation2 + $0x8] sm:$0xff] %v1638
        %1671 = vst [vmem:[#allocation2 + $0x10] sm:$0xff] %v1639
        %1672 = vst [vmem:[#allocation2 + $0x18] sm:$0xff] %v1640
        %1673 = vst [vmem:[#allocation2 + $0x20] sm:$0xff] %v1641
        %1674 = vst [vmem:[#allocation2 + $0x28] sm:$0xff] %v1642
        %1675 = vst [vmem:[#allocation2 + $0x30] sm:$0xff] %v1643
        %1676 = vst [vmem:[#allocation2 + $0x38] sm:$0xff] %v1644
        %1677 = vst [vmem:[#allocation2 + $0x40] sm:$0xff] %v1645
        %1678 = vst [vmem:[#allocation2 + $0x48] sm:$0xff] %v1646
        %1679 = vst [vmem:[#allocation2 + $0x50] sm:$0xff] %v1647
        %1680 = vst [vmem:[#allocation2 + $0x58] sm:$0xff] %v1648
        %1681 = vst [vmem:[#allocation2 + $0x60] sm:$0xff] %v1649
        %1682 = vst [vmem:[#allocation2 + $0x68] sm:$0xff] %v1650
        %1683 = vst [vmem:[#allocation2 + $0x70] sm:$0xff] %v1651
        %1684 = vst [vmem:[#allocation2 + $0x78] sm:$0xff] %v1652
        %1685 = vst [vmem:[#allocation2 + $0x80] sm:$0xff] %v1653
        %1686 = vst [vmem:[#allocation2 + $0x88] sm:$0xff] %v1654
        %1687 = vst [vmem:[#allocation2 + $0x90] sm:$0xff] %v1655
        %1688 = vst [vmem:[#allocation2 + $0x98] sm:$0xff] %v1656
        %1689 = vst [vmem:[#allocation2 + $0xa0] sm:$0xff] %v1657
        %1690 = vst [vmem:[#allocation2 + $0xa8] sm:$0xff] %v1658
        %1691 = vst [vmem:[#allocation2 + $0xb0] sm:$0xff] %v1659
        %1692 = vst [vmem:[#allocation2 + $0xb8] sm:$0xff] %v1660
        %1693 = vst [vmem:[#allocation2 + $0xc0] sm:$0xff] %v1661
        %1694 = vst [vmem:[#allocation2 + $0xc8] sm:$0xff] %v1662
        %1695 = vst [vmem:[#allocation2 + $0xd0] sm:$0xff] %v1663
        %1696 = vst [vmem:[#allocation2 + $0xd8] sm:$0xff] %v1664
        %1697 = vst [vmem:[#allocation2 + $0xe0] sm:$0xff] %v1665
        %1698 = vst [vmem:[#allocation2 + $0xe8] sm:$0xff] %v1666
        %1699 = vst [vmem:[#allocation2 + $0xf0] sm:$0xff] %v1667
        %1700 = vst [vmem:[#allocation2 + $0xf8] sm:$0xff] %v1668
        %v1701 = vld [vmem:[%s1330 + $0x1] sm:$0xff]
        %v1702 = vld [vmem:[%s1330 + $0x9] sm:$0xff]
        %v1703 = vld [vmem:[%s1330 + $0x19] sm:$0xff]
        %v1704 = vld [vmem:[%s1330 + $0x21] sm:$0xff]
        %v1705 = vld [vmem:[%s1330 + $0x31] sm:$0xff]
        %v1706 = vld [vmem:[%s1330 + $0x39] sm:$0xff]
        %v1707 = vld [vmem:[%s1330 + $0x49] sm:$0xff]
        %v1708 = vld [vmem:[%s1330 + $0x51] sm:$0xff]
        %v1709 = vld [vmem:[%s1330 + $0x61] sm:$0xff]
        %v1710 = vld [vmem:[%s1330 + $0x69] sm:$0xff]
        %v1711 = vld [vmem:[%s1330 + $0x79] sm:$0xff]
        %v1712 = vld [vmem:[%s1330 + $0x81] sm:$0xff]
        %v1713 = vld [vmem:[%s1330 + $0x91] sm:$0xff]
        %v1714 = vld [vmem:[%s1330 + $0x99] sm:$0xff]
        %v1715 = vld [vmem:[%s1330 + $0xa9] sm:$0xff]
        %v1716 = vld [vmem:[%s1330 + $0xb1] sm:$0xff]
        %v1717 = vld [vmem:[%s1330 + $0xc1] sm:$0xff]
        %v1718 = vld [vmem:[%s1330 + $0xc9] sm:$0xff]
        %v1719 = vld [vmem:[%s1330 + $0xd9] sm:$0xff]
        %v1720 = vld [vmem:[%s1330 + $0xe1] sm:$0xff]
        %v1721 = vld [vmem:[%s1330 + $0xf1] sm:$0xff]
        %v1722 = vld [vmem:[%s1330 + $0xf9] sm:$0xff]
        %v1723 = vld [vmem:[%s1330 + $0x109] sm:$0xff]
        %v1724 = vld [vmem:[%s1330 + $0x111] sm:$0xff]
        %v1725 = vld [vmem:[%s1330 + $0x121] sm:$0xff]
        %v1726 = vld [vmem:[%s1330 + $0x129] sm:$0xff]
        %v1727 = vld [vmem:[%s1330 + $0x139] sm:$0xff]
        %v1728 = vld [vmem:[%s1330 + $0x141] sm:$0xff]
        %v1729 = vld [vmem:[%s1330 + $0x151] sm:$0xff]
        %v1730 = vld [vmem:[%s1330 + $0x159] sm:$0xff]
        %v1731 = vld [vmem:[%s1330 + $0x169] sm:$0xff]
        %v1732 = vld [vmem:[%s1330 + $0x171] sm:$0xff]
        %v1733 = vld [vmem:[#allocation2] sm:$0xff]
        %v1734 = vld [vmem:[#allocation2 + $0x8] sm:$0xff]
        %v1735 = vld [vmem:[#allocation2 + $0x10] sm:$0xff]
        %v1736 = vld [vmem:[#allocation2 + $0x18] sm:$0xff]
        %v1737 = vld [vmem:[#allocation2 + $0x20] sm:$0xff]
        %v1738 = vld [vmem:[#allocation2 + $0x28] sm:$0xff]
        %v1739 = vld [vmem:[#allocation2 + $0x30] sm:$0xff]
        %v1740 = vld [vmem:[#allocation2 + $0x38] sm:$0xff]
        %v1741 = vld [vmem:[#allocation2 + $0x40] sm:$0xff]
        %v1742 = vld [vmem:[#allocation2 + $0x48] sm:$0xff]
        %v1743 = vld [vmem:[#allocation2 + $0x50] sm:$0xff]
        %v1744 = vld [vmem:[#allocation2 + $0x58] sm:$0xff]
        %v1745 = vld [vmem:[#allocation2 + $0x60] sm:$0xff]
        %v1746 = vld [vmem:[#allocation2 + $0x68] sm:$0xff]
        %v1747 = vld [vmem:[#allocation2 + $0x70] sm:$0xff]
        %v1748 = vld [vmem:[#allocation2 + $0x78] sm:$0xff]
        %v1749 = vld [vmem:[#allocation2 + $0x80] sm:$0xff]
        %v1750 = vld [vmem:[#allocation2 + $0x88] sm:$0xff]
        %v1751 = vld [vmem:[#allocation2 + $0x90] sm:$0xff]
        %v1752 = vld [vmem:[#allocation2 + $0x98] sm:$0xff]
        %v1753 = vld [vmem:[#allocation2 + $0xa0] sm:$0xff]
        %v1754 = vld [vmem:[#allocation2 + $0xa8] sm:$0xff]
        %v1755 = vld [vmem:[#allocation2 + $0xb0] sm:$0xff]
        %v1756 = vld [vmem:[#allocation2 + $0xb8] sm:$0xff]
        %v1757 = vld [vmem:[#allocation2 + $0xc0] sm:$0xff]
        %v1758 = vld [vmem:[#allocation2 + $0xc8] sm:$0xff]
        %v1759 = vld [vmem:[#allocation2 + $0xd0] sm:$0xff]
        %v1760 = vld [vmem:[#allocation2 + $0xd8] sm:$0xff]
        %v1761 = vld [vmem:[#allocation2 + $0xe0] sm:$0xff]
        %v1762 = vld [vmem:[#allocation2 + $0xe8] sm:$0xff]
        %v1763 = vld [vmem:[#allocation2 + $0xf0] sm:$0xff]
        %v1764 = vld [vmem:[#allocation2 + $0xf8] sm:$0xff]
        %s1765 = scalar_lea.vmem %s1, 512
        %v1766 = vld [vmem:[%s1765] sm:$0xff]
        %v1767 = vld [vmem:[%s1765 + $0x8] sm:$0xff]
        %v1768 = vld [vmem:[%s1765 + $0x10] sm:$0xff]
        %v1769 = vld [vmem:[%s1765 + $0x18] sm:$0xff]
        %v1770 = vld [vmem:[%s1765 + $0x20] sm:$0xff]
        %v1771 = vld [vmem:[%s1765 + $0x28] sm:$0xff]
        %v1772 = vld [vmem:[%s1765 + $0x30] sm:$0xff]
        %v1773 = vld [vmem:[%s1765 + $0x38] sm:$0xff]
        %v1774 = vld [vmem:[%s1765 + $0x40] sm:$0xff]
        %v1775 = vld [vmem:[%s1765 + $0x48] sm:$0xff]
        %v1776 = vld [vmem:[%s1765 + $0x50] sm:$0xff]
        %v1777 = vld [vmem:[%s1765 + $0x58] sm:$0xff]
        %v1778 = vld [vmem:[%s1765 + $0x60] sm:$0xff]
        %v1779 = vld [vmem:[%s1765 + $0x68] sm:$0xff]
        %v1780 = vld [vmem:[%s1765 + $0x70] sm:$0xff]
        %v1781 = vld [vmem:[%s1765 + $0x78] sm:$0xff]
        %1782 = vmatprep.subr.mxu0 0.0
        %1783 = vmatpush1.msra.mxu0 %v1766
        %1784 = vmatprep.subr.mxu0 0.0
        %1785 = vmatpush1.msra.mxu0 %v1767
        %1786 = vmatprep.subr.mxu0 0.0
        %1787 = vmatpush1.msra.mxu0 %v1768
        %1788 = vmatprep.subr.mxu0 0.0
        %1789 = vmatpush1.msra.mxu0 %v1769
        %1790 = vmatprep.subr.mxu0 0.0
        %1791 = vmatpush1.msra.mxu0 %v1770
        %1792 = vmatprep.subr.mxu0 0.0
        %1793 = vmatpush1.msra.mxu0 %v1771
        %1794 = vmatprep.subr.mxu0 0.0
        %1795 = vmatpush1.msra.mxu0 %v1772
        %1796 = vmatprep.subr.mxu0 0.0
        %1797 = vmatpush1.msra.mxu0 %v1773
        %1798 = vmatprep.subr.mxu0 0.0
        %1799 = vmatpush1.msra.mxu0 %v1774
        %1800 = vmatprep.subr.mxu0 0.0
        %1801 = vmatpush1.msra.mxu0 %v1775
        %1802 = vmatprep.subr.mxu0 0.0
        %1803 = vmatpush1.msra.mxu0 %v1776
        %1804 = vmatprep.subr.mxu0 0.0
        %1805 = vmatpush1.msra.mxu0 %v1777
        %1806 = vmatprep.subr.mxu0 0.0
        %1807 = vmatpush1.msra.mxu0 %v1778
        %1808 = vmatprep.subr.mxu0 0.0
        %1809 = vmatpush1.msra.mxu0 %v1779
        %1810 = vmatprep.subr.mxu0 0.0
        %1811 = vmatpush1.msra.mxu0 %v1780
        %1812 = vmatprep.subr.mxu0 0.0
        %1813 = vmatpush1.msra.mxu0 %v1781
        %1814 = vmatprep.subr.mxu0 0.0
        %1815 = vmatpush1.msra.mxu0 0.0
        %1816 = vmatprep.subr.mxu0 0.0
        %1817 = vmatpush1.msra.mxu0 0.0
        %1818 = vmatprep.subr.mxu0 0.0
        %1819 = vmatpush1.msra.mxu0 0.0
        %1820 = vmatprep.subr.mxu0 0.0
        %1821 = vmatpush1.msra.mxu0 0.0
        %1822 = vmatprep.subr.mxu0 0.0
        %1823 = vmatpush1.msra.mxu0 0.0
        %1824 = vmatprep.subr.mxu0 0.0
        %1825 = vmatpush1.msra.mxu0 0.0
        %1826 = vmatprep.subr.mxu0 0.0
        %1827 = vmatpush1.msra.mxu0 0.0
        %1828 = vmatprep.subr.mxu0 0.0
        %1829 = vmatpush1.msra.mxu0 0.0
        %1830 = vmatprep.subr.mxu0 0.0
        %1831 = vmatpush1.msra.mxu0 0.0
        %1832 = vmatprep.subr.mxu0 0.0
        %1833 = vmatpush1.msra.mxu0 0.0
        %1834 = vmatprep.subr.mxu0 0.0
        %1835 = vmatpush1.msra.mxu0 0.0
        %1836 = vmatprep.subr.mxu0 0.0
        %1837 = vmatpush1.msra.mxu0 0.0
        %1838 = vmatprep.subr.mxu0 0.0
        %1839 = vmatpush1.msra.mxu0 0.0
        %1840 = vmatprep.subr.mxu0 0.0
        %1841 = vmatpush1.msra.mxu0 0.0
        %1842 = vmatprep.subr.mxu0 0.0
        %1843 = vmatpush1.msra.mxu0 0.0
        %1844 = vmatprep.subr.mxu0 0.0
        %1845 = vmatpush1.msra.mxu0 0.0
        %1846 = vmatprep.mubr.f32.mxu0 0.0
        %1847 = vmatmul.mubr.f32.gmra.mrb[0].mxu0 %v1701
        %v1848 = vpop.f32.mrb[0].mxu0
        %v1849 = vadd.f32 0.0, %v1848
        %v1850 = vpop.f32.mrb[0].mxu0
        %1851 = vmatprep.mubr.f32.mxu0 0.0
        %1852 = vmatmul.mubr.f32.gmra.mrb[0].mxu0 %v1702
        %v1853 = vpop.f32.mrb[0].mxu0
        %v1854 = vadd.f32 0.0, %v1853
        %v1855 = vpop.f32.mrb[0].mxu0
        %1856 = vmatprep.mubr.f32.mxu0 0.0
        %1857 = vmatmul.mubr.f32.gmra.mrb[0].mxu0 %v1703
        %v1858 = vpop.f32.mrb[0].mxu0
        %v1859 = vadd.f32 0.0, %v1858
        %v1860 = vpop.f32.mrb[0].mxu0
        %1861 = vmatprep.mubr.f32.mxu0 0.0
        %1862 = vmatmul.mubr.f32.gmra.mrb[0].mxu0 %v1704
        %v1863 = vpop.f32.mrb[0].mxu0
        %v1864 = vadd.f32 0.0, %v1863
        %v1865 = vpop.f32.mrb[0].mxu0
        %1866 = vmatprep.mubr.f32.mxu0 0.0
        %1867 = vmatmul.mubr.f32.gmra.mrb[0].mxu0 %v1705
        %v1868 = vpop.f32.mrb[0].mxu0
        %v1869 = vadd.f32 0.0, %v1868
        %v1870 = vpop.f32.mrb[0].mxu0
        %1871 = vmatprep.mubr.f32.mxu0 0.0
        %1872 = vmatmul.mubr.f32.gmra.mrb[0].mxu0 %v1706
        %v1873 = vpop.f32.mrb[0].mxu0
        %v1874 = vadd.f32 0.0, %v1873
        %v1875 = vpop.f32.mrb[0].mxu0
        %1876 = vmatprep.mubr.f32.mxu0 0.0
        %1877 = vmatmul.mubr.f32.gmra.mrb[0].mxu0 %v1707
        %v1878 = vpop.f32.mrb[0].mxu0
        %v1879 = vadd.f32 0.0, %v1878
        %v1880 = vpop.f32.mrb[0].mxu0
        %1881 = vmatprep.mubr.f32.mxu0 0.0
        %1882 = vmatmul.mubr.f32.gmra.mrb[0].mxu0 %v1708
        %v1883 = vpop.f32.mrb[0].mxu0
        %v1884 = vadd.f32 0.0, %v1883
        %v1885 = vpop.f32.mrb[0].mxu0
        %1886 = vmatprep.mubr.f32.mxu0 0.0
        %1887 = vmatmul.mubr.f32.gmra.mrb[0].mxu0 %v1709
        %v1888 = vpop.f32.mrb[0].mxu0
        %v1889 = vadd.f32 0.0, %v1888
        %v1890 = vpop.f32.mrb[0].mxu0
        %1891 = vmatprep.mubr.f32.mxu0 0.0
        %1892 = vmatmul.mubr.f32.gmra.mrb[0].mxu0 %v1710
        %v1893 = vpop.f32.mrb[0].mxu0
        %v1894 = vadd.f32 0.0, %v1893
        %v1895 = vpop.f32.mrb[0].mxu0
        %1896 = vmatprep.mubr.f32.mxu0 0.0
        %1897 = vmatmul.mubr.f32.gmra.mrb[0].mxu0 %v1711
        %v1898 = vpop.f32.mrb[0].mxu0
        %v1899 = vadd.f32 0.0, %v1898
        %v1900 = vpop.f32.mrb[0].mxu0
        %1901 = vmatprep.mubr.f32.mxu0 0.0
        %1902 = vmatmul.mubr.f32.gmra.mrb[0].mxu0 %v1712
        %v1903 = vpop.f32.mrb[0].mxu0
        %v1904 = vadd.f32 0.0, %v1903
        %v1905 = vpop.f32.mrb[0].mxu0
        %1906 = vmatprep.mubr.f32.mxu0 0.0
        %1907 = vmatmul.mubr.f32.gmra.mrb[0].mxu0 %v1713
        %v1908 = vpop.f32.mrb[0].mxu0
        %v1909 = vadd.f32 0.0, %v1908
        %v1910 = vpop.f32.mrb[0].mxu0
        %1911 = vmatprep.mubr.f32.mxu0 0.0
        %1912 = vmatmul.mubr.f32.gmra.mrb[0].mxu0 %v1714
        %v1913 = vpop.f32.mrb[0].mxu0
        %v1914 = vadd.f32 0.0, %v1913
        %v1915 = vpop.f32.mrb[0].mxu0
        %1916 = vmatprep.mubr.f32.mxu0 0.0
        %1917 = vmatmul.mubr.f32.gmra.mrb[0].mxu0 %v1715
        %v1918 = vpop.f32.mrb[0].mxu0
        %v1919 = vadd.f32 0.0, %v1918
        %v1920 = vpop.f32.mrb[0].mxu0
        %1921 = vmatprep.mubr.f32.mxu0 0.0
        %1922 = vmatmul.mubr.f32.gmra.mrb[0].mxu0 %v1716
        %v1923 = vpop.f32.mrb[0].mxu0
        %v1924 = vadd.f32 0.0, %v1923
        %v1925 = vpop.f32.mrb[0].mxu0
        %1926 = vmatprep.mubr.f32.mxu0 0.0
        %1927 = vmatmul.mubr.f32.gmra.mrb[0].mxu0 %v1717
        %v1928 = vpop.f32.mrb[0].mxu0
        %v1929 = vadd.f32 0.0, %v1928
        %v1930 = vpop.f32.mrb[0].mxu0
        %1931 = vmatprep.mubr.f32.mxu0 0.0
        %1932 = vmatmul.mubr.f32.gmra.mrb[0].mxu0 %v1718
        %v1933 = vpop.f32.mrb[0].mxu0
        %v1934 = vadd.f32 0.0, %v1933
        %v1935 = vpop.f32.mrb[0].mxu0
        %1936 = vmatprep.mubr.f32.mxu0 0.0
        %1937 = vmatmul.mubr.f32.gmra.mrb[0].mxu0 %v1719
        %v1938 = vpop.f32.mrb[0].mxu0
        %v1939 = vadd.f32 0.0, %v1938
        %v1940 = vpop.f32.mrb[0].mxu0
        %1941 = vmatprep.mubr.f32.mxu0 0.0
        %1942 = vmatmul.mubr.f32.gmra.mrb[0].mxu0 %v1720
        %v1943 = vpop.f32.mrb[0].mxu0
        %v1944 = vadd.f32 0.0, %v1943
        %v1945 = vpop.f32.mrb[0].mxu0
        %1946 = vmatprep.mubr.f32.mxu0 0.0
        %1947 = vmatmul.mubr.f32.gmra.mrb[0].mxu0 %v1721
        %v1948 = vpop.f32.mrb[0].mxu0
        %v1949 = vadd.f32 0.0, %v1948
        %v1950 = vpop.f32.mrb[0].mxu0
        %1951 = vmatprep.mubr.f32.mxu0 0.0
        %1952 = vmatmul.mubr.f32.gmra.mrb[0].mxu0 %v1722
        %v1953 = vpop.f32.mrb[0].mxu0
        %v1954 = vadd.f32 0.0, %v1953
        %v1955 = vpop.f32.mrb[0].mxu0
        %1956 = vmatprep.mubr.f32.mxu0 0.0
        %1957 = vmatmul.mubr.f32.gmra.mrb[0].mxu0 %v1723
        %v1958 = vpop.f32.mrb[0].mxu0
        %v1959 = vadd.f32 0.0, %v1958
        %v1960 = vpop.f32.mrb[0].mxu0
        %1961 = vmatprep.mubr.f32.mxu0 0.0
        %1962 = vmatmul.mubr.f32.gmra.mrb[0].mxu0 %v1724
        %v1963 = vpop.f32.mrb[0].mxu0
        %v1964 = vadd.f32 0.0, %v1963
        %v1965 = vpop.f32.mrb[0].mxu0
        %1966 = vmatprep.mubr.f32.mxu0 0.0
        %1967 = vmatmul.mubr.f32.gmra.mrb[0].mxu0 %v1725
        %v1968 = vpop.f32.mrb[0].mxu0
        %v1969 = vadd.f32 0.0, %v1968
        %v1970 = vpop.f32.mrb[0].mxu0
        %1971 = vmatprep.mubr.f32.mxu0 0.0
        %1972 = vmatmul.mubr.f32.gmra.mrb[0].mxu0 %v1726
        %v1973 = vpop.f32.mrb[0].mxu0
        %v1974 = vadd.f32 0.0, %v1973
        %v1975 = vpop.f32.mrb[0].mxu0
        %1976 = vmatprep.mubr.f32.mxu0 0.0
        %1977 = vmatmul.mubr.f32.gmra.mrb[0].mxu0 %v1727
        %v1978 = vpop.f32.mrb[0].mxu0
        %v1979 = vadd.f32 0.0, %v1978
        %v1980 = vpop.f32.mrb[0].mxu0
        %1981 = vmatprep.mubr.f32.mxu0 0.0
        %1982 = vmatmul.mubr.f32.gmra.mrb[0].mxu0 %v1728
        %v1983 = vpop.f32.mrb[0].mxu0
        %v1984 = vadd.f32 0.0, %v1983
        %v1985 = vpop.f32.mrb[0].mxu0
        %1986 = vmatprep.mubr.f32.mxu0 0.0
        %1987 = vmatmul.mubr.f32.gmra.mrb[0].mxu0 %v1729
        %v1988 = vpop.f32.mrb[0].mxu0
        %v1989 = vadd.f32 0.0, %v1988
        %v1990 = vpop.f32.mrb[0].mxu0
        %1991 = vmatprep.mubr.f32.mxu0 0.0
        %1992 = vmatmul.mubr.f32.gmra.mrb[0].mxu0 %v1730
        %v1993 = vpop.f32.mrb[0].mxu0
        %v1994 = vadd.f32 0.0, %v1993
        %v1995 = vpop.f32.mrb[0].mxu0
        %1996 = vmatprep.mubr.f32.mxu0 0.0
        %1997 = vmatmul.mubr.f32.gmra.mrb[0].mxu0 %v1731
        %v1998 = vpop.f32.mrb[0].mxu0
        %v1999 = vadd.f32 0.0, %v1998
        %v2000 = vpop.f32.mrb[0].mxu0
        %2001 = vmatprep.mubr.f32.mxu0 0.0
        %2002 = vmatmul.mubr.f32.gmra.mrb[0].mxu0 %v1732
        %v2003 = vpop.f32.mrb[0].mxu0
        %v2004 = vadd.f32 0.0, %v2003
        %v2005 = vpop.f32.mrb[0].mxu0
        %2006 = vdwg.mxu0
        %v2007 = vadd.f32 %v1733, %v1849
        %v2008 = vadd.f32 %v1734, %v1854
        %v2009 = vadd.f32 %v1735, %v1859
        %v2010 = vadd.f32 %v1736, %v1864
        %v2011 = vadd.f32 %v1737, %v1869
        %v2012 = vadd.f32 %v1738, %v1874
        %v2013 = vadd.f32 %v1739, %v1879
        %v2014 = vadd.f32 %v1740, %v1884
        %v2015 = vadd.f32 %v1741, %v1889
        %v2016 = vadd.f32 %v1742, %v1894
        %v2017 = vadd.f32 %v1743, %v1899
        %v2018 = vadd.f32 %v1744, %v1904
        %v2019 = vadd.f32 %v1745, %v1909
        %v2020 = vadd.f32 %v1746, %v1914
        %v2021 = vadd.f32 %v1747, %v1919
        %v2022 = vadd.f32 %v1748, %v1924
        %v2023 = vadd.f32 %v1749, %v1929
        %v2024 = vadd.f32 %v1750, %v1934
        %v2025 = vadd.f32 %v1751, %v1939
        %v2026 = vadd.f32 %v1752, %v1944
        %v2027 = vadd.f32 %v1753, %v1949
        %v2028 = vadd.f32 %v1754, %v1954
        %v2029 = vadd.f32 %v1755, %v1959
        %v2030 = vadd.f32 %v1756, %v1964
        %v2031 = vadd.f32 %v1757, %v1969
        %v2032 = vadd.f32 %v1758, %v1974
        %v2033 = vadd.f32 %v1759, %v1979
        %v2034 = vadd.f32 %v1760, %v1984
        %v2035 = vadd.f32 %v1761, %v1989
        %v2036 = vadd.f32 %v1762, %v1994
        %v2037 = vadd.f32 %v1763, %v1999
        %v2038 = vadd.f32 %v1764, %v2004
        %2039 = vst [vmem:[#allocation2] sm:$0xff] %v2007
        %2040 = vst [vmem:[#allocation2 + $0x8] sm:$0xff] %v2008
        %2041 = vst [vmem:[#allocation2 + $0x10] sm:$0xff] %v2009
        %2042 = vst [vmem:[#allocation2 + $0x18] sm:$0xff] %v2010
        %2043 = vst [vmem:[#allocation2 + $0x20] sm:$0xff] %v2011
        %2044 = vst [vmem:[#allocation2 + $0x28] sm:$0xff] %v2012
        %2045 = vst [vmem:[#allocation2 + $0x30] sm:$0xff] %v2013
        %2046 = vst [vmem:[#allocation2 + $0x38] sm:$0xff] %v2014
        %2047 = vst [vmem:[#allocation2 + $0x40] sm:$0xff] %v2015
        %2048 = vst [vmem:[#allocation2 + $0x48] sm:$0xff] %v2016
        %2049 = vst [vmem:[#allocation2 + $0x50] sm:$0xff] %v2017
        %2050 = vst [vmem:[#allocation2 + $0x58] sm:$0xff] %v2018
        %2051 = vst [vmem:[#allocation2 + $0x60] sm:$0xff] %v2019
        %2052 = vst [vmem:[#allocation2 + $0x68] sm:$0xff] %v2020
        %2053 = vst [vmem:[#allocation2 + $0x70] sm:$0xff] %v2021
        %2054 = vst [vmem:[#allocation2 + $0x78] sm:$0xff] %v2022
        %2055 = vst [vmem:[#allocation2 + $0x80] sm:$0xff] %v2023
        %2056 = vst [vmem:[#allocation2 + $0x88] sm:$0xff] %v2024
        %2057 = vst [vmem:[#allocation2 + $0x90] sm:$0xff] %v2025
        %2058 = vst [vmem:[#allocation2 + $0x98] sm:$0xff] %v2026
        %2059 = vst [vmem:[#allocation2 + $0xa0] sm:$0xff] %v2027
        %2060 = vst [vmem:[#allocation2 + $0xa8] sm:$0xff] %v2028
        %2061 = vst [vmem:[#allocation2 + $0xb0] sm:$0xff] %v2029
        %2062 = vst [vmem:[#allocation2 + $0xb8] sm:$0xff] %v2030
        %2063 = vst [vmem:[#allocation2 + $0xc0] sm:$0xff] %v2031
        %2064 = vst [vmem:[#allocation2 + $0xc8] sm:$0xff] %v2032
        %2065 = vst [vmem:[#allocation2 + $0xd0] sm:$0xff] %v2033
        %2066 = vst [vmem:[#allocation2 + $0xd8] sm:$0xff] %v2034
        %2067 = vst [vmem:[#allocation2 + $0xe0] sm:$0xff] %v2035
        %2068 = vst [vmem:[#allocation2 + $0xe8] sm:$0xff] %v2036
        %2069 = vst [vmem:[#allocation2 + $0xf0] sm:$0xff] %v2037
        %2070 = vst [vmem:[#allocation2 + $0xf8] sm:$0xff] %v2038
        %v2071 = vld [vmem:[%s1330 + $0x2] sm:$0xff]
        %v2072 = vld [vmem:[%s1330 + $0xa] sm:$0xff]
        %v2073 = vld [vmem:[%s1330 + $0x1a] sm:$0xff]
        %v2074 = vld [vmem:[%s1330 + $0x22] sm:$0xff]
        %v2075 = vld [vmem:[%s1330 + $0x32] sm:$0xff]
        %v2076 = vld [vmem:[%s1330 + $0x3a] sm:$0xff]
        %v2077 = vld [vmem:[%s1330 + $0x4a] sm:$0xff]
        %v2078 = vld [vmem:[%s1330 + $0x52] sm:$0xff]
        %v2079 = vld [vmem:[%s1330 + $0x62] sm:$0xff]
        %v2080 = vld [vmem:[%s1330 + $0x6a] sm:$0xff]
        %v2081 = vld [vmem:[%s1330 + $0x7a] sm:$0xff]
        %v2082 = vld [vmem:[%s1330 + $0x82] sm:$0xff]
        %v2083 = vld [vmem:[%s1330 + $0x92] sm:$0xff]
        %v2084 = vld [vmem:[%s1330 + $0x9a] sm:$0xff]
        %v2085 = vld [vmem:[%s1330 + $0xaa] sm:$0xff]
        %v2086 = vld [vmem:[%s1330 + $0xb2] sm:$0xff]
        %v2087 = vld [vmem:[%s1330 + $0xc2] sm:$0xff]
        %v2088 = vld [vmem:[%s1330 + $0xca] sm:$0xff]
        %v2089 = vld [vmem:[%s1330 + $0xda] sm:$0xff]
        %v2090 = vld [vmem:[%s1330 + $0xe2] sm:$0xff]
        %v2091 = vld [vmem:[%s1330 + $0xf2] sm:$0xff]
        %v2092 = vld [vmem:[%s1330 + $0xfa] sm:$0xff]
        %v2093 = vld [vmem:[%s1330 + $0x10a] sm:$0xff]
        %v2094 = vld [vmem:[%s1330 + $0x112] sm:$0xff]
        %v2095 = vld [vmem:[%s1330 + $0x122] sm:$0xff]
        %v2096 = vld [vmem:[%s1330 + $0x12a] sm:$0xff]
        %v2097 = vld [vmem:[%s1330 + $0x13a] sm:$0xff]
        %v2098 = vld [vmem:[%s1330 + $0x142] sm:$0xff]
        %v2099 = vld [vmem:[%s1330 + $0x152] sm:$0xff]
        %v2100 = vld [vmem:[%s1330 + $0x15a] sm:$0xff]
        %v2101 = vld [vmem:[%s1330 + $0x16a] sm:$0xff]
        %v2102 = vld [vmem:[%s1330 + $0x172] sm:$0xff]
        %v2103 = vld [vmem:[#allocation2] sm:$0xff]
        %v2104 = vld [vmem:[#allocation2 + $0x8] sm:$0xff]
        %v2105 = vld [vmem:[#allocation2 + $0x10] sm:$0xff]
        %v2106 = vld [vmem:[#allocation2 + $0x18] sm:$0xff]
        %v2107 = vld [vmem:[#allocation2 + $0x20] sm:$0xff]
        %v2108 = vld [vmem:[#allocation2 + $0x28] sm:$0xff]
        %v2109 = vld [vmem:[#allocation2 + $0x30] sm:$0xff]
        %v2110 = vld [vmem:[#allocation2 + $0x38] sm:$0xff]
        %v2111 = vld [vmem:[#allocation2 + $0x40] sm:$0xff]
        %v2112 = vld [vmem:[#allocation2 + $0x48] sm:$0xff]
        %v2113 = vld [vmem:[#allocation2 + $0x50] sm:$0xff]
        %v2114 = vld [vmem:[#allocation2 + $0x58] sm:$0xff]
        %v2115 = vld [vmem:[#allocation2 + $0x60] sm:$0xff]
        %v2116 = vld [vmem:[#allocation2 + $0x68] sm:$0xff]
        %v2117 = vld [vmem:[#allocation2 + $0x70] sm:$0xff]
        %v2118 = vld [vmem:[#allocation2 + $0x78] sm:$0xff]
        %v2119 = vld [vmem:[#allocation2 + $0x80] sm:$0xff]
        %v2120 = vld [vmem:[#allocation2 + $0x88] sm:$0xff]
        %v2121 = vld [vmem:[#allocation2 + $0x90] sm:$0xff]
        %v2122 = vld [vmem:[#allocation2 + $0x98] sm:$0xff]
        %v2123 = vld [vmem:[#allocation2 + $0xa0] sm:$0xff]
        %v2124 = vld [vmem:[#allocation2 + $0xa8] sm:$0xff]
        %v2125 = vld [vmem:[#allocation2 + $0xb0] sm:$0xff]
        %v2126 = vld [vmem:[#allocation2 + $0xb8] sm:$0xff]
        %v2127 = vld [vmem:[#allocation2 + $0xc0] sm:$0xff]
        %v2128 = vld [vmem:[#allocation2 + $0xc8] sm:$0xff]
        %v2129 = vld [vmem:[#allocation2 + $0xd0] sm:$0xff]
        %v2130 = vld [vmem:[#allocation2 + $0xd8] sm:$0xff]
        %v2131 = vld [vmem:[#allocation2 + $0xe0] sm:$0xff]
        %v2132 = vld [vmem:[#allocation2 + $0xe8] sm:$0xff]
        %v2133 = vld [vmem:[#allocation2 + $0xf0] sm:$0xff]
        %v2134 = vld [vmem:[#allocation2 + $0xf8] sm:$0xff]
        %s2135 = scalar_lea.vmem %s1, 640
        %v2136 = vld [vmem:[%s2135] sm:$0xff]
        %v2137 = vld [vmem:[%s2135 + $0x8] sm:$0xff]
        %v2138 = vld [vmem:[%s2135 + $0x10] sm:$0xff]
        %v2139 = vld [vmem:[%s2135 + $0x18] sm:$0xff]
        %v2140 = vld [vmem:[%s2135 + $0x20] sm:$0xff]
        %v2141 = vld [vmem:[%s2135 + $0x28] sm:$0xff]
        %v2142 = vld [vmem:[%s2135 + $0x30] sm:$0xff]
        %v2143 = vld [vmem:[%s2135 + $0x38] sm:$0xff]
        %v2144 = vld [vmem:[%s2135 + $0x40] sm:$0xff]
        %v2145 = vld [vmem:[%s2135 + $0x48] sm:$0xff]
        %v2146 = vld [vmem:[%s2135 + $0x50] sm:$0xff]
        %v2147 = vld [vmem:[%s2135 + $0x58] sm:$0xff]
        %v2148 = vld [vmem:[%s2135 + $0x60] sm:$0xff]
        %v2149 = vld [vmem:[%s2135 + $0x68] sm:$0xff]
        %v2150 = vld [vmem:[%s2135 + $0x70] sm:$0xff]
        %v2151 = vld [vmem:[%s2135 + $0x78] sm:$0xff]
        %2152 = vmatprep.subr.mxu0 0.0
        %2153 = vmatpush1.msra.mxu0 %v2136
        %2154 = vmatprep.subr.mxu0 0.0
        %2155 = vmatpush1.msra.mxu0 %v2137
        %2156 = vmatprep.subr.mxu0 0.0
        %2157 = vmatpush1.msra.mxu0 %v2138
        %2158 = vmatprep.subr.mxu0 0.0
        %2159 = vmatpush1.msra.mxu0 %v2139
        %2160 = vmatprep.subr.mxu0 0.0
        %2161 = vmatpush1.msra.mxu0 %v2140
        %2162 = vmatprep.subr.mxu0 0.0
        %2163 = vmatpush1.msra.mxu0 %v2141
        %2164 = vmatprep.subr.mxu0 0.0
        %2165 = vmatpush1.msra.mxu0 %v2142
        %2166 = vmatprep.subr.mxu0 0.0
        %2167 = vmatpush1.msra.mxu0 %v2143
        %2168 = vmatprep.subr.mxu0 0.0
        %2169 = vmatpush1.msra.mxu0 %v2144
        %2170 = vmatprep.subr.mxu0 0.0
        %2171 = vmatpush1.msra.mxu0 %v2145
        %2172 = vmatprep.subr.mxu0 0.0
        %2173 = vmatpush1.msra.mxu0 %v2146
        %2174 = vmatprep.subr.mxu0 0.0
        %2175 = vmatpush1.msra.mxu0 %v2147
        %2176 = vmatprep.subr.mxu0 0.0
        %2177 = vmatpush1.msra.mxu0 %v2148
        %2178 = vmatprep.subr.mxu0 0.0
        %2179 = vmatpush1.msra.mxu0 %v2149
        %2180 = vmatprep.subr.mxu0 0.0
        %2181 = vmatpush1.msra.mxu0 %v2150
        %2182 = vmatprep.subr.mxu0 0.0
        %2183 = vmatpush1.msra.mxu0 %v2151
        %2184 = vmatprep.subr.mxu0 0.0
        %2185 = vmatpush1.msra.mxu0 0.0
        %2186 = vmatprep.subr.mxu0 0.0
        %2187 = vmatpush1.msra.mxu0 0.0
        %2188 = vmatprep.subr.mxu0 0.0
        %2189 = vmatpush1.msra.mxu0 0.0
        %2190 = vmatprep.subr.mxu0 0.0
        %2191 = vmatpush1.msra.mxu0 0.0
        %2192 = vmatprep.subr.mxu0 0.0
        %2193 = vmatpush1.msra.mxu0 0.0
        %2194 = vmatprep.subr.mxu0 0.0
        %2195 = vmatpush1.msra.mxu0 0.0
        %2196 = vmatprep.subr.mxu0 0.0
        %2197 = vmatpush1.msra.mxu0 0.0
        %2198 = vmatprep.subr.mxu0 0.0
        %2199 = vmatpush1.msra.mxu0 0.0
        %2200 = vmatprep.subr.mxu0 0.0
        %2201 = vmatpush1.msra.mxu0 0.0
        %2202 = vmatprep.subr.mxu0 0.0
        %2203 = vmatpush1.msra.mxu0 0.0
        %2204 = vmatprep.subr.mxu0 0.0
        %2205 = vmatpush1.msra.mxu0 0.0
        %2206 = vmatprep.subr.mxu0 0.0
        %2207 = vmatpush1.msra.mxu0 0.0
        %2208 = vmatprep.subr.mxu0 0.0
        %2209 = vmatpush1.msra.mxu0 0.0
        %2210 = vmatprep.subr.mxu0 0.0
        %2211 = vmatpush1.msra.mxu0 0.0
        %2212 = vmatprep.subr.mxu0 0.0
        %2213 = vmatpush1.msra.mxu0 0.0
        %2214 = vmatprep.subr.mxu0 0.0
        %2215 = vmatpush1.msra.mxu0 0.0
        %2216 = vmatprep.mubr.f32.mxu0 0.0
        %2217 = vmatmul.mubr.f32.gmra.mrb[0].mxu0 %v2071
        %v2218 = vpop.f32.mrb[0].mxu0
        %v2219 = vadd.f32 0.0, %v2218
        %v2220 = vpop.f32.mrb[0].mxu0
        %2221 = vmatprep.mubr.f32.mxu0 0.0
        %2222 = vmatmul.mubr.f32.gmra.mrb[0].mxu0 %v2072
        %v2223 = vpop.f32.mrb[0].mxu0
        %v2224 = vadd.f32 0.0, %v2223
        %v2225 = vpop.f32.mrb[0].mxu0
        %2226 = vmatprep.mubr.f32.mxu0 0.0
        %2227 = vmatmul.mubr.f32.gmra.mrb[0].mxu0 %v2073
        %v2228 = vpop.f32.mrb[0].mxu0
        %v2229 = vadd.f32 0.0, %v2228
        %v2230 = vpop.f32.mrb[0].mxu0
        %2231 = vmatprep.mubr.f32.mxu0 0.0
        %2232 = vmatmul.mubr.f32.gmra.mrb[0].mxu0 %v2074
        %v2233 = vpop.f32.mrb[0].mxu0
        %v2234 = vadd.f32 0.0, %v2233
        %v2235 = vpop.f32.mrb[0].mxu0
        %2236 = vmatprep.mubr.f32.mxu0 0.0
        %2237 = vmatmul.mubr.f32.gmra.mrb[0].mxu0 %v2075
        %v2238 = vpop.f32.mrb[0].mxu0
        %v2239 = vadd.f32 0.0, %v2238
        %v2240 = vpop.f32.mrb[0].mxu0
        %2241 = vmatprep.mubr.f32.mxu0 0.0
        %2242 = vmatmul.mubr.f32.gmra.mrb[0].mxu0 %v2076
        %v2243 = vpop.f32.mrb[0].mxu0
        %v2244 = vadd.f32 0.0, %v2243
        %v2245 = vpop.f32.mrb[0].mxu0
        %2246 = vmatprep.mubr.f32.mxu0 0.0
        %2247 = vmatmul.mubr.f32.gmra.mrb[0].mxu0 %v2077
        %v2248 = vpop.f32.mrb[0].mxu0
        %v2249 = vadd.f32 0.0, %v2248
        %v2250 = vpop.f32.mrb[0].mxu0
        %2251 = vmatprep.mubr.f32.mxu0 0.0
        %2252 = vmatmul.mubr.f32.gmra.mrb[0].mxu0 %v2078
        %v2253 = vpop.f32.mrb[0].mxu0
        %v2254 = vadd.f32 0.0, %v2253
        %v2255 = vpop.f32.mrb[0].mxu0
        %2256 = vmatprep.mubr.f32.mxu0 0.0
        %2257 = vmatmul.mubr.f32.gmra.mrb[0].mxu0 %v2079
        %v2258 = vpop.f32.mrb[0].mxu0
        %v2259 = vadd.f32 0.0, %v2258
        %v2260 = vpop.f32.mrb[0].mxu0
        %2261 = vmatprep.mubr.f32.mxu0 0.0
        %2262 = vmatmul.mubr.f32.gmra.mrb[0].mxu0 %v2080
        %v2263 = vpop.f32.mrb[0].mxu0
        %v2264 = vadd.f32 0.0, %v2263
        %v2265 = vpop.f32.mrb[0].mxu0
        %2266 = vmatprep.mubr.f32.mxu0 0.0
        %2267 = vmatmul.mubr.f32.gmra.mrb[0].mxu0 %v2081
        %v2268 = vpop.f32.mrb[0].mxu0
        %v2269 = vadd.f32 0.0, %v2268
        %v2270 = vpop.f32.mrb[0].mxu0
        %2271 = vmatprep.mubr.f32.mxu0 0.0
        %2272 = vmatmul.mubr.f32.gmra.mrb[0].mxu0 %v2082
        %v2273 = vpop.f32.mrb[0].mxu0
        %v2274 = vadd.f32 0.0, %v2273
        %v2275 = vpop.f32.mrb[0].mxu0
        %2276 = vmatprep.mubr.f32.mxu0 0.0
        %2277 = vmatmul.mubr.f32.gmra.mrb[0].mxu0 %v2083
        %v2278 = vpop.f32.mrb[0].mxu0
        %v2279 = vadd.f32 0.0, %v2278
        %v2280 = vpop.f32.mrb[0].mxu0
        %2281 = vmatprep.mubr.f32.mxu0 0.0
        %2282 = vmatmul.mubr.f32.gmra.mrb[0].mxu0 %v2084
        %v2283 = vpop.f32.mrb[0].mxu0
        %v2284 = vadd.f32 0.0, %v2283
        %v2285 = vpop.f32.mrb[0].mxu0
        %2286 = vmatprep.mubr.f32.mxu0 0.0
        %2287 = vmatmul.mubr.f32.gmra.mrb[0].mxu0 %v2085
        %v2288 = vpop.f32.mrb[0].mxu0
        %v2289 = vadd.f32 0.0, %v2288
        %v2290 = vpop.f32.mrb[0].mxu0
        %2291 = vmatprep.mubr.f32.mxu0 0.0
        %2292 = vmatmul.mubr.f32.gmra.mrb[0].mxu0 %v2086
        %v2293 = vpop.f32.mrb[0].mxu0
        %v2294 = vadd.f32 0.0, %v2293
        %v2295 = vpop.f32.mrb[0].mxu0
        %2296 = vmatprep.mubr.f32.mxu0 0.0
        %2297 = vmatmul.mubr.f32.gmra.mrb[0].mxu0 %v2087
        %v2298 = vpop.f32.mrb[0].mxu0
        %v2299 = vadd.f32 0.0, %v2298
        %v2300 = vpop.f32.mrb[0].mxu0
        %2301 = vmatprep.mubr.f32.mxu0 0.0
        %2302 = vmatmul.mubr.f32.gmra.mrb[0].mxu0 %v2088
        %v2303 = vpop.f32.mrb[0].mxu0
        %v2304 = vadd.f32 0.0, %v2303
        %v2305 = vpop.f32.mrb[0].mxu0
        %2306 = vmatprep.mubr.f32.mxu0 0.0
        %2307 = vmatmul.mubr.f32.gmra.mrb[0].mxu0 %v2089
        %v2308 = vpop.f32.mrb[0].mxu0
        %v2309 = vadd.f32 0.0, %v2308
        %v2310 = vpop.f32.mrb[0].mxu0
        %2311 = vmatprep.mubr.f32.mxu0 0.0
        %2312 = vmatmul.mubr.f32.gmra.mrb[0].mxu0 %v2090
        %v2313 = vpop.f32.mrb[0].mxu0
        %v2314 = vadd.f32 0.0, %v2313
        %v2315 = vpop.f32.mrb[0].mxu0
        %2316 = vmatprep.mubr.f32.mxu0 0.0
        %2317 = vmatmul.mubr.f32.gmra.mrb[0].mxu0 %v2091
        %v2318 = vpop.f32.mrb[0].mxu0
        %v2319 = vadd.f32 0.0, %v2318
        %v2320 = vpop.f32.mrb[0].mxu0
        %2321 = vmatprep.mubr.f32.mxu0 0.0
        %2322 = vmatmul.mubr.f32.gmra.mrb[0].mxu0 %v2092
        %v2323 = vpop.f32.mrb[0].mxu0
        %v2324 = vadd.f32 0.0, %v2323
        %v2325 = vpop.f32.mrb[0].mxu0
        %2326 = vmatprep.mubr.f32.mxu0 0.0
        %2327 = vmatmul.mubr.f32.gmra.mrb[0].mxu0 %v2093
        %v2328 = vpop.f32.mrb[0].mxu0
        %v2329 = vadd.f32 0.0, %v2328
        %v2330 = vpop.f32.mrb[0].mxu0
        %2331 = vmatprep.mubr.f32.mxu0 0.0
        %2332 = vmatmul.mubr.f32.gmra.mrb[0].mxu0 %v2094
        %v2333 = vpop.f32.mrb[0].mxu0
        %v2334 = vadd.f32 0.0, %v2333
        %v2335 = vpop.f32.mrb[0].mxu0
        %2336 = vmatprep.mubr.f32.mxu0 0.0
        %2337 = vmatmul.mubr.f32.gmra.mrb[0].mxu0 %v2095
        %v2338 = vpop.f32.mrb[0].mxu0
        %v2339 = vadd.f32 0.0, %v2338
        %v2340 = vpop.f32.mrb[0].mxu0
        %2341 = vmatprep.mubr.f32.mxu0 0.0
        %2342 = vmatmul.mubr.f32.gmra.mrb[0].mxu0 %v2096
        %v2343 = vpop.f32.mrb[0].mxu0
        %v2344 = vadd.f32 0.0, %v2343
        %v2345 = vpop.f32.mrb[0].mxu0
        %2346 = vmatprep.mubr.f32.mxu0 0.0
        %2347 = vmatmul.mubr.f32.gmra.mrb[0].mxu0 %v2097
        %v2348 = vpop.f32.mrb[0].mxu0
        %v2349 = vadd.f32 0.0, %v2348
        %v2350 = vpop.f32.mrb[0].mxu0
        %2351 = vmatprep.mubr.f32.mxu0 0.0
        %2352 = vmatmul.mubr.f32.gmra.mrb[0].mxu0 %v2098
        %v2353 = vpop.f32.mrb[0].mxu0
        %v2354 = vadd.f32 0.0, %v2353
        %v2355 = vpop.f32.mrb[0].mxu0
        %2356 = vmatprep.mubr.f32.mxu0 0.0
        %2357 = vmatmul.mubr.f32.gmra.mrb[0].mxu0 %v2099
        %v2358 = vpop.f32.mrb[0].mxu0
        %v2359 = vadd.f32 0.0, %v2358
        %v2360 = vpop.f32.mrb[0].mxu0
        %2361 = vmatprep.mubr.f32.mxu0 0.0
        %2362 = vmatmul.mubr.f32.gmra.mrb[0].mxu0 %v2100
        %v2363 = vpop.f32.mrb[0].mxu0
        %v2364 = vadd.f32 0.0, %v2363
        %v2365 = vpop.f32.mrb[0].mxu0
        %2366 = vmatprep.mubr.f32.mxu0 0.0
        %2367 = vmatmul.mubr.f32.gmra.mrb[0].mxu0 %v2101
        %v2368 = vpop.f32.mrb[0].mxu0
        %v2369 = vadd.f32 0.0, %v2368
        %v2370 = vpop.f32.mrb[0].mxu0
        %2371 = vmatprep.mubr.f32.mxu0 0.0
        %2372 = vmatmul.mubr.f32.gmra.mrb[0].mxu0 %v2102
        %v2373 = vpop.f32.mrb[0].mxu0
        %v2374 = vadd.f32 0.0, %v2373
        %v2375 = vpop.f32.mrb[0].mxu0
        %2376 = vdwg.mxu0
        %v2377 = vadd.f32 %v2103, %v2219
        %v2378 = vadd.f32 %v2104, %v2224
        %v2379 = vadd.f32 %v2105, %v2229
        %v2380 = vadd.f32 %v2106, %v2234
        %v2381 = vadd.f32 %v2107, %v2239
        %v2382 = vadd.f32 %v2108, %v2244
        %v2383 = vadd.f32 %v2109, %v2249
        %v2384 = vadd.f32 %v2110, %v2254
        %v2385 = vadd.f32 %v2111, %v2259
        %v2386 = vadd.f32 %v2112, %v2264
        %v2387 = vadd.f32 %v2113, %v2269
        %v2388 = vadd.f32 %v2114, %v2274
        %v2389 = vadd.f32 %v2115, %v2279
        %v2390 = vadd.f32 %v2116, %v2284
        %v2391 = vadd.f32 %v2117, %v2289
        %v2392 = vadd.f32 %v2118, %v2294
        %v2393 = vadd.f32 %v2119, %v2299
        %v2394 = vadd.f32 %v2120, %v2304
        %v2395 = vadd.f32 %v2121, %v2309
        %v2396 = vadd.f32 %v2122, %v2314
        %v2397 = vadd.f32 %v2123, %v2319
        %v2398 = vadd.f32 %v2124, %v2324
        %v2399 = vadd.f32 %v2125, %v2329
        %v2400 = vadd.f32 %v2126, %v2334
        %v2401 = vadd.f32 %v2127, %v2339
        %v2402 = vadd.f32 %v2128, %v2344
        %v2403 = vadd.f32 %v2129, %v2349
        %v2404 = vadd.f32 %v2130, %v2354
        %v2405 = vadd.f32 %v2131, %v2359
        %v2406 = vadd.f32 %v2132, %v2364
        %v2407 = vadd.f32 %v2133, %v2369
        %v2408 = vadd.f32 %v2134, %v2374
        %2409 = vst [vmem:[#allocation2] sm:$0xff] %v2377
        %2410 = vst [vmem:[#allocation2 + $0x8] sm:$0xff] %v2378
        %2411 = vst [vmem:[#allocation2 + $0x10] sm:$0xff] %v2379
        %2412 = vst [vmem:[#allocation2 + $0x18] sm:$0xff] %v2380
        %2413 = vst [vmem:[#allocation2 + $0x20] sm:$0xff] %v2381
        %2414 = vst [vmem:[#allocation2 + $0x28] sm:$0xff] %v2382
        %2415 = vst [vmem:[#allocation2 + $0x30] sm:$0xff] %v2383
        %2416 = vst [vmem:[#allocation2 + $0x38] sm:$0xff] %v2384
        %2417 = vst [vmem:[#allocation2 + $0x40] sm:$0xff] %v2385
        %2418 = vst [vmem:[#allocation2 + $0x48] sm:$0xff] %v2386
        %2419 = vst [vmem:[#allocation2 + $0x50] sm:$0xff] %v2387
        %2420 = vst [vmem:[#allocation2 + $0x58] sm:$0xff] %v2388
        %2421 = vst [vmem:[#allocation2 + $0x60] sm:$0xff] %v2389
        %2422 = vst [vmem:[#allocation2 + $0x68] sm:$0xff] %v2390
        %2423 = vst [vmem:[#allocation2 + $0x70] sm:$0xff] %v2391
        %2424 = vst [vmem:[#allocation2 + $0x78] sm:$0xff] %v2392
        %2425 = vst [vmem:[#allocation2 + $0x80] sm:$0xff] %v2393
        %2426 = vst [vmem:[#allocation2 + $0x88] sm:$0xff] %v2394
        %2427 = vst [vmem:[#allocation2 + $0x90] sm:$0xff] %v2395
        %2428 = vst [vmem:[#allocation2 + $0x98] sm:$0xff] %v2396
        %2429 = vst [vmem:[#allocation2 + $0xa0] sm:$0xff] %v2397
        %2430 = vst [vmem:[#allocation2 + $0xa8] sm:$0xff] %v2398
        %2431 = vst [vmem:[#allocation2 + $0xb0] sm:$0xff] %v2399
        %2432 = vst [vmem:[#allocation2 + $0xb8] sm:$0xff] %v2400
        %2433 = vst [vmem:[#allocation2 + $0xc0] sm:$0xff] %v2401
        %2434 = vst [vmem:[#allocation2 + $0xc8] sm:$0xff] %v2402
        %2435 = vst [vmem:[#allocation2 + $0xd0] sm:$0xff] %v2403
        %2436 = vst [vmem:[#allocation2 + $0xd8] sm:$0xff] %v2404
        %2437 = vst [vmem:[#allocation2 + $0xe0] sm:$0xff] %v2405
        %2438 = vst [vmem:[#allocation2 + $0xe8] sm:$0xff] %v2406
        %2439 = vst [vmem:[#allocation2 + $0xf0] sm:$0xff] %v2407
        %2440 = vst [vmem:[#allocation2 + $0xf8] sm:$0xff] %v2408
        %s2441 = sadd.s32 %s184, 2
        %s2442 = smul.u32 %s2441, 24
        %s2443 = scalar_lea.vmem %s182, %s2442
        %v2444 = vld [vmem:[%s2443] sm:$0xff]
        %v2445 = vld [vmem:[%s2443 + $0x8] sm:$0xff]
        %v2446 = vld [vmem:[%s2443 + $0x18] sm:$0xff]
        %v2447 = vld [vmem:[%s2443 + $0x20] sm:$0xff]
        %v2448 = vld [vmem:[%s2443 + $0x30] sm:$0xff]
        %v2449 = vld [vmem:[%s2443 + $0x38] sm:$0xff]
        %v2450 = vld [vmem:[%s2443 + $0x48] sm:$0xff]
        %v2451 = vld [vmem:[%s2443 + $0x50] sm:$0xff]
        %v2452 = vld [vmem:[%s2443 + $0x60] sm:$0xff]
        %v2453 = vld [vmem:[%s2443 + $0x68] sm:$0xff]
        %v2454 = vld [vmem:[%s2443 + $0x78] sm:$0xff]
        %v2455 = vld [vmem:[%s2443 + $0x80] sm:$0xff]
        %v2456 = vld [vmem:[%s2443 + $0x90] sm:$0xff]
        %v2457 = vld [vmem:[%s2443 + $0x98] sm:$0xff]
        %v2458 = vld [vmem:[%s2443 + $0xa8] sm:$0xff]
        %v2459 = vld [vmem:[%s2443 + $0xb0] sm:$0xff]
        %v2460 = vld [vmem:[%s2443 + $0xc0] sm:$0xff]
        %v2461 = vld [vmem:[%s2443 + $0xc8] sm:$0xff]
        %v2462 = vld [vmem:[%s2443 + $0xd8] sm:$0xff]
        %v2463 = vld [vmem:[%s2443 + $0xe0] sm:$0xff]
        %v2464 = vld [vmem:[%s2443 + $0xf0] sm:$0xff]
        %v2465 = vld [vmem:[%s2443 + $0xf8] sm:$0xff]
        %v2466 = vld [vmem:[%s2443 + $0x108] sm:$0xff]
        %v2467 = vld [vmem:[%s2443 + $0x110] sm:$0xff]
        %v2468 = vld [vmem:[%s2443 + $0x120] sm:$0xff]
        %v2469 = vld [vmem:[%s2443 + $0x128] sm:$0xff]
        %v2470 = vld [vmem:[%s2443 + $0x138] sm:$0xff]
        %v2471 = vld [vmem:[%s2443 + $0x140] sm:$0xff]
        %v2472 = vld [vmem:[%s2443 + $0x150] sm:$0xff]
        %v2473 = vld [vmem:[%s2443 + $0x158] sm:$0xff]
        %v2474 = vld [vmem:[%s2443 + $0x168] sm:$0xff]
        %v2475 = vld [vmem:[%s2443 + $0x170] sm:$0xff]
        %v2476 = vld [vmem:[#allocation2] sm:$0xff]
        %v2477 = vld [vmem:[#allocation2 + $0x8] sm:$0xff]
        %v2478 = vld [vmem:[#allocation2 + $0x10] sm:$0xff]
        %v2479 = vld [vmem:[#allocation2 + $0x18] sm:$0xff]
        %v2480 = vld [vmem:[#allocation2 + $0x20] sm:$0xff]
        %v2481 = vld [vmem:[#allocation2 + $0x28] sm:$0xff]
        %v2482 = vld [vmem:[#allocation2 + $0x30] sm:$0xff]
        %v2483 = vld [vmem:[#allocation2 + $0x38] sm:$0xff]
        %v2484 = vld [vmem:[#allocation2 + $0x40] sm:$0xff]
        %v2485 = vld [vmem:[#allocation2 + $0x48] sm:$0xff]
        %v2486 = vld [vmem:[#allocation2 + $0x50] sm:$0xff]
        %v2487 = vld [vmem:[#allocation2 + $0x58] sm:$0xff]
        %v2488 = vld [vmem:[#allocation2 + $0x60] sm:$0xff]
        %v2489 = vld [vmem:[#allocation2 + $0x68] sm:$0xff]
        %v2490 = vld [vmem:[#allocation2 + $0x70] sm:$0xff]
        %v2491 = vld [vmem:[#allocation2 + $0x78] sm:$0xff]
        %v2492 = vld [vmem:[#allocation2 + $0x80] sm:$0xff]
        %v2493 = vld [vmem:[#allocation2 + $0x88] sm:$0xff]
        %v2494 = vld [vmem:[#allocation2 + $0x90] sm:$0xff]
        %v2495 = vld [vmem:[#allocation2 + $0x98] sm:$0xff]
        %v2496 = vld [vmem:[#allocation2 + $0xa0] sm:$0xff]
        %v2497 = vld [vmem:[#allocation2 + $0xa8] sm:$0xff]
        %v2498 = vld [vmem:[#allocation2 + $0xb0] sm:$0xff]
        %v2499 = vld [vmem:[#allocation2 + $0xb8] sm:$0xff]
        %v2500 = vld [vmem:[#allocation2 + $0xc0] sm:$0xff]
        %v2501 = vld [vmem:[#allocation2 + $0xc8] sm:$0xff]
        %v2502 = vld [vmem:[#allocation2 + $0xd0] sm:$0xff]
        %v2503 = vld [vmem:[#allocation2 + $0xd8] sm:$0xff]
        %v2504 = vld [vmem:[#allocation2 + $0xe0] sm:$0xff]
        %v2505 = vld [vmem:[#allocation2 + $0xe8] sm:$0xff]
        %v2506 = vld [vmem:[#allocation2 + $0xf0] sm:$0xff]
        %v2507 = vld [vmem:[#allocation2 + $0xf8] sm:$0xff]
        %s2508 = scalar_lea.vmem %s1, 768
        %v2509 = vld [vmem:[%s2508] sm:$0xff]
        %v2510 = vld [vmem:[%s2508 + $0x8] sm:$0xff]
        %v2511 = vld [vmem:[%s2508 + $0x10] sm:$0xff]
        %v2512 = vld [vmem:[%s2508 + $0x18] sm:$0xff]
        %v2513 = vld [vmem:[%s2508 + $0x20] sm:$0xff]
        %v2514 = vld [vmem:[%s2508 + $0x28] sm:$0xff]
        %v2515 = vld [vmem:[%s2508 + $0x30] sm:$0xff]
        %v2516 = vld [vmem:[%s2508 + $0x38] sm:$0xff]
        %v2517 = vld [vmem:[%s2508 + $0x40] sm:$0xff]
        %v2518 = vld [vmem:[%s2508 + $0x48] sm:$0xff]
        %v2519 = vld [vmem:[%s2508 + $0x50] sm:$0xff]
        %v2520 = vld [vmem:[%s2508 + $0x58] sm:$0xff]
        %v2521 = vld [vmem:[%s2508 + $0x60] sm:$0xff]
        %v2522 = vld [vmem:[%s2508 + $0x68] sm:$0xff]
        %v2523 = vld [vmem:[%s2508 + $0x70] sm:$0xff]
        %v2524 = vld [vmem:[%s2508 + $0x78] sm:$0xff]
        %2525 = vmatprep.subr.mxu0 0.0
        %2526 = vmatpush1.msra.mxu0 %v2509
        %2527 = vmatprep.subr.mxu0 0.0
        %2528 = vmatpush1.msra.mxu0 %v2510
        %2529 = vmatprep.subr.mxu0 0.0
        %2530 = vmatpush1.msra.mxu0 %v2511
        %2531 = vmatprep.subr.mxu0 0.0
        %2532 = vmatpush1.msra.mxu0 %v2512
        %2533 = vmatprep.subr.mxu0 0.0
        %2534 = vmatpush1.msra.mxu0 %v2513
        %2535 = vmatprep.subr.mxu0 0.0
        %2536 = vmatpush1.msra.mxu0 %v2514
        %2537 = vmatprep.subr.mxu0 0.0
        %2538 = vmatpush1.msra.mxu0 %v2515
        %2539 = vmatprep.subr.mxu0 0.0
        %2540 = vmatpush1.msra.mxu0 %v2516
        %2541 = vmatprep.subr.mxu0 0.0
        %2542 = vmatpush1.msra.mxu0 %v2517
        %2543 = vmatprep.subr.mxu0 0.0
        %2544 = vmatpush1.msra.mxu0 %v2518
        %2545 = vmatprep.subr.mxu0 0.0
        %2546 = vmatpush1.msra.mxu0 %v2519
        %2547 = vmatprep.subr.mxu0 0.0
        %2548 = vmatpush1.msra.mxu0 %v2520
        %2549 = vmatprep.subr.mxu0 0.0
        %2550 = vmatpush1.msra.mxu0 %v2521
        %2551 = vmatprep.subr.mxu0 0.0
        %2552 = vmatpush1.msra.mxu0 %v2522
        %2553 = vmatprep.subr.mxu0 0.0
        %2554 = vmatpush1.msra.mxu0 %v2523
        %2555 = vmatprep.subr.mxu0 0.0
        %2556 = vmatpush1.msra.mxu0 %v2524
        %2557 = vmatprep.subr.mxu0 0.0
        %2558 = vmatpush1.msra.mxu0 0.0
        %2559 = vmatprep.subr.mxu0 0.0
        %2560 = vmatpush1.msra.mxu0 0.0
        %2561 = vmatprep.subr.mxu0 0.0
        %2562 = vmatpush1.msra.mxu0 0.0
        %2563 = vmatprep.subr.mxu0 0.0
        %2564 = vmatpush1.msra.mxu0 0.0
        %2565 = vmatprep.subr.mxu0 0.0
        %2566 = vmatpush1.msra.mxu0 0.0
        %2567 = vmatprep.subr.mxu0 0.0
        %2568 = vmatpush1.msra.mxu0 0.0
        %2569 = vmatprep.subr.mxu0 0.0
        %2570 = vmatpush1.msra.mxu0 0.0
        %2571 = vmatprep.subr.mxu0 0.0
        %2572 = vmatpush1.msra.mxu0 0.0
        %2573 = vmatprep.subr.mxu0 0.0
        %2574 = vmatpush1.msra.mxu0 0.0
        %2575 = vmatprep.subr.mxu0 0.0
        %2576 = vmatpush1.msra.mxu0 0.0
        %2577 = vmatprep.subr.mxu0 0.0
        %2578 = vmatpush1.msra.mxu0 0.0
        %2579 = vmatprep.subr.mxu0 0.0
        %2580 = vmatpush1.msra.mxu0 0.0
        %2581 = vmatprep.subr.mxu0 0.0
        %2582 = vmatpush1.msra.mxu0 0.0
        %2583 = vmatprep.subr.mxu0 0.0
        %2584 = vmatpush1.msra.mxu0 0.0
        %2585 = vmatprep.subr.mxu0 0.0
        %2586 = vmatpush1.msra.mxu0 0.0
        %2587 = vmatprep.subr.mxu0 0.0
        %2588 = vmatpush1.msra.mxu0 0.0
        %2589 = vmatprep.mubr.f32.mxu0 0.0
        %2590 = vmatmul.mubr.f32.gmra.mrb[0].mxu0 %v2444
        %v2591 = vpop.f32.mrb[0].mxu0
        %v2592 = vadd.f32 0.0, %v2591
        %v2593 = vpop.f32.mrb[0].mxu0
        %2594 = vmatprep.mubr.f32.mxu0 0.0
        %2595 = vmatmul.mubr.f32.gmra.mrb[0].mxu0 %v2445
        %v2596 = vpop.f32.mrb[0].mxu0
        %v2597 = vadd.f32 0.0, %v2596
        %v2598 = vpop.f32.mrb[0].mxu0
        %2599 = vmatprep.mubr.f32.mxu0 0.0
        %2600 = vmatmul.mubr.f32.gmra.mrb[0].mxu0 %v2446
        %v2601 = vpop.f32.mrb[0].mxu0
        %v2602 = vadd.f32 0.0, %v2601
        %v2603 = vpop.f32.mrb[0].mxu0
        %2604 = vmatprep.mubr.f32.mxu0 0.0
        %2605 = vmatmul.mubr.f32.gmra.mrb[0].mxu0 %v2447
        %v2606 = vpop.f32.mrb[0].mxu0
        %v2607 = vadd.f32 0.0, %v2606
        %v2608 = vpop.f32.mrb[0].mxu0
        %2609 = vmatprep.mubr.f32.mxu0 0.0
        %2610 = vmatmul.mubr.f32.gmra.mrb[0].mxu0 %v2448
        %v2611 = vpop.f32.mrb[0].mxu0
        %v2612 = vadd.f32 0.0, %v2611
        %v2613 = vpop.f32.mrb[0].mxu0
        %2614 = vmatprep.mubr.f32.mxu0 0.0
        %2615 = vmatmul.mubr.f32.gmra.mrb[0].mxu0 %v2449
        %v2616 = vpop.f32.mrb[0].mxu0
        %v2617 = vadd.f32 0.0, %v2616
        %v2618 = vpop.f32.mrb[0].mxu0
        %2619 = vmatprep.mubr.f32.mxu0 0.0
        %2620 = vmatmul.mubr.f32.gmra.mrb[0].mxu0 %v2450
        %v2621 = vpop.f32.mrb[0].mxu0
        %v2622 = vadd.f32 0.0, %v2621
        %v2623 = vpop.f32.mrb[0].mxu0
        %2624 = vmatprep.mubr.f32.mxu0 0.0
        %2625 = vmatmul.mubr.f32.gmra.mrb[0].mxu0 %v2451
        %v2626 = vpop.f32.mrb[0].mxu0
        %v2627 = vadd.f32 0.0, %v2626
        %v2628 = vpop.f32.mrb[0].mxu0
        %2629 = vmatprep.mubr.f32.mxu0 0.0
        %2630 = vmatmul.mubr.f32.gmra.mrb[0].mxu0 %v2452
        %v2631 = vpop.f32.mrb[0].mxu0
        %v2632 = vadd.f32 0.0, %v2631
        %v2633 = vpop.f32.mrb[0].mxu0
        %2634 = vmatprep.mubr.f32.mxu0 0.0
        %2635 = vmatmul.mubr.f32.gmra.mrb[0].mxu0 %v2453
        %v2636 = vpop.f32.mrb[0].mxu0
        %v2637 = vadd.f32 0.0, %v2636
        %v2638 = vpop.f32.mrb[0].mxu0
        %2639 = vmatprep.mubr.f32.mxu0 0.0
        %2640 = vmatmul.mubr.f32.gmra.mrb[0].mxu0 %v2454
        %v2641 = vpop.f32.mrb[0].mxu0
        %v2642 = vadd.f32 0.0, %v2641
        %v2643 = vpop.f32.mrb[0].mxu0
        %2644 = vmatprep.mubr.f32.mxu0 0.0
        %2645 = vmatmul.mubr.f32.gmra.mrb[0].mxu0 %v2455
        %v2646 = vpop.f32.mrb[0].mxu0
        %v2647 = vadd.f32 0.0, %v2646
        %v2648 = vpop.f32.mrb[0].mxu0
        %2649 = vmatprep.mubr.f32.mxu0 0.0
        %2650 = vmatmul.mubr.f32.gmra.mrb[0].mxu0 %v2456
        %v2651 = vpop.f32.mrb[0].mxu0
        %v2652 = vadd.f32 0.0, %v2651
        %v2653 = vpop.f32.mrb[0].mxu0
        %2654 = vmatprep.mubr.f32.mxu0 0.0
        %2655 = vmatmul.mubr.f32.gmra.mrb[0].mxu0 %v2457
        %v2656 = vpop.f32.mrb[0].mxu0
        %v2657 = vadd.f32 0.0, %v2656
        %v2658 = vpop.f32.mrb[0].mxu0
        %2659 = vmatprep.mubr.f32.mxu0 0.0
        %2660 = vmatmul.mubr.f32.gmra.mrb[0].mxu0 %v2458
        %v2661 = vpop.f32.mrb[0].mxu0
        %v2662 = vadd.f32 0.0, %v2661
        %v2663 = vpop.f32.mrb[0].mxu0
        %2664 = vmatprep.mubr.f32.mxu0 0.0
        %2665 = vmatmul.mubr.f32.gmra.mrb[0].mxu0 %v2459
        %v2666 = vpop.f32.mrb[0].mxu0
        %v2667 = vadd.f32 0.0, %v2666
        %v2668 = vpop.f32.mrb[0].mxu0
        %2669 = vmatprep.mubr.f32.mxu0 0.0
        %2670 = vmatmul.mubr.f32.gmra.mrb[0].mxu0 %v2460
        %v2671 = vpop.f32.mrb[0].mxu0
        %v2672 = vadd.f32 0.0, %v2671
        %v2673 = vpop.f32.mrb[0].mxu0
        %2674 = vmatprep.mubr.f32.mxu0 0.0
        %2675 = vmatmul.mubr.f32.gmra.mrb[0].mxu0 %v2461
        %v2676 = vpop.f32.mrb[0].mxu0
        %v2677 = vadd.f32 0.0, %v2676
        %v2678 = vpop.f32.mrb[0].mxu0
        %2679 = vmatprep.mubr.f32.mxu0 0.0
        %2680 = vmatmul.mubr.f32.gmra.mrb[0].mxu0 %v2462
        %v2681 = vpop.f32.mrb[0].mxu0
        %v2682 = vadd.f32 0.0, %v2681
        %v2683 = vpop.f32.mrb[0].mxu0
        %2684 = vmatprep.mubr.f32.mxu0 0.0
        %2685 = vmatmul.mubr.f32.gmra.mrb[0].mxu0 %v2463
        %v2686 = vpop.f32.mrb[0].mxu0
        %v2687 = vadd.f32 0.0, %v2686
        %v2688 = vpop.f32.mrb[0].mxu0
        %2689 = vmatprep.mubr.f32.mxu0 0.0
        %2690 = vmatmul.mubr.f32.gmra.mrb[0].mxu0 %v2464
        %v2691 = vpop.f32.mrb[0].mxu0
        %v2692 = vadd.f32 0.0, %v2691
        %v2693 = vpop.f32.mrb[0].mxu0
        %2694 = vmatprep.mubr.f32.mxu0 0.0
        %2695 = vmatmul.mubr.f32.gmra.mrb[0].mxu0 %v2465
        %v2696 = vpop.f32.mrb[0].mxu0
        %v2697 = vadd.f32 0.0, %v2696
        %v2698 = vpop.f32.mrb[0].mxu0
        %2699 = vmatprep.mubr.f32.mxu0 0.0
        %2700 = vmatmul.mubr.f32.gmra.mrb[0].mxu0 %v2466
        %v2701 = vpop.f32.mrb[0].mxu0
        %v2702 = vadd.f32 0.0, %v2701
        %v2703 = vpop.f32.mrb[0].mxu0
        %2704 = vmatprep.mubr.f32.mxu0 0.0
        %2705 = vmatmul.mubr.f32.gmra.mrb[0].mxu0 %v2467
        %v2706 = vpop.f32.mrb[0].mxu0
        %v2707 = vadd.f32 0.0, %v2706
        %v2708 = vpop.f32.mrb[0].mxu0
        %2709 = vmatprep.mubr.f32.mxu0 0.0
        %2710 = vmatmul.mubr.f32.gmra.mrb[0].mxu0 %v2468
        %v2711 = vpop.f32.mrb[0].mxu0
        %v2712 = vadd.f32 0.0, %v2711
        %v2713 = vpop.f32.mrb[0].mxu0
        %2714 = vmatprep.mubr.f32.mxu0 0.0
        %2715 = vmatmul.mubr.f32.gmra.mrb[0].mxu0 %v2469
        %v2716 = vpop.f32.mrb[0].mxu0
        %v2717 = vadd.f32 0.0, %v2716
        %v2718 = vpop.f32.mrb[0].mxu0
        %2719 = vmatprep.mubr.f32.mxu0 0.0
        %2720 = vmatmul.mubr.f32.gmra.mrb[0].mxu0 %v2470
        %v2721 = vpop.f32.mrb[0].mxu0
        %v2722 = vadd.f32 0.0, %v2721
        %v2723 = vpop.f32.mrb[0].mxu0
        %2724 = vmatprep.mubr.f32.mxu0 0.0
        %2725 = vmatmul.mubr.f32.gmra.mrb[0].mxu0 %v2471
        %v2726 = vpop.f32.mrb[0].mxu0
        %v2727 = vadd.f32 0.0, %v2726
        %v2728 = vpop.f32.mrb[0].mxu0
        %2729 = vmatprep.mubr.f32.mxu0 0.0
        %2730 = vmatmul.mubr.f32.gmra.mrb[0].mxu0 %v2472
        %v2731 = vpop.f32.mrb[0].mxu0
        %v2732 = vadd.f32 0.0, %v2731
        %v2733 = vpop.f32.mrb[0].mxu0
        %2734 = vmatprep.mubr.f32.mxu0 0.0
        %2735 = vmatmul.mubr.f32.gmra.mrb[0].mxu0 %v2473
        %v2736 = vpop.f32.mrb[0].mxu0
        %v2737 = vadd.f32 0.0, %v2736
        %v2738 = vpop.f32.mrb[0].mxu0
        %2739 = vmatprep.mubr.f32.mxu0 0.0
        %2740 = vmatmul.mubr.f32.gmra.mrb[0].mxu0 %v2474
        %v2741 = vpop.f32.mrb[0].mxu0
        %v2742 = vadd.f32 0.0, %v2741
        %v2743 = vpop.f32.mrb[0].mxu0
        %2744 = vmatprep.mubr.f32.mxu0 0.0
        %2745 = vmatmul.mubr.f32.gmra.mrb[0].mxu0 %v2475
        %v2746 = vpop.f32.mrb[0].mxu0
        %v2747 = vadd.f32 0.0, %v2746
        %v2748 = vpop.f32.mrb[0].mxu0
        %2749 = vdwg.mxu0
        %v2750 = vadd.f32 %v2476, %v2592
        %v2751 = vadd.f32 %v2477, %v2597
        %v2752 = vadd.f32 %v2478, %v2602
        %v2753 = vadd.f32 %v2479, %v2607
        %v2754 = vadd.f32 %v2480, %v2612
        %v2755 = vadd.f32 %v2481, %v2617
        %v2756 = vadd.f32 %v2482, %v2622
        %v2757 = vadd.f32 %v2483, %v2627
        %v2758 = vadd.f32 %v2484, %v2632
        %v2759 = vadd.f32 %v2485, %v2637
        %v2760 = vadd.f32 %v2486, %v2642
        %v2761 = vadd.f32 %v2487, %v2647
        %v2762 = vadd.f32 %v2488, %v2652
        %v2763 = vadd.f32 %v2489, %v2657
        %v2764 = vadd.f32 %v2490, %v2662
        %v2765 = vadd.f32 %v2491, %v2667
        %v2766 = vadd.f32 %v2492, %v2672
        %v2767 = vadd.f32 %v2493, %v2677
        %v2768 = vadd.f32 %v2494, %v2682
        %v2769 = vadd.f32 %v2495, %v2687
        %v2770 = vadd.f32 %v2496, %v2692
        %v2771 = vadd.f32 %v2497, %v2697
        %v2772 = vadd.f32 %v2498, %v2702
        %v2773 = vadd.f32 %v2499, %v2707
        %v2774 = vadd.f32 %v2500, %v2712
        %v2775 = vadd.f32 %v2501, %v2717
        %v2776 = vadd.f32 %v2502, %v2722
        %v2777 = vadd.f32 %v2503, %v2727
        %v2778 = vadd.f32 %v2504, %v2732
        %v2779 = vadd.f32 %v2505, %v2737
        %v2780 = vadd.f32 %v2506, %v2742
        %v2781 = vadd.f32 %v2507, %v2747
        %2782 = vst [vmem:[#allocation2] sm:$0xff] %v2750
        %2783 = vst [vmem:[#allocation2 + $0x8] sm:$0xff] %v2751
        %2784 = vst [vmem:[#allocation2 + $0x10] sm:$0xff] %v2752
        %2785 = vst [vmem:[#allocation2 + $0x18] sm:$0xff] %v2753
        %2786 = vst [vmem:[#allocation2 + $0x20] sm:$0xff] %v2754
        %2787 = vst [vmem:[#allocation2 + $0x28] sm:$0xff] %v2755
        %2788 = vst [vmem:[#allocation2 + $0x30] sm:$0xff] %v2756
        %2789 = vst [vmem:[#allocation2 + $0x38] sm:$0xff] %v2757
        %2790 = vst [vmem:[#allocation2 + $0x40] sm:$0xff] %v2758
        %2791 = vst [vmem:[#allocation2 + $0x48] sm:$0xff] %v2759
        %2792 = vst [vmem:[#allocation2 + $0x50] sm:$0xff] %v2760
        %2793 = vst [vmem:[#allocation2 + $0x58] sm:$0xff] %v2761
        %2794 = vst [vmem:[#allocation2 + $0x60] sm:$0xff] %v2762
        %2795 = vst [vmem:[#allocation2 + $0x68] sm:$0xff] %v2763
        %2796 = vst [vmem:[#allocation2 + $0x70] sm:$0xff] %v2764
        %2797 = vst [vmem:[#allocation2 + $0x78] sm:$0xff] %v2765
        %2798 = vst [vmem:[#allocation2 + $0x80] sm:$0xff] %v2766
        %2799 = vst [vmem:[#allocation2 + $0x88] sm:$0xff] %v2767
        %2800 = vst [vmem:[#allocation2 + $0x90] sm:$0xff] %v2768
        %2801 = vst [vmem:[#allocation2 + $0x98] sm:$0xff] %v2769
        %2802 = vst [vmem:[#allocation2 + $0xa0] sm:$0xff] %v2770
        %2803 = vst [vmem:[#allocation2 + $0xa8] sm:$0xff] %v2771
        %2804 = vst [vmem:[#allocation2 + $0xb0] sm:$0xff] %v2772
        %2805 = vst [vmem:[#allocation2 + $0xb8] sm:$0xff] %v2773
        %2806 = vst [vmem:[#allocation2 + $0xc0] sm:$0xff] %v2774
        %2807 = vst [vmem:[#allocation2 + $0xc8] sm:$0xff] %v2775
        %2808 = vst [vmem:[#allocation2 + $0xd0] sm:$0xff] %v2776
        %2809 = vst [vmem:[#allocation2 + $0xd8] sm:$0xff] %v2777
        %2810 = vst [vmem:[#allocation2 + $0xe0] sm:$0xff] %v2778
        %2811 = vst [vmem:[#allocation2 + $0xe8] sm:$0xff] %v2779
        %2812 = vst [vmem:[#allocation2 + $0xf0] sm:$0xff] %v2780
        %2813 = vst [vmem:[#allocation2 + $0xf8] sm:$0xff] %v2781
        %v2814 = vld [vmem:[%s2443 + $0x1] sm:$0xff]
        %v2815 = vld [vmem:[%s2443 + $0x9] sm:$0xff]
        %v2816 = vld [vmem:[%s2443 + $0x19] sm:$0xff]
        %v2817 = vld [vmem:[%s2443 + $0x21] sm:$0xff]
        %v2818 = vld [vmem:[%s2443 + $0x31] sm:$0xff]
        %v2819 = vld [vmem:[%s2443 + $0x39] sm:$0xff]
        %v2820 = vld [vmem:[%s2443 + $0x49] sm:$0xff]
        %v2821 = vld [vmem:[%s2443 + $0x51] sm:$0xff]
        %v2822 = vld [vmem:[%s2443 + $0x61] sm:$0xff]
        %v2823 = vld [vmem:[%s2443 + $0x69] sm:$0xff]
        %v2824 = vld [vmem:[%s2443 + $0x79] sm:$0xff]
        %v2825 = vld [vmem:[%s2443 + $0x81] sm:$0xff]
        %v2826 = vld [vmem:[%s2443 + $0x91] sm:$0xff]
        %v2827 = vld [vmem:[%s2443 + $0x99] sm:$0xff]
        %v2828 = vld [vmem:[%s2443 + $0xa9] sm:$0xff]
        %v2829 = vld [vmem:[%s2443 + $0xb1] sm:$0xff]
        %v2830 = vld [vmem:[%s2443 + $0xc1] sm:$0xff]
        %v2831 = vld [vmem:[%s2443 + $0xc9] sm:$0xff]
        %v2832 = vld [vmem:[%s2443 + $0xd9] sm:$0xff]
        %v2833 = vld [vmem:[%s2443 + $0xe1] sm:$0xff]
        %v2834 = vld [vmem:[%s2443 + $0xf1] sm:$0xff]
        %v2835 = vld [vmem:[%s2443 + $0xf9] sm:$0xff]
        %v2836 = vld [vmem:[%s2443 + $0x109] sm:$0xff]
        %v2837 = vld [vmem:[%s2443 + $0x111] sm:$0xff]
        %v2838 = vld [vmem:[%s2443 + $0x121] sm:$0xff]
        %v2839 = vld [vmem:[%s2443 + $0x129] sm:$0xff]
        %v2840 = vld [vmem:[%s2443 + $0x139] sm:$0xff]
        %v2841 = vld [vmem:[%s2443 + $0x141] sm:$0xff]
        %v2842 = vld [vmem:[%s2443 + $0x151] sm:$0xff]
        %v2843 = vld [vmem:[%s2443 + $0x159] sm:$0xff]
        %v2844 = vld [vmem:[%s2443 + $0x169] sm:$0xff]
        %v2845 = vld [vmem:[%s2443 + $0x171] sm:$0xff]
        %v2846 = vld [vmem:[#allocation2] sm:$0xff]
        %v2847 = vld [vmem:[#allocation2 + $0x8] sm:$0xff]
        %v2848 = vld [vmem:[#allocation2 + $0x10] sm:$0xff]
        %v2849 = vld [vmem:[#allocation2 + $0x18] sm:$0xff]
        %v2850 = vld [vmem:[#allocation2 + $0x20] sm:$0xff]
        %v2851 = vld [vmem:[#allocation2 + $0x28] sm:$0xff]
        %v2852 = vld [vmem:[#allocation2 + $0x30] sm:$0xff]
        %v2853 = vld [vmem:[#allocation2 + $0x38] sm:$0xff]
        %v2854 = vld [vmem:[#allocation2 + $0x40] sm:$0xff]
        %v2855 = vld [vmem:[#allocation2 + $0x48] sm:$0xff]
        %v2856 = vld [vmem:[#allocation2 + $0x50] sm:$0xff]
        %v2857 = vld [vmem:[#allocation2 + $0x58] sm:$0xff]
        %v2858 = vld [vmem:[#allocation2 + $0x60] sm:$0xff]
        %v2859 = vld [vmem:[#allocation2 + $0x68] sm:$0xff]
        %v2860 = vld [vmem:[#allocation2 + $0x70] sm:$0xff]
        %v2861 = vld [vmem:[#allocation2 + $0x78] sm:$0xff]
        %v2862 = vld [vmem:[#allocation2 + $0x80] sm:$0xff]
        %v2863 = vld [vmem:[#allocation2 + $0x88] sm:$0xff]
        %v2864 = vld [vmem:[#allocation2 + $0x90] sm:$0xff]
        %v2865 = vld [vmem:[#allocation2 + $0x98] sm:$0xff]
        %v2866 = vld [vmem:[#allocation2 + $0xa0] sm:$0xff]
        %v2867 = vld [vmem:[#allocation2 + $0xa8] sm:$0xff]
        %v2868 = vld [vmem:[#allocation2 + $0xb0] sm:$0xff]
        %v2869 = vld [vmem:[#allocation2 + $0xb8] sm:$0xff]
        %v2870 = vld [vmem:[#allocation2 + $0xc0] sm:$0xff]
        %v2871 = vld [vmem:[#allocation2 + $0xc8] sm:$0xff]
        %v2872 = vld [vmem:[#allocation2 + $0xd0] sm:$0xff]
        %v2873 = vld [vmem:[#allocation2 + $0xd8] sm:$0xff]
        %v2874 = vld [vmem:[#allocation2 + $0xe0] sm:$0xff]
        %v2875 = vld [vmem:[#allocation2 + $0xe8] sm:$0xff]
        %v2876 = vld [vmem:[#allocation2 + $0xf0] sm:$0xff]
        %v2877 = vld [vmem:[#allocation2 + $0xf8] sm:$0xff]
        %s2878 = scalar_lea.vmem %s1, 896
        %v2879 = vld [vmem:[%s2878] sm:$0xff]
        %v2880 = vld [vmem:[%s2878 + $0x8] sm:$0xff]
        %v2881 = vld [vmem:[%s2878 + $0x10] sm:$0xff]
        %v2882 = vld [vmem:[%s2878 + $0x18] sm:$0xff]
        %v2883 = vld [vmem:[%s2878 + $0x20] sm:$0xff]
        %v2884 = vld [vmem:[%s2878 + $0x28] sm:$0xff]
        %v2885 = vld [vmem:[%s2878 + $0x30] sm:$0xff]
        %v2886 = vld [vmem:[%s2878 + $0x38] sm:$0xff]
        %v2887 = vld [vmem:[%s2878 + $0x40] sm:$0xff]
        %v2888 = vld [vmem:[%s2878 + $0x48] sm:$0xff]
        %v2889 = vld [vmem:[%s2878 + $0x50] sm:$0xff]
        %v2890 = vld [vmem:[%s2878 + $0x58] sm:$0xff]
        %v2891 = vld [vmem:[%s2878 + $0x60] sm:$0xff]
        %v2892 = vld [vmem:[%s2878 + $0x68] sm:$0xff]
        %v2893 = vld [vmem:[%s2878 + $0x70] sm:$0xff]
        %v2894 = vld [vmem:[%s2878 + $0x78] sm:$0xff]
        %2895 = vmatprep.subr.mxu0 0.0
        %2896 = vmatpush1.msra.mxu0 %v2879
        %2897 = vmatprep.subr.mxu0 0.0
        %2898 = vmatpush1.msra.mxu0 %v2880
        %2899 = vmatprep.subr.mxu0 0.0
        %2900 = vmatpush1.msra.mxu0 %v2881
        %2901 = vmatprep.subr.mxu0 0.0
        %2902 = vmatpush1.msra.mxu0 %v2882
        %2903 = vmatprep.subr.mxu0 0.0
        %2904 = vmatpush1.msra.mxu0 %v2883
        %2905 = vmatprep.subr.mxu0 0.0
        %2906 = vmatpush1.msra.mxu0 %v2884
        %2907 = vmatprep.subr.mxu0 0.0
        %2908 = vmatpush1.msra.mxu0 %v2885
        %2909 = vmatprep.subr.mxu0 0.0
        %2910 = vmatpush1.msra.mxu0 %v2886
        %2911 = vmatprep.subr.mxu0 0.0
        %2912 = vmatpush1.msra.mxu0 %v2887
        %2913 = vmatprep.subr.mxu0 0.0
        %2914 = vmatpush1.msra.mxu0 %v2888
        %2915 = vmatprep.subr.mxu0 0.0
        %2916 = vmatpush1.msra.mxu0 %v2889
        %2917 = vmatprep.subr.mxu0 0.0
        %2918 = vmatpush1.msra.mxu0 %v2890
        %2919 = vmatprep.subr.mxu0 0.0
        %2920 = vmatpush1.msra.mxu0 %v2891
        %2921 = vmatprep.subr.mxu0 0.0
        %2922 = vmatpush1.msra.mxu0 %v2892
        %2923 = vmatprep.subr.mxu0 0.0
        %2924 = vmatpush1.msra.mxu0 %v2893
        %2925 = vmatprep.subr.mxu0 0.0
        %2926 = vmatpush1.msra.mxu0 %v2894
        %2927 = vmatprep.subr.mxu0 0.0
        %2928 = vmatpush1.msra.mxu0 0.0
        %2929 = vmatprep.subr.mxu0 0.0
        %2930 = vmatpush1.msra.mxu0 0.0
        %2931 = vmatprep.subr.mxu0 0.0
        %2932 = vmatpush1.msra.mxu0 0.0
        %2933 = vmatprep.subr.mxu0 0.0
        %2934 = vmatpush1.msra.mxu0 0.0
        %2935 = vmatprep.subr.mxu0 0.0
        %2936 = vmatpush1.msra.mxu0 0.0
        %2937 = vmatprep.subr.mxu0 0.0
        %2938 = vmatpush1.msra.mxu0 0.0
        %2939 = vmatprep.subr.mxu0 0.0
        %2940 = vmatpush1.msra.mxu0 0.0
        %2941 = vmatprep.subr.mxu0 0.0
        %2942 = vmatpush1.msra.mxu0 0.0
        %2943 = vmatprep.subr.mxu0 0.0
        %2944 = vmatpush1.msra.mxu0 0.0
        %2945 = vmatprep.subr.mxu0 0.0
        %2946 = vmatpush1.msra.mxu0 0.0
        %2947 = vmatprep.subr.mxu0 0.0
        %2948 = vmatpush1.msra.mxu0 0.0
        %2949 = vmatprep.subr.mxu0 0.0
        %2950 = vmatpush1.msra.mxu0 0.0
        %2951 = vmatprep.subr.mxu0 0.0
        %2952 = vmatpush1.msra.mxu0 0.0
        %2953 = vmatprep.subr.mxu0 0.0
        %2954 = vmatpush1.msra.mxu0 0.0
        %2955 = vmatprep.subr.mxu0 0.0
        %2956 = vmatpush1.msra.mxu0 0.0
        %2957 = vmatprep.subr.mxu0 0.0
        %2958 = vmatpush1.msra.mxu0 0.0
        %2959 = vmatprep.mubr.f32.mxu0 0.0
        %2960 = vmatmul.mubr.f32.gmra.mrb[0].mxu0 %v2814
        %v2961 = vpop.f32.mrb[0].mxu0
        %v2962 = vadd.f32 0.0, %v2961
        %v2963 = vpop.f32.mrb[0].mxu0
        %2964 = vmatprep.mubr.f32.mxu0 0.0
        %2965 = vmatmul.mubr.f32.gmra.mrb[0].mxu0 %v2815
        %v2966 = vpop.f32.mrb[0].mxu0
        %v2967 = vadd.f32 0.0, %v2966
        %v2968 = vpop.f32.mrb[0].mxu0
        %2969 = vmatprep.mubr.f32.mxu0 0.0
        %2970 = vmatmul.mubr.f32.gmra.mrb[0].mxu0 %v2816
        %v2971 = vpop.f32.mrb[0].mxu0
        %v2972 = vadd.f32 0.0, %v2971
        %v2973 = vpop.f32.mrb[0].mxu0
        %2974 = vmatprep.mubr.f32.mxu0 0.0
        %2975 = vmatmul.mubr.f32.gmra.mrb[0].mxu0 %v2817
        %v2976 = vpop.f32.mrb[0].mxu0
        %v2977 = vadd.f32 0.0, %v2976
        %v2978 = vpop.f32.mrb[0].mxu0
        %2979 = vmatprep.mubr.f32.mxu0 0.0
        %2980 = vmatmul.mubr.f32.gmra.mrb[0].mxu0 %v2818
        %v2981 = vpop.f32.mrb[0].mxu0
        %v2982 = vadd.f32 0.0, %v2981
        %v2983 = vpop.f32.mrb[0].mxu0
        %2984 = vmatprep.mubr.f32.mxu0 0.0
        %2985 = vmatmul.mubr.f32.gmra.mrb[0].mxu0 %v2819
        %v2986 = vpop.f32.mrb[0].mxu0
        %v2987 = vadd.f32 0.0, %v2986
        %v2988 = vpop.f32.mrb[0].mxu0
        %2989 = vmatprep.mubr.f32.mxu0 0.0
        %2990 = vmatmul.mubr.f32.gmra.mrb[0].mxu0 %v2820
        %v2991 = vpop.f32.mrb[0].mxu0
        %v2992 = vadd.f32 0.0, %v2991
        %v2993 = vpop.f32.mrb[0].mxu0
        %2994 = vmatprep.mubr.f32.mxu0 0.0
        %2995 = vmatmul.mubr.f32.gmra.mrb[0].mxu0 %v2821
        %v2996 = vpop.f32.mrb[0].mxu0
        %v2997 = vadd.f32 0.0, %v2996
        %v2998 = vpop.f32.mrb[0].mxu0
        %2999 = vmatprep.mubr.f32.mxu0 0.0
        %3000 = vmatmul.mubr.f32.gmra.mrb[0].mxu0 %v2822
        %v3001 = vpop.f32.mrb[0].mxu0
        %v3002 = vadd.f32 0.0, %v3001
        %v3003 = vpop.f32.mrb[0].mxu0
        %3004 = vmatprep.mubr.f32.mxu0 0.0
        %3005 = vmatmul.mubr.f32.gmra.mrb[0].mxu0 %v2823
        %v3006 = vpop.f32.mrb[0].mxu0
        %v3007 = vadd.f32 0.0, %v3006
        %v3008 = vpop.f32.mrb[0].mxu0
        %3009 = vmatprep.mubr.f32.mxu0 0.0
        %3010 = vmatmul.mubr.f32.gmra.mrb[0].mxu0 %v2824
        %v3011 = vpop.f32.mrb[0].mxu0
        %v3012 = vadd.f32 0.0, %v3011
        %v3013 = vpop.f32.mrb[0].mxu0
        %3014 = vmatprep.mubr.f32.mxu0 0.0
        %3015 = vmatmul.mubr.f32.gmra.mrb[0].mxu0 %v2825
        %v3016 = vpop.f32.mrb[0].mxu0
        %v3017 = vadd.f32 0.0, %v3016
        %v3018 = vpop.f32.mrb[0].mxu0
        %3019 = vmatprep.mubr.f32.mxu0 0.0
        %3020 = vmatmul.mubr.f32.gmra.mrb[0].mxu0 %v2826
        %v3021 = vpop.f32.mrb[0].mxu0
        %v3022 = vadd.f32 0.0, %v3021
        %v3023 = vpop.f32.mrb[0].mxu0
        %3024 = vmatprep.mubr.f32.mxu0 0.0
        %3025 = vmatmul.mubr.f32.gmra.mrb[0].mxu0 %v2827
        %v3026 = vpop.f32.mrb[0].mxu0
        %v3027 = vadd.f32 0.0, %v3026
        %v3028 = vpop.f32.mrb[0].mxu0
        %3029 = vmatprep.mubr.f32.mxu0 0.0
        %3030 = vmatmul.mubr.f32.gmra.mrb[0].mxu0 %v2828
        %v3031 = vpop.f32.mrb[0].mxu0
        %v3032 = vadd.f32 0.0, %v3031
        %v3033 = vpop.f32.mrb[0].mxu0
        %3034 = vmatprep.mubr.f32.mxu0 0.0
        %3035 = vmatmul.mubr.f32.gmra.mrb[0].mxu0 %v2829
        %v3036 = vpop.f32.mrb[0].mxu0
        %v3037 = vadd.f32 0.0, %v3036
        %v3038 = vpop.f32.mrb[0].mxu0
        %3039 = vmatprep.mubr.f32.mxu0 0.0
        %3040 = vmatmul.mubr.f32.gmra.mrb[0].mxu0 %v2830
        %v3041 = vpop.f32.mrb[0].mxu0
        %v3042 = vadd.f32 0.0, %v3041
        %v3043 = vpop.f32.mrb[0].mxu0
        %3044 = vmatprep.mubr.f32.mxu0 0.0
        %3045 = vmatmul.mubr.f32.gmra.mrb[0].mxu0 %v2831
        %v3046 = vpop.f32.mrb[0].mxu0
        %v3047 = vadd.f32 0.0, %v3046
        %v3048 = vpop.f32.mrb[0].mxu0
        %3049 = vmatprep.mubr.f32.mxu0 0.0
        %3050 = vmatmul.mubr.f32.gmra.mrb[0].mxu0 %v2832
        %v3051 = vpop.f32.mrb[0].mxu0
        %v3052 = vadd.f32 0.0, %v3051
        %v3053 = vpop.f32.mrb[0].mxu0
        %3054 = vmatprep.mubr.f32.mxu0 0.0
        %3055 = vmatmul.mubr.f32.gmra.mrb[0].mxu0 %v2833
        %v3056 = vpop.f32.mrb[0].mxu0
        %v3057 = vadd.f32 0.0, %v3056
        %v3058 = vpop.f32.mrb[0].mxu0
        %3059 = vmatprep.mubr.f32.mxu0 0.0
        %3060 = vmatmul.mubr.f32.gmra.mrb[0].mxu0 %v2834
        %v3061 = vpop.f32.mrb[0].mxu0
        %v3062 = vadd.f32 0.0, %v3061
        %v3063 = vpop.f32.mrb[0].mxu0
        %3064 = vmatprep.mubr.f32.mxu0 0.0
        %3065 = vmatmul.mubr.f32.gmra.mrb[0].mxu0 %v2835
        %v3066 = vpop.f32.mrb[0].mxu0
        %v3067 = vadd.f32 0.0, %v3066
        %v3068 = vpop.f32.mrb[0].mxu0
        %3069 = vmatprep.mubr.f32.mxu0 0.0
        %3070 = vmatmul.mubr.f32.gmra.mrb[0].mxu0 %v2836
        %v3071 = vpop.f32.mrb[0].mxu0
        %v3072 = vadd.f32 0.0, %v3071
        %v3073 = vpop.f32.mrb[0].mxu0
        %3074 = vmatprep.mubr.f32.mxu0 0.0
        %3075 = vmatmul.mubr.f32.gmra.mrb[0].mxu0 %v2837
        %v3076 = vpop.f32.mrb[0].mxu0
        %v3077 = vadd.f32 0.0, %v3076
        %v3078 = vpop.f32.mrb[0].mxu0
        %3079 = vmatprep.mubr.f32.mxu0 0.0
        %3080 = vmatmul.mubr.f32.gmra.mrb[0].mxu0 %v2838
        %v3081 = vpop.f32.mrb[0].mxu0
        %v3082 = vadd.f32 0.0, %v3081
        %v3083 = vpop.f32.mrb[0].mxu0
        %3084 = vmatprep.mubr.f32.mxu0 0.0
        %3085 = vmatmul.mubr.f32.gmra.mrb[0].mxu0 %v2839
        %v3086 = vpop.f32.mrb[0].mxu0
        %v3087 = vadd.f32 0.0, %v3086
        %v3088 = vpop.f32.mrb[0].mxu0
        %3089 = vmatprep.mubr.f32.mxu0 0.0
        %3090 = vmatmul.mubr.f32.gmra.mrb[0].mxu0 %v2840
        %v3091 = vpop.f32.mrb[0].mxu0
        %v3092 = vadd.f32 0.0, %v3091
        %v3093 = vpop.f32.mrb[0].mxu0
        %3094 = vmatprep.mubr.f32.mxu0 0.0
        %3095 = vmatmul.mubr.f32.gmra.mrb[0].mxu0 %v2841
        %v3096 = vpop.f32.mrb[0].mxu0
        %v3097 = vadd.f32 0.0, %v3096
        %v3098 = vpop.f32.mrb[0].mxu0
        %3099 = vmatprep.mubr.f32.mxu0 0.0
        %3100 = vmatmul.mubr.f32.gmra.mrb[0].mxu0 %v2842
        %v3101 = vpop.f32.mrb[0].mxu0
        %v3102 = vadd.f32 0.0, %v3101
        %v3103 = vpop.f32.mrb[0].mxu0
        %3104 = vmatprep.mubr.f32.mxu0 0.0
        %3105 = vmatmul.mubr.f32.gmra.mrb[0].mxu0 %v2843
        %v3106 = vpop.f32.mrb[0].mxu0
        %v3107 = vadd.f32 0.0, %v3106
        %v3108 = vpop.f32.mrb[0].mxu0
        %3109 = vmatprep.mubr.f32.mxu0 0.0
        %3110 = vmatmul.mubr.f32.gmra.mrb[0].mxu0 %v2844
        %v3111 = vpop.f32.mrb[0].mxu0
        %v3112 = vadd.f32 0.0, %v3111
        %v3113 = vpop.f32.mrb[0].mxu0
        %3114 = vmatprep.mubr.f32.mxu0 0.0
        %3115 = vmatmul.mubr.f32.gmra.mrb[0].mxu0 %v2845
        %v3116 = vpop.f32.mrb[0].mxu0
        %v3117 = vadd.f32 0.0, %v3116
        %v3118 = vpop.f32.mrb[0].mxu0
        %3119 = vdwg.mxu0
        %v3120 = vadd.f32 %v2846, %v2962
        %v3121 = vadd.f32 %v2847, %v2967
        %v3122 = vadd.f32 %v2848, %v2972
        %v3123 = vadd.f32 %v2849, %v2977
        %v3124 = vadd.f32 %v2850, %v2982
        %v3125 = vadd.f32 %v2851, %v2987
        %v3126 = vadd.f32 %v2852, %v2992
        %v3127 = vadd.f32 %v2853, %v2997
        %v3128 = vadd.f32 %v2854, %v3002
        %v3129 = vadd.f32 %v2855, %v3007
        %v3130 = vadd.f32 %v2856, %v3012
        %v3131 = vadd.f32 %v2857, %v3017
        %v3132 = vadd.f32 %v2858, %v3022
        %v3133 = vadd.f32 %v2859, %v3027
        %v3134 = vadd.f32 %v2860, %v3032
        %v3135 = vadd.f32 %v2861, %v3037
        %v3136 = vadd.f32 %v2862, %v3042
        %v3137 = vadd.f32 %v2863, %v3047
        %v3138 = vadd.f32 %v2864, %v3052
        %v3139 = vadd.f32 %v2865, %v3057
        %v3140 = vadd.f32 %v2866, %v3062
        %v3141 = vadd.f32 %v2867, %v3067
        %v3142 = vadd.f32 %v2868, %v3072
        %v3143 = vadd.f32 %v2869, %v3077
        %v3144 = vadd.f32 %v2870, %v3082
        %v3145 = vadd.f32 %v2871, %v3087
        %v3146 = vadd.f32 %v2872, %v3092
        %v3147 = vadd.f32 %v2873, %v3097
        %v3148 = vadd.f32 %v2874, %v3102
        %v3149 = vadd.f32 %v2875, %v3107
        %v3150 = vadd.f32 %v2876, %v3112
        %v3151 = vadd.f32 %v2877, %v3117
        %3152 = vst [vmem:[#allocation2] sm:$0xff] %v3120
        %3153 = vst [vmem:[#allocation2 + $0x8] sm:$0xff] %v3121
        %3154 = vst [vmem:[#allocation2 + $0x10] sm:$0xff] %v3122
        %3155 = vst [vmem:[#allocation2 + $0x18] sm:$0xff] %v3123
        %3156 = vst [vmem:[#allocation2 + $0x20] sm:$0xff] %v3124
        %3157 = vst [vmem:[#allocation2 + $0x28] sm:$0xff] %v3125
        %3158 = vst [vmem:[#allocation2 + $0x30] sm:$0xff] %v3126
        %3159 = vst [vmem:[#allocation2 + $0x38] sm:$0xff] %v3127
        %3160 = vst [vmem:[#allocation2 + $0x40] sm:$0xff] %v3128
        %3161 = vst [vmem:[#allocation2 + $0x48] sm:$0xff] %v3129
        %3162 = vst [vmem:[#allocation2 + $0x50] sm:$0xff] %v3130
        %3163 = vst [vmem:[#allocation2 + $0x58] sm:$0xff] %v3131
        %3164 = vst [vmem:[#allocation2 + $0x60] sm:$0xff] %v3132
        %3165 = vst [vmem:[#allocation2 + $0x68] sm:$0xff] %v3133
        %3166 = vst [vmem:[#allocation2 + $0x70] sm:$0xff] %v3134
        %3167 = vst [vmem:[#allocation2 + $0x78] sm:$0xff] %v3135
        %3168 = vst [vmem:[#allocation2 + $0x80] sm:$0xff] %v3136
        %3169 = vst [vmem:[#allocation2 + $0x88] sm:$0xff] %v3137
        %3170 = vst [vmem:[#allocation2 + $0x90] sm:$0xff] %v3138
        %3171 = vst [vmem:[#allocation2 + $0x98] sm:$0xff] %v3139
        %3172 = vst [vmem:[#allocation2 + $0xa0] sm:$0xff] %v3140
        %3173 = vst [vmem:[#allocation2 + $0xa8] sm:$0xff] %v3141
        %3174 = vst [vmem:[#allocation2 + $0xb0] sm:$0xff] %v3142
        %3175 = vst [vmem:[#allocation2 + $0xb8] sm:$0xff] %v3143
        %3176 = vst [vmem:[#allocation2 + $0xc0] sm:$0xff] %v3144
        %3177 = vst [vmem:[#allocation2 + $0xc8] sm:$0xff] %v3145
        %3178 = vst [vmem:[#allocation2 + $0xd0] sm:$0xff] %v3146
        %3179 = vst [vmem:[#allocation2 + $0xd8] sm:$0xff] %v3147
        %3180 = vst [vmem:[#allocation2 + $0xe0] sm:$0xff] %v3148
        %3181 = vst [vmem:[#allocation2 + $0xe8] sm:$0xff] %v3149
        %3182 = vst [vmem:[#allocation2 + $0xf0] sm:$0xff] %v3150
        %3183 = vst [vmem:[#allocation2 + $0xf8] sm:$0xff] %v3151
        %v3184 = vld [vmem:[%s2443 + $0x2] sm:$0xff]
        %v3185 = vld [vmem:[%s2443 + $0xa] sm:$0xff]
        %v3186 = vld [vmem:[%s2443 + $0x1a] sm:$0xff]
        %v3187 = vld [vmem:[%s2443 + $0x22] sm:$0xff]
        %v3188 = vld [vmem:[%s2443 + $0x32] sm:$0xff]
        %v3189 = vld [vmem:[%s2443 + $0x3a] sm:$0xff]
        %v3190 = vld [vmem:[%s2443 + $0x4a] sm:$0xff]
        %v3191 = vld [vmem:[%s2443 + $0x52] sm:$0xff]
        %v3192 = vld [vmem:[%s2443 + $0x62] sm:$0xff]
        %v3193 = vld [vmem:[%s2443 + $0x6a] sm:$0xff]
        %v3194 = vld [vmem:[%s2443 + $0x7a] sm:$0xff]
        %v3195 = vld [vmem:[%s2443 + $0x82] sm:$0xff]
        %v3196 = vld [vmem:[%s2443 + $0x92] sm:$0xff]
        %v3197 = vld [vmem:[%s2443 + $0x9a] sm:$0xff]
        %v3198 = vld [vmem:[%s2443 + $0xaa] sm:$0xff]
        %v3199 = vld [vmem:[%s2443 + $0xb2] sm:$0xff]
        %v3200 = vld [vmem:[%s2443 + $0xc2] sm:$0xff]
        %v3201 = vld [vmem:[%s2443 + $0xca] sm:$0xff]
        %v3202 = vld [vmem:[%s2443 + $0xda] sm:$0xff]
        %v3203 = vld [vmem:[%s2443 + $0xe2] sm:$0xff]
        %v3204 = vld [vmem:[%s2443 + $0xf2] sm:$0xff]
        %v3205 = vld [vmem:[%s2443 + $0xfa] sm:$0xff]
        %v3206 = vld [vmem:[%s2443 + $0x10a] sm:$0xff]
        %v3207 = vld [vmem:[%s2443 + $0x112] sm:$0xff]
        %v3208 = vld [vmem:[%s2443 + $0x122] sm:$0xff]
        %v3209 = vld [vmem:[%s2443 + $0x12a] sm:$0xff]
        %v3210 = vld [vmem:[%s2443 + $0x13a] sm:$0xff]
        %v3211 = vld [vmem:[%s2443 + $0x142] sm:$0xff]
        %v3212 = vld [vmem:[%s2443 + $0x152] sm:$0xff]
        %v3213 = vld [vmem:[%s2443 + $0x15a] sm:$0xff]
        %v3214 = vld [vmem:[%s2443 + $0x16a] sm:$0xff]
        %v3215 = vld [vmem:[%s2443 + $0x172] sm:$0xff]
        %v3216 = vld [vmem:[#allocation2] sm:$0xff]
        %v3217 = vld [vmem:[#allocation2 + $0x8] sm:$0xff]
        %v3218 = vld [vmem:[#allocation2 + $0x10] sm:$0xff]
        %v3219 = vld [vmem:[#allocation2 + $0x18] sm:$0xff]
        %v3220 = vld [vmem:[#allocation2 + $0x20] sm:$0xff]
        %v3221 = vld [vmem:[#allocation2 + $0x28] sm:$0xff]
        %v3222 = vld [vmem:[#allocation2 + $0x30] sm:$0xff]
        %v3223 = vld [vmem:[#allocation2 + $0x38] sm:$0xff]
        %v3224 = vld [vmem:[#allocation2 + $0x40] sm:$0xff]
        %v3225 = vld [vmem:[#allocation2 + $0x48] sm:$0xff]
        %v3226 = vld [vmem:[#allocation2 + $0x50] sm:$0xff]
        %v3227 = vld [vmem:[#allocation2 + $0x58] sm:$0xff]
        %v3228 = vld [vmem:[#allocation2 + $0x60] sm:$0xff]
        %v3229 = vld [vmem:[#allocation2 + $0x68] sm:$0xff]
        %v3230 = vld [vmem:[#allocation2 + $0x70] sm:$0xff]
        %v3231 = vld [vmem:[#allocation2 + $0x78] sm:$0xff]
        %v3232 = vld [vmem:[#allocation2 + $0x80] sm:$0xff]
        %v3233 = vld [vmem:[#allocation2 + $0x88] sm:$0xff]
        %v3234 = vld [vmem:[#allocation2 + $0x90] sm:$0xff]
        %v3235 = vld [vmem:[#allocation2 + $0x98] sm:$0xff]
        %v3236 = vld [vmem:[#allocation2 + $0xa0] sm:$0xff]
        %v3237 = vld [vmem:[#allocation2 + $0xa8] sm:$0xff]
        %v3238 = vld [vmem:[#allocation2 + $0xb0] sm:$0xff]
        %v3239 = vld [vmem:[#allocation2 + $0xb8] sm:$0xff]
        %v3240 = vld [vmem:[#allocation2 + $0xc0] sm:$0xff]
        %v3241 = vld [vmem:[#allocation2 + $0xc8] sm:$0xff]
        %v3242 = vld [vmem:[#allocation2 + $0xd0] sm:$0xff]
        %v3243 = vld [vmem:[#allocation2 + $0xd8] sm:$0xff]
        %v3244 = vld [vmem:[#allocation2 + $0xe0] sm:$0xff]
        %v3245 = vld [vmem:[#allocation2 + $0xe8] sm:$0xff]
        %v3246 = vld [vmem:[#allocation2 + $0xf0] sm:$0xff]
        %v3247 = vld [vmem:[#allocation2 + $0xf8] sm:$0xff]
        %s3248 = scalar_lea.vmem %s1, 1024
        %v3249 = vld [vmem:[%s3248] sm:$0xff]
        %v3250 = vld [vmem:[%s3248 + $0x8] sm:$0xff]
        %v3251 = vld [vmem:[%s3248 + $0x10] sm:$0xff]
        %v3252 = vld [vmem:[%s3248 + $0x18] sm:$0xff]
        %v3253 = vld [vmem:[%s3248 + $0x20] sm:$0xff]
        %v3254 = vld [vmem:[%s3248 + $0x28] sm:$0xff]
        %v3255 = vld [vmem:[%s3248 + $0x30] sm:$0xff]
        %v3256 = vld [vmem:[%s3248 + $0x38] sm:$0xff]
        %v3257 = vld [vmem:[%s3248 + $0x40] sm:$0xff]
        %v3258 = vld [vmem:[%s3248 + $0x48] sm:$0xff]
        %v3259 = vld [vmem:[%s3248 + $0x50] sm:$0xff]
        %v3260 = vld [vmem:[%s3248 + $0x58] sm:$0xff]
        %v3261 = vld [vmem:[%s3248 + $0x60] sm:$0xff]
        %v3262 = vld [vmem:[%s3248 + $0x68] sm:$0xff]
        %v3263 = vld [vmem:[%s3248 + $0x70] sm:$0xff]
        %v3264 = vld [vmem:[%s3248 + $0x78] sm:$0xff]
        %3265 = vmatprep.subr.mxu0 0.0
        %3266 = vmatpush1.msra.mxu0 %v3249
        %3267 = vmatprep.subr.mxu0 0.0
        %3268 = vmatpush1.msra.mxu0 %v3250
        %3269 = vmatprep.subr.mxu0 0.0
        %3270 = vmatpush1.msra.mxu0 %v3251
        %3271 = vmatprep.subr.mxu0 0.0
        %3272 = vmatpush1.msra.mxu0 %v3252
        %3273 = vmatprep.subr.mxu0 0.0
        %3274 = vmatpush1.msra.mxu0 %v3253
        %3275 = vmatprep.subr.mxu0 0.0
        %3276 = vmatpush1.msra.mxu0 %v3254
        %3277 = vmatprep.subr.mxu0 0.0
        %3278 = vmatpush1.msra.mxu0 %v3255
        %3279 = vmatprep.subr.mxu0 0.0
        %3280 = vmatpush1.msra.mxu0 %v3256
        %3281 = vmatprep.subr.mxu0 0.0
        %3282 = vmatpush1.msra.mxu0 %v3257
        %3283 = vmatprep.subr.mxu0 0.0
        %3284 = vmatpush1.msra.mxu0 %v3258
        %3285 = vmatprep.subr.mxu0 0.0
        %3286 = vmatpush1.msra.mxu0 %v3259
        %3287 = vmatprep.subr.mxu0 0.0
        %3288 = vmatpush1.msra.mxu0 %v3260
        %3289 = vmatprep.subr.mxu0 0.0
        %3290 = vmatpush1.msra.mxu0 %v3261
        %3291 = vmatprep.subr.mxu0 0.0
        %3292 = vmatpush1.msra.mxu0 %v3262
        %3293 = vmatprep.subr.mxu0 0.0
        %3294 = vmatpush1.msra.mxu0 %v3263
        %3295 = vmatprep.subr.mxu0 0.0
        %3296 = vmatpush1.msra.mxu0 %v3264
        %3297 = vmatprep.subr.mxu0 0.0
        %3298 = vmatpush1.msra.mxu0 0.0
        %3299 = vmatprep.subr.mxu0 0.0
        %3300 = vmatpush1.msra.mxu0 0.0
        %3301 = vmatprep.subr.mxu0 0.0
        %3302 = vmatpush1.msra.mxu0 0.0
        %3303 = vmatprep.subr.mxu0 0.0
        %3304 = vmatpush1.msra.mxu0 0.0
        %3305 = vmatprep.subr.mxu0 0.0
        %3306 = vmatpush1.msra.mxu0 0.0
        %3307 = vmatprep.subr.mxu0 0.0
        %3308 = vmatpush1.msra.mxu0 0.0
        %3309 = vmatprep.subr.mxu0 0.0
        %3310 = vmatpush1.msra.mxu0 0.0
        %3311 = vmatprep.subr.mxu0 0.0
        %3312 = vmatpush1.msra.mxu0 0.0
        %3313 = vmatprep.subr.mxu0 0.0
        %3314 = vmatpush1.msra.mxu0 0.0
        %3315 = vmatprep.subr.mxu0 0.0
        %3316 = vmatpush1.msra.mxu0 0.0
        %3317 = vmatprep.subr.mxu0 0.0
        %3318 = vmatpush1.msra.mxu0 0.0
        %3319 = vmatprep.subr.mxu0 0.0
        %3320 = vmatpush1.msra.mxu0 0.0
        %3321 = vmatprep.subr.mxu0 0.0
        %3322 = vmatpush1.msra.mxu0 0.0
        %3323 = vmatprep.subr.mxu0 0.0
        %3324 = vmatpush1.msra.mxu0 0.0
        %3325 = vmatprep.subr.mxu0 0.0
        %3326 = vmatpush1.msra.mxu0 0.0
        %3327 = vmatprep.subr.mxu0 0.0
        %3328 = vmatpush1.msra.mxu0 0.0
        %3329 = vmatprep.mubr.f32.mxu0 0.0
        %3330 = vmatmul.mubr.f32.gmra.mrb[0].mxu0 %v3184
        %v3331 = vpop.f32.mrb[0].mxu0
        %v3332 = vadd.f32 0.0, %v3331
        %v3333 = vpop.f32.mrb[0].mxu0
        %3334 = vmatprep.mubr.f32.mxu0 0.0
        %3335 = vmatmul.mubr.f32.gmra.mrb[0].mxu0 %v3185
        %v3336 = vpop.f32.mrb[0].mxu0
        %v3337 = vadd.f32 0.0, %v3336
        %v3338 = vpop.f32.mrb[0].mxu0
        %3339 = vmatprep.mubr.f32.mxu0 0.0
        %3340 = vmatmul.mubr.f32.gmra.mrb[0].mxu0 %v3186
        %v3341 = vpop.f32.mrb[0].mxu0
        %v3342 = vadd.f32 0.0, %v3341
        %v3343 = vpop.f32.mrb[0].mxu0
        %3344 = vmatprep.mubr.f32.mxu0 0.0
        %3345 = vmatmul.mubr.f32.gmra.mrb[0].mxu0 %v3187
        %v3346 = vpop.f32.mrb[0].mxu0
        %v3347 = vadd.f32 0.0, %v3346
        %v3348 = vpop.f32.mrb[0].mxu0
        %3349 = vmatprep.mubr.f32.mxu0 0.0
        %3350 = vmatmul.mubr.f32.gmra.mrb[0].mxu0 %v3188
        %v3351 = vpop.f32.mrb[0].mxu0
        %v3352 = vadd.f32 0.0, %v3351
        %v3353 = vpop.f32.mrb[0].mxu0
        %3354 = vmatprep.mubr.f32.mxu0 0.0
        %3355 = vmatmul.mubr.f32.gmra.mrb[0].mxu0 %v3189
        %v3356 = vpop.f32.mrb[0].mxu0
        %v3357 = vadd.f32 0.0, %v3356
        %v3358 = vpop.f32.mrb[0].mxu0
        %3359 = vmatprep.mubr.f32.mxu0 0.0
        %3360 = vmatmul.mubr.f32.gmra.mrb[0].mxu0 %v3190
        %v3361 = vpop.f32.mrb[0].mxu0
        %v3362 = vadd.f32 0.0, %v3361
        %v3363 = vpop.f32.mrb[0].mxu0
        %3364 = vmatprep.mubr.f32.mxu0 0.0
        %3365 = vmatmul.mubr.f32.gmra.mrb[0].mxu0 %v3191
        %v3366 = vpop.f32.mrb[0].mxu0
        %v3367 = vadd.f32 0.0, %v3366
        %v3368 = vpop.f32.mrb[0].mxu0
        %3369 = vmatprep.mubr.f32.mxu0 0.0
        %3370 = vmatmul.mubr.f32.gmra.mrb[0].mxu0 %v3192
        %v3371 = vpop.f32.mrb[0].mxu0
        %v3372 = vadd.f32 0.0, %v3371
        %v3373 = vpop.f32.mrb[0].mxu0
        %3374 = vmatprep.mubr.f32.mxu0 0.0
        %3375 = vmatmul.mubr.f32.gmra.mrb[0].mxu0 %v3193
        %v3376 = vpop.f32.mrb[0].mxu0
        %v3377 = vadd.f32 0.0, %v3376
        %v3378 = vpop.f32.mrb[0].mxu0
        %3379 = vmatprep.mubr.f32.mxu0 0.0
        %3380 = vmatmul.mubr.f32.gmra.mrb[0].mxu0 %v3194
        %v3381 = vpop.f32.mrb[0].mxu0
        %v3382 = vadd.f32 0.0, %v3381
        %v3383 = vpop.f32.mrb[0].mxu0
        %3384 = vmatprep.mubr.f32.mxu0 0.0
        %3385 = vmatmul.mubr.f32.gmra.mrb[0].mxu0 %v3195
        %v3386 = vpop.f32.mrb[0].mxu0
        %v3387 = vadd.f32 0.0, %v3386
        %v3388 = vpop.f32.mrb[0].mxu0
        %3389 = vmatprep.mubr.f32.mxu0 0.0
        %3390 = vmatmul.mubr.f32.gmra.mrb[0].mxu0 %v3196
        %v3391 = vpop.f32.mrb[0].mxu0
        %v3392 = vadd.f32 0.0, %v3391
        %v3393 = vpop.f32.mrb[0].mxu0
        %3394 = vmatprep.mubr.f32.mxu0 0.0
        %3395 = vmatmul.mubr.f32.gmra.mrb[0].mxu0 %v3197
        %v3396 = vpop.f32.mrb[0].mxu0
        %v3397 = vadd.f32 0.0, %v3396
        %v3398 = vpop.f32.mrb[0].mxu0
        %3399 = vmatprep.mubr.f32.mxu0 0.0
        %3400 = vmatmul.mubr.f32.gmra.mrb[0].mxu0 %v3198
        %v3401 = vpop.f32.mrb[0].mxu0
        %v3402 = vadd.f32 0.0, %v3401
        %v3403 = vpop.f32.mrb[0].mxu0
        %3404 = vmatprep.mubr.f32.mxu0 0.0
        %3405 = vmatmul.mubr.f32.gmra.mrb[0].mxu0 %v3199
        %v3406 = vpop.f32.mrb[0].mxu0
        %v3407 = vadd.f32 0.0, %v3406
        %v3408 = vpop.f32.mrb[0].mxu0
        %3409 = vmatprep.mubr.f32.mxu0 0.0
        %3410 = vmatmul.mubr.f32.gmra.mrb[0].mxu0 %v3200
        %v3411 = vpop.f32.mrb[0].mxu0
        %v3412 = vadd.f32 0.0, %v3411
        %v3413 = vpop.f32.mrb[0].mxu0
        %3414 = vmatprep.mubr.f32.mxu0 0.0
        %3415 = vmatmul.mubr.f32.gmra.mrb[0].mxu0 %v3201
        %v3416 = vpop.f32.mrb[0].mxu0
        %v3417 = vadd.f32 0.0, %v3416
        %v3418 = vpop.f32.mrb[0].mxu0
        %3419 = vmatprep.mubr.f32.mxu0 0.0
        %3420 = vmatmul.mubr.f32.gmra.mrb[0].mxu0 %v3202
        %v3421 = vpop.f32.mrb[0].mxu0
        %v3422 = vadd.f32 0.0, %v3421
        %v3423 = vpop.f32.mrb[0].mxu0
        %3424 = vmatprep.mubr.f32.mxu0 0.0
        %3425 = vmatmul.mubr.f32.gmra.mrb[0].mxu0 %v3203
        %v3426 = vpop.f32.mrb[0].mxu0
        %v3427 = vadd.f32 0.0, %v3426
        %v3428 = vpop.f32.mrb[0].mxu0
        %3429 = vmatprep.mubr.f32.mxu0 0.0
        %3430 = vmatmul.mubr.f32.gmra.mrb[0].mxu0 %v3204
        %v3431 = vpop.f32.mrb[0].mxu0
        %v3432 = vadd.f32 0.0, %v3431
        %v3433 = vpop.f32.mrb[0].mxu0
        %3434 = vmatprep.mubr.f32.mxu0 0.0
        %3435 = vmatmul.mubr.f32.gmra.mrb[0].mxu0 %v3205
        %v3436 = vpop.f32.mrb[0].mxu0
        %v3437 = vadd.f32 0.0, %v3436
        %v3438 = vpop.f32.mrb[0].mxu0
        %3439 = vmatprep.mubr.f32.mxu0 0.0
        %3440 = vmatmul.mubr.f32.gmra.mrb[0].mxu0 %v3206
        %v3441 = vpop.f32.mrb[0].mxu0
        %v3442 = vadd.f32 0.0, %v3441
        %v3443 = vpop.f32.mrb[0].mxu0
        %3444 = vmatprep.mubr.f32.mxu0 0.0
        %3445 = vmatmul.mubr.f32.gmra.mrb[0].mxu0 %v3207
        %v3446 = vpop.f32.mrb[0].mxu0
        %v3447 = vadd.f32 0.0, %v3446
        %v3448 = vpop.f32.mrb[0].mxu0
        %3449 = vmatprep.mubr.f32.mxu0 0.0
        %3450 = vmatmul.mubr.f32.gmra.mrb[0].mxu0 %v3208
        %v3451 = vpop.f32.mrb[0].mxu0
        %v3452 = vadd.f32 0.0, %v3451
        %v3453 = vpop.f32.mrb[0].mxu0
        %3454 = vmatprep.mubr.f32.mxu0 0.0
        %3455 = vmatmul.mubr.f32.gmra.mrb[0].mxu0 %v3209
        %v3456 = vpop.f32.mrb[0].mxu0
        %v3457 = vadd.f32 0.0, %v3456
        %v3458 = vpop.f32.mrb[0].mxu0
        %3459 = vmatprep.mubr.f32.mxu0 0.0
        %3460 = vmatmul.mubr.f32.gmra.mrb[0].mxu0 %v3210
        %v3461 = vpop.f32.mrb[0].mxu0
        %v3462 = vadd.f32 0.0, %v3461
        %v3463 = vpop.f32.mrb[0].mxu0
        %3464 = vmatprep.mubr.f32.mxu0 0.0
        %3465 = vmatmul.mubr.f32.gmra.mrb[0].mxu0 %v3211
        %v3466 = vpop.f32.mrb[0].mxu0
        %v3467 = vadd.f32 0.0, %v3466
        %v3468 = vpop.f32.mrb[0].mxu0
        %3469 = vmatprep.mubr.f32.mxu0 0.0
        %3470 = vmatmul.mubr.f32.gmra.mrb[0].mxu0 %v3212
        %v3471 = vpop.f32.mrb[0].mxu0
        %v3472 = vadd.f32 0.0, %v3471
        %v3473 = vpop.f32.mrb[0].mxu0
        %3474 = vmatprep.mubr.f32.mxu0 0.0
        %3475 = vmatmul.mubr.f32.gmra.mrb[0].mxu0 %v3213
        %v3476 = vpop.f32.mrb[0].mxu0
        %v3477 = vadd.f32 0.0, %v3476
        %v3478 = vpop.f32.mrb[0].mxu0
        %3479 = vmatprep.mubr.f32.mxu0 0.0
        %3480 = vmatmul.mubr.f32.gmra.mrb[0].mxu0 %v3214
        %v3481 = vpop.f32.mrb[0].mxu0
        %v3482 = vadd.f32 0.0, %v3481
        %v3483 = vpop.f32.mrb[0].mxu0
        %3484 = vmatprep.mubr.f32.mxu0 0.0
        %3485 = vmatmul.mubr.f32.gmra.mrb[0].mxu0 %v3215
        %v3486 = vpop.f32.mrb[0].mxu0
        %v3487 = vadd.f32 0.0, %v3486
        %v3488 = vpop.f32.mrb[0].mxu0
        %3489 = vdwg.mxu0
        %v3490 = vadd.f32 %v3216, %v3332
        %v3491 = vadd.f32 %v3217, %v3337
        %v3492 = vadd.f32 %v3218, %v3342
        %v3493 = vadd.f32 %v3219, %v3347
        %v3494 = vadd.f32 %v3220, %v3352
        %v3495 = vadd.f32 %v3221, %v3357
        %v3496 = vadd.f32 %v3222, %v3362
        %v3497 = vadd.f32 %v3223, %v3367
        %v3498 = vadd.f32 %v3224, %v3372
        %v3499 = vadd.f32 %v3225, %v3377
        %v3500 = vadd.f32 %v3226, %v3382
        %v3501 = vadd.f32 %v3227, %v3387
        %v3502 = vadd.f32 %v3228, %v3392
        %v3503 = vadd.f32 %v3229, %v3397
        %v3504 = vadd.f32 %v3230, %v3402
        %v3505 = vadd.f32 %v3231, %v3407
        %v3506 = vadd.f32 %v3232, %v3412
        %v3507 = vadd.f32 %v3233, %v3417
        %v3508 = vadd.f32 %v3234, %v3422
        %v3509 = vadd.f32 %v3235, %v3427
        %v3510 = vadd.f32 %v3236, %v3432
        %v3511 = vadd.f32 %v3237, %v3437
        %v3512 = vadd.f32 %v3238, %v3442
        %v3513 = vadd.f32 %v3239, %v3447
        %v3514 = vadd.f32 %v3240, %v3452
        %v3515 = vadd.f32 %v3241, %v3457
        %v3516 = vadd.f32 %v3242, %v3462
        %v3517 = vadd.f32 %v3243, %v3467
        %v3518 = vadd.f32 %v3244, %v3472
        %v3519 = vadd.f32 %v3245, %v3477
        %v3520 = vadd.f32 %v3246, %v3482
        %v3521 = vadd.f32 %v3247, %v3487
        %3522 = vst [vmem:[#allocation2] sm:$0xff] %v3490
        %3523 = vst [vmem:[#allocation2 + $0x8] sm:$0xff] %v3491
        %3524 = vst [vmem:[#allocation2 + $0x10] sm:$0xff] %v3492
        %3525 = vst [vmem:[#allocation2 + $0x18] sm:$0xff] %v3493
        %3526 = vst [vmem:[#allocation2 + $0x20] sm:$0xff] %v3494
        %3527 = vst [vmem:[#allocation2 + $0x28] sm:$0xff] %v3495
        %3528 = vst [vmem:[#allocation2 + $0x30] sm:$0xff] %v3496
        %3529 = vst [vmem:[#allocation2 + $0x38] sm:$0xff] %v3497
        %3530 = vst [vmem:[#allocation2 + $0x40] sm:$0xff] %v3498
        %3531 = vst [vmem:[#allocation2 + $0x48] sm:$0xff] %v3499
        %3532 = vst [vmem:[#allocation2 + $0x50] sm:$0xff] %v3500
        %3533 = vst [vmem:[#allocation2 + $0x58] sm:$0xff] %v3501
        %3534 = vst [vmem:[#allocation2 + $0x60] sm:$0xff] %v3502
        %3535 = vst [vmem:[#allocation2 + $0x68] sm:$0xff] %v3503
        %3536 = vst [vmem:[#allocation2 + $0x70] sm:$0xff] %v3504
        %3537 = vst [vmem:[#allocation2 + $0x78] sm:$0xff] %v3505
        %3538 = vst [vmem:[#allocation2 + $0x80] sm:$0xff] %v3506
        %3539 = vst [vmem:[#allocation2 + $0x88] sm:$0xff] %v3507
        %3540 = vst [vmem:[#allocation2 + $0x90] sm:$0xff] %v3508
        %3541 = vst [vmem:[#allocation2 + $0x98] sm:$0xff] %v3509
        %3542 = vst [vmem:[#allocation2 + $0xa0] sm:$0xff] %v3510
        %3543 = vst [vmem:[#allocation2 + $0xa8] sm:$0xff] %v3511
        %3544 = vst [vmem:[#allocation2 + $0xb0] sm:$0xff] %v3512
        %3545 = vst [vmem:[#allocation2 + $0xb8] sm:$0xff] %v3513
        %3546 = vst [vmem:[#allocation2 + $0xc0] sm:$0xff] %v3514
        %3547 = vst [vmem:[#allocation2 + $0xc8] sm:$0xff] %v3515
        %3548 = vst [vmem:[#allocation2 + $0xd0] sm:$0xff] %v3516
        %3549 = vst [vmem:[#allocation2 + $0xd8] sm:$0xff] %v3517
        %3550 = vst [vmem:[#allocation2 + $0xe0] sm:$0xff] %v3518
        %3551 = vst [vmem:[#allocation2 + $0xe8] sm:$0xff] %v3519
        %3552 = vst [vmem:[#allocation2 + $0xf0] sm:$0xff] %v3520
        %3553 = vst [vmem:[#allocation2 + $0xf8] sm:$0xff] %v3521
        %v3554 = vld [vmem:[#allocation2] sm:$0xff]
        %v3555 = vld [vmem:[#allocation2 + $0x8] sm:$0xff]
        %v3556 = vld [vmem:[#allocation2 + $0x10] sm:$0xff]
        %v3557 = vld [vmem:[#allocation2 + $0x18] sm:$0xff]
        %v3558 = vld [vmem:[#allocation2 + $0x20] sm:$0xff]
        %v3559 = vld [vmem:[#allocation2 + $0x28] sm:$0xff]
        %v3560 = vld [vmem:[#allocation2 + $0x30] sm:$0xff]
        %v3561 = vld [vmem:[#allocation2 + $0x38] sm:$0xff]
        %v3562 = vld [vmem:[#allocation2 + $0x40] sm:$0xff]
        %v3563 = vld [vmem:[#allocation2 + $0x48] sm:$0xff]
        %v3564 = vld [vmem:[#allocation2 + $0x50] sm:$0xff]
        %v3565 = vld [vmem:[#allocation2 + $0x58] sm:$0xff]
        %v3566 = vld [vmem:[#allocation2 + $0x60] sm:$0xff]
        %v3567 = vld [vmem:[#allocation2 + $0x68] sm:$0xff]
        %v3568 = vld [vmem:[#allocation2 + $0x70] sm:$0xff]
        %v3569 = vld [vmem:[#allocation2 + $0x78] sm:$0xff]
        %v3570 = vld [vmem:[#allocation2 + $0x80] sm:$0xff]
        %v3571 = vld [vmem:[#allocation2 + $0x88] sm:$0xff]
        %v3572 = vld [vmem:[#allocation2 + $0x90] sm:$0xff]
        %v3573 = vld [vmem:[#allocation2 + $0x98] sm:$0xff]
        %v3574 = vld [vmem:[#allocation2 + $0xa0] sm:$0xff]
        %v3575 = vld [vmem:[#allocation2 + $0xa8] sm:$0xff]
        %v3576 = vld [vmem:[#allocation2 + $0xb0] sm:$0xff]
        %v3577 = vld [vmem:[#allocation2 + $0xb8] sm:$0xff]
        %v3578 = vld [vmem:[#allocation2 + $0xc0] sm:$0xff]
        %v3579 = vld [vmem:[#allocation2 + $0xc8] sm:$0xff]
        %v3580 = vld [vmem:[#allocation2 + $0xd0] sm:$0xff]
        %v3581 = vld [vmem:[#allocation2 + $0xd8] sm:$0xff]
        %v3582 = vld [vmem:[#allocation2 + $0xe0] sm:$0xff]
        %v3583 = vld [vmem:[#allocation2 + $0xe8] sm:$0xff]
        %v3584 = vld [vmem:[#allocation2 + $0xf0] sm:$0xff]
        %v3585 = vld [vmem:[#allocation2 + $0xf8] sm:$0xff]
        %v3586 = vld [vmem:[%s2] sm:$0x1]
        %v3588 = vlaneseq
        %v3589 = vshrl.u32 %v3588, 7
        %v3590 = vsub.s32 0, %v3589
        %v3591 = vrot.slane %v3586, %v3590
        %v3593 = vadd.f32 %v3554, %v3591
        %v3594 = vadd.f32 %v3555, %v3591
        %v3595 = vadd.f32 %v3556, %v3591
        %v3596 = vadd.f32 %v3557, %v3591
        %v3597 = vadd.f32 %v3558, %v3591
        %v3598 = vadd.f32 %v3559, %v3591
        %v3599 = vadd.f32 %v3560, %v3591
        %v3600 = vadd.f32 %v3561, %v3591
        %v3601 = vadd.f32 %v3562, %v3591
        %v3602 = vadd.f32 %v3563, %v3591
        %v3603 = vadd.f32 %v3564, %v3591
        %v3604 = vadd.f32 %v3565, %v3591
        %v3605 = vadd.f32 %v3566, %v3591
        %v3606 = vadd.f32 %v3567, %v3591
        %v3607 = vadd.f32 %v3568, %v3591
        %v3608 = vadd.f32 %v3569, %v3591
        %v3609 = vadd.f32 %v3570, %v3591
        %v3610 = vadd.f32 %v3571, %v3591
        %v3611 = vadd.f32 %v3572, %v3591
        %v3612 = vadd.f32 %v3573, %v3591
        %v3613 = vadd.f32 %v3574, %v3591
        %v3614 = vadd.f32 %v3575, %v3591
        %v3615 = vadd.f32 %v3576, %v3591
        %v3616 = vadd.f32 %v3577, %v3591
        %v3617 = vadd.f32 %v3578, %v3591
        %v3618 = vadd.f32 %v3579, %v3591
        %v3619 = vadd.f32 %v3580, %v3591
        %v3620 = vadd.f32 %v3581, %v3591
        %v3621 = vadd.f32 %v3582, %v3591
        %v3622 = vadd.f32 %v3583, %v3591
        %v3623 = vadd.f32 %v3584, %v3591
        %v3624 = vadd.f32 %v3585, %v3591
        %3625 = vst [vmem:[%s177] sm:$0xff] %v3593
        %3626 = vst [vmem:[%s177 + $0x8] sm:$0xff] %v3594
        %3627 = vst [vmem:[%s177 + $0x10] sm:$0xff] %v3595
        %3628 = vst [vmem:[%s177 + $0x18] sm:$0xff] %v3596
        %3629 = vst [vmem:[%s177 + $0x20] sm:$0xff] %v3597
        %3630 = vst [vmem:[%s177 + $0x28] sm:$0xff] %v3598
        %3631 = vst [vmem:[%s177 + $0x30] sm:$0xff] %v3599
        %3632 = vst [vmem:[%s177 + $0x38] sm:$0xff] %v3600
        %3633 = vst [vmem:[%s177 + $0x40] sm:$0xff] %v3601
        %3634 = vst [vmem:[%s177 + $0x48] sm:$0xff] %v3602
        %3635 = vst [vmem:[%s177 + $0x50] sm:$0xff] %v3603
        %3636 = vst [vmem:[%s177 + $0x58] sm:$0xff] %v3604
        %3637 = vst [vmem:[%s177 + $0x60] sm:$0xff] %v3605
        %3638 = vst [vmem:[%s177 + $0x68] sm:$0xff] %v3606
        %3639 = vst [vmem:[%s177 + $0x70] sm:$0xff] %v3607
        %3640 = vst [vmem:[%s177 + $0x78] sm:$0xff] %v3608
        %3641 = vst [vmem:[%s177 + $0x80] sm:$0xff] %v3609
        %3642 = vst [vmem:[%s177 + $0x88] sm:$0xff] %v3610
        %3643 = vst [vmem:[%s177 + $0x90] sm:$0xff] %v3611
        %3644 = vst [vmem:[%s177 + $0x98] sm:$0xff] %v3612
        %3645 = vst [vmem:[%s177 + $0xa0] sm:$0xff] %v3613
        %3646 = vst [vmem:[%s177 + $0xa8] sm:$0xff] %v3614
        %3647 = vst [vmem:[%s177 + $0xb0] sm:$0xff] %v3615
        %3648 = vst [vmem:[%s177 + $0xb8] sm:$0xff] %v3616
        %3649 = vst [vmem:[%s177 + $0xc0] sm:$0xff] %v3617
        %3650 = vst [vmem:[%s177 + $0xc8] sm:$0xff] %v3618
        %3651 = vst [vmem:[%s177 + $0xd0] sm:$0xff] %v3619
        %3652 = vst [vmem:[%s177 + $0xd8] sm:$0xff] %v3620
        %3653 = vst [vmem:[%s177 + $0xe0] sm:$0xff] %v3621
        %3654 = vst [vmem:[%s177 + $0xe8] sm:$0xff] %v3622
        %3655 = vst [vmem:[%s177 + $0xf0] sm:$0xff] %v3623
        %3656 = vst [vmem:[%s177 + $0xf8] sm:$0xff] %v3624
        %s3657 = sand.u32 %s107, 1
        %s3658 = scalar_lea.sflag [#allocation4], %s3657
        %s3659 = sand.u32 %s107, 1
        %s3660 = smul.addr %s3659, 256
        %s3661 = scalar_lea.vmem [#allocation3], %s3660
        // Predicated region
        $region33: #{tpu_custom_call.1} parent=31 // pred_check
          %p3662 = pneg %p117
        $region34: #{tpu_custom_call.1} parent=31 // pred_check_branch
          %3664 = sbr.rel (%p3662) target = $region36
        $region35: #{tpu_custom_call.1} parent=31 // pred_region
          %s3665 = smul.u32 16, %s22
          %s3667 = ssub.s32 4096, 4096
          %3668 = vsyncadd %s3658, %s3667
          %s3669 = smul.addr %s3665, 2
          %s3670 = smul.addr %s21, 32
          %s3671 = sadd.s32 %s3669, %s3670
          %s3672 = smul.addr %s3671, 128
          %s3673 = scalar_lea.hbm %s3, %s3672
          %s3674 = sshll.u32 %s3661, 4
          %s3675 = int_to_ptr.vmem [resolvable:$true] %s3674
          %3680 = dma.vmem_to_hbm [thread:$0]  %s3675, 4096, %s3673, %s3658, 128, 128, 8
        $region36: #{tpu_custom_call.1} parent=31 // pred_fallthru
          _
      $region32: #{tpu_custom_call.1} parent=5 // pred_fallthru
        _
      %p3681 = scmp.le.s32.totalorder 2, %s12
      // Predicated region
      $region37: #{tpu_custom_call.1} parent=5 // pred_check
        %p3682 = pneg %p3681
      $region38: #{tpu_custom_call.1} parent=5 // pred_check_branch
        %3684 = sbr.rel (%p3682) target = $region40
      $region39: #{tpu_custom_call.1} parent=5 // pred_region
        %s3685 = ssub.s32 %s12, 2
        // Predicated region
        $region41: #{tpu_custom_call.1} parent=39 // pred_check
          %p3686 = pneg %p123
        $region42: #{tpu_custom_call.1} parent=39 // pred_check_branch
          %3688 = sbr.rel (%p3686) target = $region44
        $region43: #{tpu_custom_call.1} parent=39 // pred_region
          %s3689 = sand.u32 %s108, 1
          %s3690 = scalar_lea.sflag [#allocation4], %s3689
          %s3691 = sand.u32 %s108, 1
          %s3692 = smul.addr %s3691, 256
          %s3693 = scalar_lea.vmem [#allocation3], %s3692
          %3694 = dma.done %s3690, 4096
        $region44: #{tpu_custom_call.1} parent=39 // pred_fallthru
          _
      $region40: #{tpu_custom_call.1} parent=5 // pred_fallthru
        _
    $region6: #{tpu_custom_call.1} parent=1 // loop_footer
      %s16 = sadd.s32 1, %s12
    $region7: #{tpu_custom_call.1} parent=1 // loop_footer_branch
      %11 = sbr.rel target = $region3
    $region8: #{tpu_custom_call.1} parent=1 // loop_exit
      _
    %3695 = vsyncpa [#allocation4], 1
    %s3696 = scalar_lea.sflag [#allocation4], 1
    %3697 = vsyncpa %s3696, 1

</llo_original>
